<compile_context>
chip_gen: v6e
topology: v6e:2x2x1
jax: 0.10.0
libtpu: 0.0.40
codegen_flags: <defaults>
</compile_context>

<pallas_src>
import functools

import jax
import jax.numpy as jnp
from jax.experimental import pallas as pl
from jax.experimental.pallas import tpu as pltpu

HIDDEN = 256
OUT_PAD = 128                       # action_dim padded up to one full lane tile
W_COLS = HIDDEN + OUT_PAD           # fused [w1 | wm] output lanes (384)
SUM_COL = W_COLS - 1                # last (unused) meta lane carries rowsum(w1)
LN_EPS = 1e-5                       # nn.LayerNorm default
MAX_TB = 2048                       # batch-tile cap; ~<16 MiB live VMEM at this size
VMEM_LIMIT_BYTES = 40 * 1024 * 1024  # > 16/32 MiB scoped defaults, < v7x 64 MiB physical


def _round_up(n, m):
    return m * ((n + m - 1) // m)


def _pick_tile(batch, max_tb):
    """Adaptive batch tile: big enough to amortize per-step overhead, >=2 steps for megacore."""
    rows = _round_up(max(batch, 1), 128)
    if rows <= 128:
        return rows, rows
    steps = max(2, pl.cdiv(rows, max_tb))
    if steps % 2:                       # keep the grid megacore-balanced when cheap
        steps += 1
    tb = min(_round_up(max_tb, 128), _round_up(pl.cdiv(rows, steps), 128))
    bp = tb * pl.cdiv(batch, tb)
    return tb, bp


# ----------------------------------------------------------------------------
# Single-buffered constant-weight BlockSpecs (probed once; falls back cleanly)
# ----------------------------------------------------------------------------
def _probe_kernel(x_ref, o_ref):
    o_ref[...] = x_ref[...] + 1.0


@functools.lru_cache(maxsize=None)
def _single_buffer_weights_supported():
    if not hasattr(pl, "Buffered"):
        return False
    try:
        spec = pl.BlockSpec((8, 128), lambda i: (0, 0), pipeline_mode=pl.Buffered(1))
        out = pl.pallas_call(
            _probe_kernel,
            out_shape=jax.ShapeDtypeStruct((16, 128), jnp.float32),
            grid=(2,),
            in_specs=[spec],
            out_specs=pl.BlockSpec((8, 128), lambda i: (i, 0)),
        )(jnp.zeros((8, 128), jnp.float32))
        jax.block_until_ready(out)
        return True
    except Exception:       # kwarg missing or lowering rejects single-buffering
        return False


def _const_spec(shape, single_buf):
    idx = lambda i: (0, 0)
    if single_buf:
        return pl.BlockSpec(shape, idx, pipeline_mode=pl.Buffered(1))
    return pl.BlockSpec(shape, idx)


# ----------------------------------------------------------------------------
# Kernel
# ----------------------------------------------------------------------------
def _ln_relu(h, mu, gamma, beta):
    # Single-pass variance E[h^2] - mu^2; rsqrt runs on the EUP (free slot).
    ms = jnp.mean(h * h, axis=-1, keepdims=True)
    var = ms - mu * mu
    y = (h - mu) * jax.lax.rsqrt(var + LN_EPS) * gamma + beta
    return jnp.maximum(y, 0.0)


def valuenet_kernel(
    x_ref,                            # (TB, K)  bf16   state tile (K = state_dim rounded to 16)
    w_in_ref,                         # (K, 384) bf16   [w1 | wm | rowsum(w1) in last lane]
    b1_ref, g1_ref, be1_ref,          # (1, 256) f32
    w2_ref,                           # (256, 256) bf16
    b2_ref, g2_ref, be2_ref,          # (1, 256) f32
    w3_ref,                           # (256, 128) bf16
    bout_ref,                         # (1, 128) f32    (= b3 + bm, padded)
    out_ref,                          # (TB, 128) f32
):
    x = x_ref[...]                                                     # bf16

    # One MXU pass over x yields: layer-1 pre-activation (lanes [0,256)), the s_meta
    # skip term (lanes [256,384)), and -- fused into the otherwise-unused last meta
    # lane -- sum_j (x @ w1)[:, j], so LayerNorm-1's mean comes from the MXU instead
    # of an XLU cross-lane reduction.
    z = jnp.dot(x, w_in_ref[...], preferred_element_type=jnp.float32)  # (TB, 384) f32
    h1 = z[:, :HIDDEN] + b1_ref[...]
    meta = z[:, HIDDEN:]              # lane OUT_PAD-1 carries the row-sum; wrapper slices it off

    sum_b1 = jnp.sum(b1_ref[...], axis=-1, keepdims=True)              # (1, 1)
    mu1 = (z[:, SUM_COL:SUM_COL + 1] + sum_b1) * (1.0 / HIDDEN)        # (TB, 1)
    h1 = _ln_relu(h1, mu1, g1_ref[...], be1_ref[...]).astype(jnp.bfloat16)

    # Layer 2: Linear -> LayerNorm -> ReLU.  Its mean stays on the XLU: an MXU sum
    # column here would add +128 output lanes (a v5e regression, MXU-bound there).
    h2 = jnp.dot(h1, w2_ref[...], preferred_element_type=jnp.float32) + b2_ref[...]
    mu2 = jnp.mean(h2, axis=-1, keepdims=True)
    h2 = _ln_relu(h2, mu2, g2_ref[...], be2_ref[...]).astype(jnp.bfloat16)

    # Output head + meta skip + (fused) biases.
    head = jnp.dot(h2, w3_ref[...], preferred_element_type=jnp.float32)
    out_ref[...] = (head + meta + bout_ref[...]).astype(out_ref.dtype)


# ----------------------------------------------------------------------------
# Parameter prep (pad / fuse / cast once, outside the kernel)
# ----------------------------------------------------------------------------
def prep_params(p, state_dim, action_dim):
    assert action_dim <= OUT_PAD - 1, "last meta lane is reserved for the fused LN1 row-sum"
    k_dim = _round_up(state_dim, 16)          # bf16 sublane packing; no 128-lane zero-pad of K
    f32 = jnp.float32

    w_in = jnp.zeros((k_dim, W_COLS), f32)
    w_in = w_in.at[:state_dim, :HIDDEN].set(p["w1"])
    w_in = w_in.at[:state_dim, HIDDEN:HIDDEN + action_dim].set(p["wm"])
    w_in = w_in.at[:state_dim, SUM_COL].set(jnp.sum(p["w1"], axis=1))  # LN1 mean via MXU

    w3p = jnp.zeros((HIDDEN, OUT_PAD), f32).at[:, :action_dim].set(p["w3"])
    b3p = jnp.zeros((1, OUT_PAD), f32).at[:, :action_dim].set(p["b3"])
    bmp = jnp.zeros((1, OUT_PAD), f32).at[:, :action_dim].set(p["bm"])

    return {
        "w_in": w_in.astype(jnp.bfloat16),
        "b1": p["b1"], "g1": p["g1"], "be1": p["be1"],
        "w2": p["w2"].astype(jnp.bfloat16),
        "b2": p["b2"], "g2": p["g2"], "be2": p["be2"],
        "w3": w3p.astype(jnp.bfloat16),
        "b_out": b3p + bmp,
    }


def _cost_estimate(bp, k_dim, pp):
    flops = 2 * bp * (k_dim * W_COLS + HIDDEN * HIDDEN + HIDDEN * OUT_PAD)
    weight_bytes = sum(int(v.size) * v.dtype.itemsize for v in pp.values())
    bytes_accessed = bp * k_dim * 2 + weight_bytes + bp * OUT_PAD * 4
    return pl.CostEstimate(flops=flops, transcendentals=2 * bp,
                           bytes_accessed=bytes_accessed)


# ----------------------------------------------------------------------------
# Forward (single jit: concat + cast + pad + kernel + de-pad slice)
# ----------------------------------------------------------------------------
@functools.partial(jax.jit, static_argnames=("action_dim", "max_tb", "single_buf"))
def _forward_jit(eye_list, click_, params, *, action_dim, max_tb, single_buf):
    state = jnp.concatenate([eye_list, click_], axis=-1).astype(jnp.bfloat16)
    b, state_dim = state.shape
    k_dim = params["w_in"].shape[0]
    assert state_dim <= k_dim, "state_dim does not match prepped parameters"

    tb, bp = _pick_tile(b, max_tb)
    x = jnp.pad(state, ((0, bp - b), (0, k_dim - state_dim)))     # one fused pad

    const = functools.partial(_const_spec, single_buf=single_buf)
    out = pl.pallas_call(
        valuenet_kernel,
        out_shape=jax.ShapeDtypeStruct((bp, OUT_PAD), jnp.float32),
        grid=(bp // tb,),
        in_specs=[
            pl.BlockSpec((tb, k_dim), lambda i: (i, 0)),          # state tile
            const((k_dim, W_COLS)),                               # [w1 | wm | rowsum(w1)]
            const((1, HIDDEN)), const((1, HIDDEN)), const((1, HIDDEN)),   # b1, g1, be1
            const((HIDDEN, HIDDEN)),                              # w2
            const((1, HIDDEN)), const((1, HIDDEN)), const((1, HIDDEN)),   # b2, g2, be2
            const((HIDDEN, OUT_PAD)),                             # w3
            const((1, OUT_PAD)),                                  # b3 + bm
        ],
        out_specs=pl.BlockSpec((tb, OUT_PAD), lambda i: (i, 0)),
        compiler_params=pltpu.CompilerParams(
            dimension_semantics=("parallel",),                    # megacore sharding on v7x
            vmem_limit_bytes=VMEM_LIMIT_BYTES,
        ),
        cost_estimate=_cost_estimate(bp, k_dim, params),
    )(
        x,
        params["w_in"],
        params["b1"], params["g1"], params["be1"],
        params["w2"],
        params["b2"], params["g2"], params["be2"],
        params["w3"],
        params["b_out"],
    )
    return out[:b, :action_dim]                                   # de-pad inside the same jit


def value_net_forward(eye_list, click_, params, *, action_dim, max_tb=MAX_TB):
    single_buf = _single_buffer_weights_supported()               # probed outside the trace
    return _forward_jit(eye_list, click_, params,
                        action_dim=int(action_dim), max_tb=int(max_tb),
                        single_buf=bool(single_buf))


# ----------------------------------------------------------------------------
# Init + reference (PyTorch-equivalent math, for checking)
# ----------------------------------------------------------------------------
def init_params(key, state_dim, action_dim):
    ks = jax.random.split(key, 4)

    def lin(k, fan_in, fan_out):
        kw, kb = jax.random.split(k)
        bound = 1.0 / jnp.sqrt(fan_in)
        w = jax.random.uniform(kw, (fan_in, fan_out), jnp.float32, -bound, bound)
        b = jax.random.uniform(kb, (1, fan_out), jnp.float32, -bound, bound)
        return w, b

    w1, b1 = lin(ks[0], state_dim, HIDDEN)
    w2, b2 = lin(ks[1], HIDDEN, HIDDEN)
    w3, b3 = lin(ks[2], HIDDEN, action_dim)
    wm, bm = lin(ks[3], state_dim, action_dim)
    ones = jnp.ones((1, HIDDEN), jnp.float32)
    zeros = jnp.zeros((1, HIDDEN), jnp.float32)
    return {"w1": w1, "b1": b1, "g1": ones, "be1": zeros,
            "w2": w2, "b2": b2, "g2": ones, "be2": zeros,
            "w3": w3, "b3": b3, "wm": wm, "bm": bm}


def _layernorm_ref(x, gamma, beta):
    # Textbook two-pass LayerNorm (independent of the kernel's single-pass formula).
    mu = jnp.mean(x, axis=-1, keepdims=True)
    var = jnp.mean((x - mu) ** 2, axis=-1, keepdims=True)
    return (x - mu) * jax.lax.rsqrt(var + LN_EPS) * gamma + beta


def reference_forward(eye_list, click_, p, dot_dtype=jnp.float32):
    x = jnp.concatenate([eye_list, click_], axis=-1)

    def dot(a, w):
        return jnp.dot(a.astype(dot_dtype), w.astype(dot_dtype),
                       preferred_element_type=jnp.float32)

    h = dot(x, p["w1"]) + p["b1"]
    h = jnp.maximum(_layernorm_ref(h, p["g1"], p["be1"]), 0.0)
    h = dot(h, p["w2"]) + p["b2"]
    h = jnp.maximum(_layernorm_ref(h, p["g2"], p["be2"]), 0.0)
    return dot(h, p["w3"]) + p["b3"] + dot(x, p["wm"]) + p["bm"]


if __name__ == "__main__":
    eye_dim, click_dim = 24, 8
    state_dim = eye_dim + click_dim   # 32
    action_dim = 8

    key = jax.random.PRNGKey(0)
    k_eye, k_click, k_params = jax.random.split(key, 3)
    params = init_params(k_params, state_dim, action_dim)
    prepped = prep_params(params, state_dim, action_dim)

    # batch=500 -> ragged pad, adaptive tile of 256 rows, grid=(2,) (megacore);
    # batch=64  -> single 128-row step.
    for batch in (500, 64):
        eye_list = jax.random.normal(k_eye, (batch, eye_dim), jnp.float32)
        click_ = jax.random.normal(k_click, (batch, click_dim), jnp.float32)

        out = value_net_forward(eye_list, click_, prepped, action_dim=action_dim)
        out = jax.block_until_ready(out)
        assert out.shape == (batch, action_dim)

        # Check vs a reference that quantizes matmul inputs to bf16 like the kernel
        # (tolerance covers the MXU-fused LN1-mean path, ~<=1e-3).
        ref_bf16 = reference_forward(eye_list, click_, params, dot_dtype=jnp.bfloat16)
        assert jnp.allclose(out, ref_bf16, atol=5e-3, rtol=5e-3), "mismatch vs bf16 reference"

        # Loose check vs the full-f32 reference (bf16 MXU inputs -> ~1% numerics).
        ref_f32 = reference_forward(eye_list, click_, params, dot_dtype=jnp.float32)
        assert jnp.allclose(out, ref_f32, atol=5e-2, rtol=5e-2), "mismatch vs f32 reference"

    print("KERNEL_OK")
</pallas_src>

<mosaic_0001>
module attributes {stable_mosaic.version = 11 : i64} {
  func.func @_probe_kernel(%arg0: i32, %arg1: memref<8x128xf32, #tpu.memory_space<vmem>>, %arg2: memref<8x128xf32, #tpu.memory_space<vmem>>) attributes {dimension_semantics = [#tpu.dimension_semantics<arbitrary>], iteration_bounds = array<i64: 2>, scalar_prefetch = 0 : i64, scratch_operands = 0 : i64, tpu.core_type = #tpu.core_type<tc>, window_params = [{pipeline_mode = #tpu.pipeline_mode<synchronous>, transform_indices = @transform_0, window_bounds = array<i64: 8, 128>}, {transform_indices = @transform_1, window_bounds = array<i64: 8, 128>}]} {
    %c0 = arith.constant 0 : index
    %c0_0 = arith.constant 0 : index
    %0 = vector.load %arg1[%c0, %c0_0] : memref<8x128xf32, #tpu.memory_space<vmem>>, vector<8x128xf32>
    %cst = arith.constant 1.000000e+00 : f32
    %1 = vector.broadcast %cst : f32 to vector<8x128xf32>
    %2 = arith.addf %0, %1 : vector<8x128xf32>
    %c0_1 = arith.constant 0 : index
    %c0_2 = arith.constant 0 : index
    %3 = vector.load %arg2[%c0_1, %c0_2] : memref<8x128xf32, #tpu.memory_space<vmem>>, vector<8x128xf32>
    tpu.vector_store %arg2[%c0_1, %c0_2], %2 {strides = array<i32>} : memref<8x128xf32, #tpu.memory_space<vmem>>, vector<8x128xf32>,
    return
  }
  func.func @transform_0(%arg0: i32) -> (i32, i32) {
    %c0_i32 = arith.constant 0 : i32
    %c0_i32_0 = arith.constant 0 : i32
    %c0_i32_1 = arith.constant 0 : i32
    return %c0_i32, %c0_i32_0 : i32, i32
  }
  func.func @transform_1(%arg0: i32) -> (i32, i32) {
    %c0_i32 = arith.constant 0 : i32
    %c0_i32_0 = arith.constant 0 : i32
    return %arg0, %c0_i32 : i32, i32
  }
}

module attributes {stable_mosaic.version = 11 : i64} {
  func.func @valuenet_kernel(%arg0: i32, %arg1: memref<256x32xbf16, #tpu.memory_space<vmem>>, %arg2: memref<32x384xbf16, #tpu.memory_space<vmem>>, %arg3: memref<1x256xf32, #tpu.memory_space<vmem>>, %arg4: memref<1x256xf32, #tpu.memory_space<vmem>>, %arg5: memref<1x256xf32, #tpu.memory_space<vmem>>, %arg6: memref<256x256xbf16, #tpu.memory_space<vmem>>, %arg7: memref<1x256xf32, #tpu.memory_space<vmem>>, %arg8: memref<1x256xf32, #tpu.memory_space<vmem>>, %arg9: memref<1x256xf32, #tpu.memory_space<vmem>>, %arg10: memref<256x128xbf16, #tpu.memory_space<vmem>>, %arg11: memref<1x128xf32, #tpu.memory_space<vmem>>, %arg12: memref<256x128xf32, #tpu.memory_space<vmem>>) attributes {dimension_semantics = [#tpu.dimension_semantics<parallel>], iteration_bounds = array<i64: 2>, scalar_prefetch = 0 : i64, scratch_operands = 0 : i64, tpu.core_type = #tpu.core_type<tc>, window_params = [{transform_indices = @transform_0, window_bounds = array<i64: 256, 32>}, {pipeline_mode = #tpu.pipeline_mode<synchronous>, transform_indices = @transform_1, window_bounds = array<i64: 32, 384>}, {pipeline_mode = #tpu.pipeline_mode<synchronous>, transform_indices = @transform_2, window_bounds = array<i64: 1, 256>}, {pipeline_mode = #tpu.pipeline_mode<synchronous>, transform_indices = @transform_3, window_bounds = array<i64: 1, 256>}, {pipeline_mode = #tpu.pipeline_mode<synchronous>, transform_indices = @transform_4, window_bounds = array<i64: 1, 256>}, {pipeline_mode = #tpu.pipeline_mode<synchronous>, transform_indices = @transform_5, window_bounds = array<i64: 256, 256>}, {pipeline_mode = #tpu.pipeline_mode<synchronous>, transform_indices = @transform_6, window_bounds = array<i64: 1, 256>}, {pipeline_mode = #tpu.pipeline_mode<synchronous>, transform_indices = @transform_7, window_bounds = array<i64: 1, 256>}, {pipeline_mode = #tpu.pipeline_mode<synchronous>, transform_indices = @transform_8, window_bounds = array<i64: 1, 256>}, {pipeline_mode = #tpu.pipeline_mode<synchronous>, transform_indices = @transform_9, window_bounds = array<i64: 256, 128>}, {pipeline_mode = #tpu.pipeline_mode<synchronous>, transform_indices = @transform_10, window_bounds = array<i64: 1, 128>}, {transform_indices = @transform_11, window_bounds = array<i64: 256, 128>}]} {
    %c0 = arith.constant 0 : index
    %c0_0 = arith.constant 0 : index
    %0 = vector.load %arg1[%c0, %c0_0] : memref<256x32xbf16, #tpu.memory_space<vmem>>, vector<256x32xbf16>
    %c0_1 = arith.constant 0 : index
    %c0_2 = arith.constant 0 : index
    %1 = vector.load %arg2[%c0_1, %c0_2] : memref<32x384xbf16, #tpu.memory_space<vmem>>, vector<32x384xbf16>
    %cst = arith.constant dense<0.000000e+00> : vector<256x384xf32>
    %2 = tpu.matmul %0, %1, %cst {dimension_numbers = #tpu.dot_dimension_numbers<[1], [0], [0], [1], [0, 0, 1, 1], [], []>} : vector<256x32xbf16>, vector<32x384xbf16>, vector<256x384xf32> -> vector<256x384xf32>
    %3 = vector.extract_strided_slice %2 {offsets = [0, 0], sizes = [256, 256], strides = [1, 1]} : vector<256x384xf32> to vector<256x256xf32>
    %c0_3 = arith.constant 0 : index
    %c0_4 = arith.constant 0 : index
    %4 = vector.load %arg3[%c0_3, %c0_4] : memref<1x256xf32, #tpu.memory_space<vmem>>, vector<1x256xf32>
    %5 = vector.broadcast %4 : vector<1x256xf32> to vector<256x256xf32>
    %6 = arith.addf %3, %5 : vector<256x256xf32>
    %7 = vector.extract_strided_slice %2 {offsets = [0, 256], sizes = [256, 128], strides = [1, 1]} : vector<256x384xf32> to vector<256x128xf32>
    %c0_5 = arith.constant 0 : index
    %c0_6 = arith.constant 0 : index
    %8 = vector.load %arg3[%c0_5, %c0_6] : memref<1x256xf32, #tpu.memory_space<vmem>>, vector<1x256xf32>
    %cst_7 = arith.constant dense<0.000000e+00> : vector<1xf32>
    %9 = vector.multi_reduction <add>, %8, %cst_7 [1] : vector<1x256xf32> to vector<1xf32>
    %10 = vector.shape_cast %9 : vector<1xf32> to vector<1x1xf32>
    %11 = vector.extract_strided_slice %2 {offsets = [0, 383], sizes = [256, 1], strides = [1, 1]} : vector<256x384xf32> to vector<256x1xf32>
    %12 = vector.broadcast %10 : vector<1x1xf32> to vector<256x1xf32>
    %13 = arith.addf %11, %12 : vector<256x1xf32>
    %cst_8 = arith.constant 3.906250e-03 : f32
    %14 = vector.broadcast %cst_8 : f32 to vector<256x1xf32>
    %15 = arith.mulf %13, %14 : vector<256x1xf32>
    %c0_9 = arith.constant 0 : index
    %c0_10 = arith.constant 0 : index
    %16 = vector.load %arg4[%c0_9, %c0_10] : memref<1x256xf32, #tpu.memory_space<vmem>>, vector<1x256xf32>
    %c0_11 = arith.constant 0 : index
    %c0_12 = arith.constant 0 : index
    %17 = vector.load %arg5[%c0_11, %c0_12] : memref<1x256xf32, #tpu.memory_space<vmem>>, vector<1x256xf32>
    %18 = arith.mulf %6, %6 : vector<256x256xf32>
    %cst_13 = arith.constant dense<0.000000e+00> : vector<256xf32>
    %19 = vector.multi_reduction <add>, %18, %cst_13 [1] : vector<256x256xf32> to vector<256xf32>
    %20 = vector.shape_cast %19 : vector<256xf32> to vector<256x1xf32>
    %cst_14 = arith.constant 2.560000e+02 : f32
    %21 = vector.broadcast %cst_14 : f32 to vector<256x1xf32>
    %22 = arith.divf %20, %21 : vector<256x1xf32>
    %23 = arith.mulf %15, %15 : vector<256x1xf32>
    %24 = arith.subf %22, %23 : vector<256x1xf32>
    %25 = vector.broadcast %15 : vector<256x1xf32> to vector<256x256xf32>
    %26 = arith.subf %6, %25 : vector<256x256xf32>
    %cst_15 = arith.constant 9.99999974E-6 : f32
    %27 = vector.broadcast %cst_15 : f32 to vector<256x1xf32>
    %28 = arith.addf %24, %27 : vector<256x1xf32>
    %29 = math.rsqrt %28 : vector<256x1xf32>
    %30 = vector.broadcast %29 : vector<256x1xf32> to vector<256x256xf32>
    %31 = arith.mulf %26, %30 : vector<256x256xf32>
    %32 = vector.broadcast %16 : vector<1x256xf32> to vector<256x256xf32>
    %33 = arith.mulf %31, %32 : vector<256x256xf32>
    %34 = vector.broadcast %17 : vector<1x256xf32> to vector<256x256xf32>
    %35 = arith.addf %33, %34 : vector<256x256xf32>
    %cst_16 = arith.constant 0.000000e+00 : f32
    %36 = vector.broadcast %cst_16 : f32 to vector<256x256xf32>
    %37 = arith.maximumf %35, %36 : vector<256x256xf32>
    %38 = arith.truncf %37 : vector<256x256xf32> to vector<256x256xbf16>
    %c0_17 = arith.constant 0 : index
    %c0_18 = arith.constant 0 : index
    %39 = vector.load %arg6[%c0_17, %c0_18] : memref<256x256xbf16, #tpu.memory_space<vmem>>, vector<256x256xbf16>
    %cst_19 = arith.constant dense<0.000000e+00> : vector<256x256xf32>
    %40 = tpu.matmul %38, %39, %cst_19 {dimension_numbers = #tpu.dot_dimension_numbers<[1], [0], [0], [1], [0, 0, 1, 1], [], []>} : vector<256x256xbf16>, vector<256x256xbf16>, vector<256x256xf32> -> vector<256x256xf32>
    %c0_20 = arith.constant 0 : index
    %c0_21 = arith.constant 0 : index
    %41 = vector.load %arg7[%c0_20, %c0_21] : memref<1x256xf32, #tpu.memory_space<vmem>>, vector<1x256xf32>
    %42 = vector.broadcast %41 : vector<1x256xf32> to vector<256x256xf32>
    %43 = arith.addf %40, %42 : vector<256x256xf32>
    %cst_22 = arith.constant dense<0.000000e+00> : vector<256xf32>
    %44 = vector.multi_reduction <add>, %43, %cst_22 [1] : vector<256x256xf32> to vector<256xf32>
    %45 = vector.shape_cast %44 : vector<256xf32> to vector<256x1xf32>
    %cst_23 = arith.constant 2.560000e+02 : f32
    %46 = vector.broadcast %cst_23 : f32 to vector<256x1xf32>
    %47 = arith.divf %45, %46 : vector<256x1xf32>
    %c0_24 = arith.constant 0 : index
    %c0_25 = arith.constant 0 : index
    %48 = vector.load %arg8[%c0_24, %c0_25] : memref<1x256xf32, #tpu.memory_space<vmem>>, vector<1x256xf32>
    %c0_26 = arith.constant 0 : index
    %c0_27 = arith.constant 0 : index
    %49 = vector.load %arg9[%c0_26, %c0_27] : memref<1x256xf32, #tpu.memory_space<vmem>>, vector<1x256xf32>
    %50 = arith.mulf %43, %43 : vector<256x256xf32>
    %cst_28 = arith.constant dense<0.000000e+00> : vector<256xf32>
    %51 = vector.multi_reduction <add>, %50, %cst_28 [1] : vector<256x256xf32> to vector<256xf32>
    %52 = vector.shape_cast %51 : vector<256xf32> to vector<256x1xf32>
    %cst_29 = arith.constant 2.560000e+02 : f32
    %53 = vector.broadcast %cst_29 : f32 to vector<256x1xf32>
    %54 = arith.divf %52, %53 : vector<256x1xf32>
    %55 = arith.mulf %47, %47 : vector<256x1xf32>
    %56 = arith.subf %54, %55 : vector<256x1xf32>
    %57 = vector.broadcast %47 : vector<256x1xf32> to vector<256x256xf32>
    %58 = arith.subf %43, %57 : vector<256x256xf32>
    %cst_30 = arith.constant 9.99999974E-6 : f32
    %59 = vector.broadcast %cst_30 : f32 to vector<256x1xf32>
    %60 = arith.addf %56, %59 : vector<256x1xf32>
    %61 = math.rsqrt %60 : vector<256x1xf32>
    %62 = vector.broadcast %61 : vector<256x1xf32> to vector<256x256xf32>
    %63 = arith.mulf %58, %62 : vector<256x256xf32>
    %64 = vector.broadcast %48 : vector<1x256xf32> to vector<256x256xf32>
    %65 = arith.mulf %63, %64 : vector<256x256xf32>
    %66 = vector.broadcast %49 : vector<1x256xf32> to vector<256x256xf32>
    %67 = arith.addf %65, %66 : vector<256x256xf32>
    %cst_31 = arith.constant 0.000000e+00 : f32
    %68 = vector.broadcast %cst_31 : f32 to vector<256x256xf32>
    %69 = arith.maximumf %67, %68 : vector<256x256xf32>
    %70 = arith.truncf %69 : vector<256x256xf32> to vector<256x256xbf16>
    %c0_32 = arith.constant 0 : index
    %c0_33 = arith.constant 0 : index
    %71 = vector.load %arg10[%c0_32, %c0_33] : memref<256x128xbf16, #tpu.memory_space<vmem>>, vector<256x128xbf16>
    %cst_34 = arith.constant dense<0.000000e+00> : vector<256x128xf32>
    %72 = tpu.matmul %70, %71, %cst_34 {dimension_numbers = #tpu.dot_dimension_numbers<[1], [0], [0], [1], [0, 0, 1, 1], [], []>} : vector<256x256xbf16>, vector<256x128xbf16>, vector<256x128xf32> -> vector<256x128xf32>
    %73 = arith.addf %72, %7 : vector<256x128xf32>
    %c0_35 = arith.constant 0 : index
    %c0_36 = arith.constant 0 : index
    %74 = vector.load %arg11[%c0_35, %c0_36] : memref<1x128xf32, #tpu.memory_space<vmem>>, vector<1x128xf32>
    %75 = vector.broadcast %74 : vector<1x128xf32> to vector<256x128xf32>
    %76 = arith.addf %73, %75 : vector<256x128xf32>
    %c0_37 = arith.constant 0 : index
    %c0_38 = arith.constant 0 : index
    %77 = vector.load %arg12[%c0_37, %c0_38] : memref<256x128xf32, #tpu.memory_space<vmem>>, vector<256x128xf32>
    tpu.vector_store %arg12[%c0_37, %c0_38], %76 {strides = array<i32>} : memref<256x128xf32, #tpu.memory_space<vmem>>, vector<256x128xf32>,
    return
  }
  func.func @transform_0(%arg0: i32) -> (i32, i32) {
    %c0_i32 = arith.constant 0 : i32
    %c0_i32_0 = arith.constant 0 : i32
    return %arg0, %c0_i32 : i32, i32
  }
  func.func @transform_1(%arg0: i32) -> (i32, i32) {
    %c0_i32 = arith.constant 0 : i32
    %c0_i32_0 = arith.constant 0 : i32
    %c0_i32_1 = arith.constant 0 : i32
    return %c0_i32, %c0_i32_0 : i32, i32
  }
  func.func @transform_2(%arg0: i32) -> (i32, i32) {
    %c0_i32 = arith.constant 0 : i32
    %c0_i32_0 = arith.constant 0 : i32
    %c0_i32_1 = arith.constant 0 : i32
    return %c0_i32, %c0_i32_0 : i32, i32
  }
  func.func @transform_3(%arg0: i32) -> (i32, i32) {
    %c0_i32 = arith.constant 0 : i32
    %c0_i32_0 = arith.constant 0 : i32
    %c0_i32_1 = arith.constant 0 : i32
    return %c0_i32, %c0_i32_0 : i32, i32
  }
  func.func @transform_4(%arg0: i32) -> (i32, i32) {
    %c0_i32 = arith.constant 0 : i32
    %c0_i32_0 = arith.constant 0 : i32
    %c0_i32_1 = arith.constant 0 : i32
    return %c0_i32, %c0_i32_0 : i32, i32
  }
  func.func @transform_5(%arg0: i32) -> (i32, i32) {
    %c0_i32 = arith.constant 0 : i32
    %c0_i32_0 = arith.constant 0 : i32
    %c0_i32_1 = arith.constant 0 : i32
    return %c0_i32, %c0_i32_0 : i32, i32
  }
  func.func @transform_6(%arg0: i32) -> (i32, i32) {
    %c0_i32 = arith.constant 0 : i32
    %c0_i32_0 = arith.constant 0 : i32
    %c0_i32_1 = arith.constant 0 : i32
    return %c0_i32, %c0_i32_0 : i32, i32
  }
  func.func @transform_7(%arg0: i32) -> (i32, i32) {
    %c0_i32 = arith.constant 0 : i32
    %c0_i32_0 = arith.constant 0 : i32
    %c0_i32_1 = arith.constant 0 : i32
    return %c0_i32, %c0_i32_0 : i32, i32
  }
  func.func @transform_8(%arg0: i32) -> (i32, i32) {
    %c0_i32 = arith.constant 0 : i32
    %c0_i32_0 = arith.constant 0 : i32
    %c0_i32_1 = arith.constant 0 : i32
    return %c0_i32, %c0_i32_0 : i32, i32
  }
  func.func @transform_9(%arg0: i32) -> (i32, i32) {
    %c0_i32 = arith.constant 0 : i32
    %c0_i32_0 = arith.constant 0 : i32
    %c0_i32_1 = arith.constant 0 : i32
    return %c0_i32, %c0_i32_0 : i32, i32
  }
  func.func @transform_10(%arg0: i32) -> (i32, i32) {
    %c0_i32 = arith.constant 0 : i32
    %c0_i32_0 = arith.constant 0 : i32
    %c0_i32_1 = arith.constant 0 : i32
    return %c0_i32, %c0_i32_0 : i32, i32
  }
  func.func @transform_11(%arg0: i32) -> (i32, i32) {
    %c0_i32 = arith.constant 0 : i32
    %c0_i32_0 = arith.constant 0 : i32
    return %arg0, %c0_i32 : i32, i32
  }
}

</mosaic_0001>

<llo_original>
// kernel: tpu_custom_call.1
$region0: #{tpu_custom_call.1}
  #allocation0 [shape = 'u32[]', space=smem, size = 0x4, offset = 0x4, fixed_abs, tag = 'smem constant byte address 0x4 - core index']
  #allocation1 [shape = 'u32[144,128]{1,0:T(1,128)}', space=vmem, size = 0x12000, scoped, tag = 'internal scratch']
  %s0 = inlined_call_operand.hbm [shape: f32[8,128], index: 0, kind: input, shape index: {}]
  %s1 = inlined_call_operand.hbm [shape: f32[16,128], index: 1, kind: output, shape index: {}]
  %s2 = sld [smem:[#allocation0]]
  $region41: #{tpu_custom_call.1} parent=0
    _
  %s4 = ssub.s32 1, %s2
  %s5 = scalar_select 0, %s4, %s2
  $region1: #{tpu_custom_call.1} parent=0
    #allocation2 [shape = 'u8[4096]{0}', space=vmem, size = 0x1000, scoped, tag = 'input window, operand 0, single buffered']
    #allocation3 [shape = 's32[2]{0}', space=sflag, size = 0x8, scoped, tag = 'scoped memory for tpu_custom_call.1']
    #allocation4 [shape = 's32[2]{0}', space=sflag, size = 0x8, scoped, tag = 'scoped memory for tpu_custom_call.1']
    #allocation5 [shape = 'u8[8192]{0}', space=vmem, size = 0x2000, scoped, tag = 'output window, operand 0']
    %6 = vsyncpa [#allocation3], 0
    %7 = vsyncpa [#allocation4], 0
    %s8 = scalar_lea.sflag [#allocation4], 1
    %9 = vsyncpa %s8, 0
    loop: start=0, step=1, limit=4
    $region2: #{tpu_custom_call.1} parent=1 // loop_pre_header
      _
    $region3: #{tpu_custom_call.1} parent=1 // loop_header
      %s11 = sphi 0, %s15
      %p12 = scmp.ge.s32.totalorder %s11, 4
      %s19 = sphi 0, %s19
      %s21 = sphi 0, %s19
      %s22 = sphi 0, %s21
      %s36 = sphi 0, %s22
      %s42 = sphi 0, %s44
      %s45 = sphi 0, %s42
      %s46 = sphi 0, %s45
      %s62 = sphi 0, %s46
    $region4: #{tpu_custom_call.1} parent=1 // loop_header_branch
      %14 = sbr.rel (%p12) target = $region8
    $region5: #{tpu_custom_call.1} parent=1 // loop_body
      %s16 = ssub.s32 %s11, 1
      %s17 = ssub.s32 %s11, 2
      %s18 = sadd.s32 %s11, 1
      %s20 = sadd.s32 %s19, 1
      %p23 = scmp.eq.s32.totalorder %s11, 1
      %p24 = scmp.ne.s32.totalorder %s19, %s21
      %p25 = scmp.eq.s32.totalorder %s11, 0
      %p26 = por %p24, %p25
      %p27 = scmp.ne.s32.totalorder %s19, %s21
      %p28 = scmp.eq.s32.totalorder %s16, 1
      %p29 = por %p27, %p28
      %p30 = scmp.ne.s32.totalorder %s21, %s22
      %p31 = scmp.eq.s32.totalorder %s16, 0
      %p32 = por %p30, %p31
      %p33 = scmp.ne.s32.totalorder %s21, %s22
      %p34 = scmp.eq.s32.totalorder %s17, 1
      %p35 = por %p33, %p34
      %p37 = scmp.ne.s32.totalorder %s22, %s36
      %p38 = scmp.eq.s32.totalorder %s17, 0
      %p39 = por %p37, %p38
      %s40 = ssub.s32 %s11, %s18
      %p41 = scmp.eq.s32.totalorder %s40, 0
      %s43 = sadd.s32 %s42, 1
      %s44 = scalar_select %p41, %s42, %s43
      %p47 = pneg %p41
      %p48 = scmp.eq.s32.totalorder %s11, 1
      %p49 = por %p47, %p48
      %p50 = scmp.ne.s32.totalorder %s42, %s45
      %p51 = scmp.eq.s32.totalorder %s11, 0
      %p52 = por %p50, %p51
      %p53 = scmp.ne.s32.totalorder %s42, %s45
      %p54 = scmp.eq.s32.totalorder %s16, 1
      %p55 = por %p53, %p54
      %p56 = scmp.ne.s32.totalorder %s45, %s46
      %p57 = scmp.eq.s32.totalorder %s16, 0
      %p58 = por %p56, %p57
      %p59 = scmp.ne.s32.totalorder %s45, %s46
      %p60 = scmp.eq.s32.totalorder %s17, 1
      %p61 = por %p59, %p60
      %p63 = scmp.ne.s32.totalorder %s46, %s62
      %p64 = scmp.eq.s32.totalorder %s17, 0
      %p65 = por %p63, %p64
      %p66 = scmp.le.s32.totalorder 1, %s11
      %p67 = scmp.lt.s32.totalorder %s11, 3
      %p68 = pnand %p66, %p67
      %p69 = pneg %p68
      // Predicated region
      $region9: #{tpu_custom_call.1} parent=5 // pred_check
        _
      $region10: #{tpu_custom_call.1} parent=5 // pred_check_branch
        %71 = sbr.rel (%p68) target = $region12
      $region11: #{tpu_custom_call.1} parent=5 // pred_region
        %s72 = ssub.s32 %s11, 1
        // Predicated region
        $region13: #{tpu_custom_call.1} parent=11 // pred_check
          %p73 = pneg %p32
        $region14: #{tpu_custom_call.1} parent=11 // pred_check_branch
          %75 = sbr.rel (%p73) target = $region16
        $region15: #{tpu_custom_call.1} parent=11 // pred_region
          %s77 = ssub.s32 128, 128
          %78 = vsyncadd [#allocation3], %s77
          %s80 = sshll.u32 [#allocation2], 4
          %s81 = int_to_ptr.vmem [resolvable:$true] %s80
          %83 = dma.hbm_to_vmem [thread:$0]  %s0, 128, %s81, [#allocation3]
        $region16: #{tpu_custom_call.1} parent=11 // pred_fallthru
          _
      $region12: #{tpu_custom_call.1} parent=5 // pred_fallthru
        _
      %p84 = scmp.lt.s32.totalorder %s11, 2
      // Predicated region
      $region17: #{tpu_custom_call.1} parent=5 // pred_check
        %p85 = pneg %p84
      $region18: #{tpu_custom_call.1} parent=5 // pred_check_branch
        %87 = sbr.rel (%p85) target = $region20
      $region19: #{tpu_custom_call.1} parent=5 // pred_region
        _
      $region20: #{tpu_custom_call.1} parent=5 // pred_fallthru
        _
      %p88 = scmp.le.s32.totalorder 1, %s11
      %p89 = scmp.lt.s32.totalorder %s11, 3
      %p90 = pnand %p88, %p89
      %p91 = pneg %p90
      // Predicated region
      $region21: #{tpu_custom_call.1} parent=5 // pred_check
        _
      $region22: #{tpu_custom_call.1} parent=5 // pred_check_branch
        %93 = sbr.rel (%p90) target = $region24
      $region23: #{tpu_custom_call.1} parent=5 // pred_region
        %s94 = ssub.s32 %s11, 1
        // Predicated region
        $region25: #{tpu_custom_call.1} parent=23 // pred_check
          %p95 = pneg %p32
        $region26: #{tpu_custom_call.1} parent=23 // pred_check_branch
          %97 = sbr.rel (%p95) target = $region28
        $region27: #{tpu_custom_call.1} parent=23 // pred_region
          %98 = dma.done [#allocation3], 128
        $region28: #{tpu_custom_call.1} parent=23 // pred_fallthru
          _
        %p99 = pneg %p32
        %p100 = pneg %p29
        %p101 = pneg %p58
        %p102 = pneg %p55
        %s103 = sand.u32 %s45, 1
        %s104 = scalar_lea.sflag [#allocation4], %s103
        %s105 = sand.u32 %s45, 1
        %s106 = smul.addr %s105, 8
        %s107 = scalar_lea.vmem [#allocation5], %s106
        %v108 = vld [vmem:[#allocation2] sm:$0xff]
        %v109 = vadd.f32 %v108, 1.0
        %110 = vst [vmem:[%s107] sm:$0xff] %v109
        %s111 = sand.u32 %s45, 1
        %s112 = scalar_lea.sflag [#allocation4], %s111
        %s113 = sand.u32 %s45, 1
        %s114 = smul.addr %s113, 8
        %s115 = scalar_lea.vmem [#allocation5], %s114
        // Predicated region
        $region29: #{tpu_custom_call.1} parent=23 // pred_check
          %p116 = pneg %p55
        $region30: #{tpu_custom_call.1} parent=23 // pred_check_branch
          %118 = sbr.rel (%p116) target = $region32
        $region31: #{tpu_custom_call.1} parent=23 // pred_region
          %s120 = ssub.s32 128, 128
          %121 = vsyncadd %s112, %s120
          %s122 = smul.addr %s16, 128
          %s123 = scalar_lea.hbm %s1, %s122
          %s125 = sshll.u32 %s115, 4
          %s126 = int_to_ptr.vmem [resolvable:$true] %s125
          %128 = dma.vmem_to_hbm [thread:$0]  %s126, 128, %s123, %s112
        $region32: #{tpu_custom_call.1} parent=23 // pred_fallthru
          _
      $region24: #{tpu_custom_call.1} parent=5 // pred_fallthru
        _
      %p129 = scmp.le.s32.totalorder 2, %s11
      // Predicated region
      $region33: #{tpu_custom_call.1} parent=5 // pred_check
        %p130 = pneg %p129
      $region34: #{tpu_custom_call.1} parent=5 // pred_check_branch
        %132 = sbr.rel (%p130) target = $region36
      $region35: #{tpu_custom_call.1} parent=5 // pred_region
        %s133 = ssub.s32 %s11, 2
        // Predicated region
        $region37: #{tpu_custom_call.1} parent=35 // pred_check
          %p134 = pneg %p61
        $region38: #{tpu_custom_call.1} parent=35 // pred_check_branch
          %136 = sbr.rel (%p134) target = $region40
        $region39: #{tpu_custom_call.1} parent=35 // pred_region
          %s137 = sand.u32 %s46, 1
          %s138 = scalar_lea.sflag [#allocation4], %s137
          %s139 = sand.u32 %s46, 1
          %s140 = smul.addr %s139, 8
          %s141 = scalar_lea.vmem [#allocation5], %s140
          %142 = dma.done %s138, 128
        $region40: #{tpu_custom_call.1} parent=35 // pred_fallthru
          _
      $region36: #{tpu_custom_call.1} parent=5 // pred_fallthru
        _
    $region6: #{tpu_custom_call.1} parent=1 // loop_footer
      %s15 = sadd.s32 1, %s11
    $region7: #{tpu_custom_call.1} parent=1 // loop_footer_branch
      %10 = sbr.rel target = $region3
    $region8: #{tpu_custom_call.1} parent=1 // loop_exit
      _
    %143 = vsyncpa [#allocation3], 1
    %s144 = scalar_lea.sflag [#allocation3], 1
    %145 = vsyncpa %s144, 1
    %146 = vsyncpa [#allocation4], 1
    %s147 = scalar_lea.sflag [#allocation4], 1
    %148 = vsyncpa %s147, 1

// kernel: _forward_jit.1
$region0: #{_forward_jit.1}
  #allocation0 [shape = 'u32[]', space=smem, size = 0x4, offset = 0x4, fixed_abs, tag = 'smem constant byte address 0x4 - core index']
  #allocation1 [shape = 'u32[144,128]{1,0:T(1,128)}', space=vmem, size = 0x12000, scoped, tag = 'internal scratch']
  %s0 = inlined_call_operand.vmem [shape: bf16[512,32], index: 0, kind: input, shape index: {}]
  %s1 = inlined_call_operand.vmem [shape: bf16[32,384], index: 1, kind: input, shape index: {}]
  %s2 = inlined_call_operand.vmem [shape: f32[1,256], index: 2, kind: input, shape index: {}]
  %s3 = inlined_call_operand.vmem [shape: f32[1,256], index: 3, kind: input, shape index: {}]
  %s4 = inlined_call_operand.vmem [shape: f32[1,256], index: 4, kind: input, shape index: {}]
  %s5 = inlined_call_operand.vmem [shape: bf16[256,256], index: 5, kind: input, shape index: {}]
  %s6 = inlined_call_operand.vmem [shape: f32[1,256], index: 6, kind: input, shape index: {}]
  %s7 = inlined_call_operand.vmem [shape: f32[1,256], index: 7, kind: input, shape index: {}]
  %s8 = inlined_call_operand.vmem [shape: f32[1,256], index: 8, kind: input, shape index: {}]
  %s9 = inlined_call_operand.vmem [shape: bf16[256,128], index: 9, kind: input, shape index: {}]
  %s10 = inlined_call_operand.vmem [shape: f32[1,128], index: 10, kind: input, shape index: {}]
  %s11 = inlined_call_operand.vmem [shape: f32[512,128], index: 11, kind: output, shape index: {}]
  %s12 = sld [smem:[#allocation0]]
  $region77: #{_forward_jit.1} parent=0
    _
  %s14 = ssub.s32 1, %s12
  %s15 = scalar_select 0, %s14, %s12
  loop: start=0, step=1, limit=4
  $region2: #{_forward_jit.1} parent=0 // loop_pre_header
    _
  $region3: #{_forward_jit.1} parent=0 // loop_header
    %s17 = sphi 0, %s21
    %p18 = scmp.ge.s32.totalorder %s17, 4
    %s27 = sphi 0, %s29
    %s30 = sphi 0, %s27
    %s31 = sphi 0, %s30
    %s47 = sphi 0, %s31
    %s51 = sphi 0, %s51
    %s53 = sphi 0, %s51
    %s54 = sphi 0, %s53
    %s68 = sphi 0, %s54
    %s72 = sphi 0, %s72
    %s74 = sphi 0, %s72
    %s75 = sphi 0, %s74
    %s89 = sphi 0, %s75
    %s93 = sphi 0, %s93
    %s95 = sphi 0, %s93
    %s96 = sphi 0, %s95
    %s110 = sphi 0, %s96
    %s114 = sphi 0, %s114
    %s116 = sphi 0, %s114
    %s117 = sphi 0, %s116
    %s131 = sphi 0, %s117
    %s135 = sphi 0, %s135
    %s137 = sphi 0, %s135
    %s138 = sphi 0, %s137
    %s152 = sphi 0, %s138
    %s156 = sphi 0, %s156
    %s158 = sphi 0, %s156
    %s159 = sphi 0, %s158
    %s173 = sphi 0, %s159
    %s177 = sphi 0, %s177
    %s179 = sphi 0, %s177
    %s180 = sphi 0, %s179
    %s194 = sphi 0, %s180
    %s198 = sphi 0, %s198
    %s200 = sphi 0, %s198
    %s201 = sphi 0, %s200
    %s215 = sphi 0, %s201
    %s219 = sphi 0, %s219
    %s221 = sphi 0, %s219
    %s222 = sphi 0, %s221
    %s236 = sphi 0, %s222
    %s240 = sphi 0, %s240
    %s242 = sphi 0, %s240
    %s243 = sphi 0, %s242
    %s257 = sphi 0, %s243
    %s263 = sphi 0, %s265
    %s266 = sphi 0, %s263
    %s267 = sphi 0, %s266
    %s283 = sphi 0, %s267
  $region4: #{_forward_jit.1} parent=0 // loop_header_branch
    %20 = sbr.rel (%p18) target = $region8
  $region5: #{_forward_jit.1} parent=0 // loop_body
    %s22 = ssub.s32 %s17, 1
    %s23 = ssub.s32 %s17, 2
    %s24 = sadd.s32 %s17, 1
    %s25 = ssub.s32 %s17, %s24
    %p26 = scmp.eq.s32.totalorder %s25, 0
    %s28 = sadd.s32 %s27, 1
    %s29 = scalar_select %p26, %s27, %s28
    %p32 = pneg %p26
    %p33 = scmp.eq.s32.totalorder %s17, 1
    %p34 = por %p32, %p33
    %p35 = scmp.ne.s32.totalorder %s27, %s30
    %p36 = scmp.eq.s32.totalorder %s17, 0
    %p37 = por %p35, %p36
    %p38 = scmp.ne.s32.totalorder %s27, %s30
    %p39 = scmp.eq.s32.totalorder %s22, 1
    %p40 = por %p38, %p39
    %p41 = scmp.ne.s32.totalorder %s30, %s31
    %p42 = scmp.eq.s32.totalorder %s22, 0
    %p43 = por %p41, %p42
    %p44 = scmp.ne.s32.totalorder %s30, %s31
    %p45 = scmp.eq.s32.totalorder %s23, 1
    %p46 = por %p44, %p45
    %p48 = scmp.ne.s32.totalorder %s31, %s47
    %p49 = scmp.eq.s32.totalorder %s23, 0
    %p50 = por %p48, %p49
    %s52 = sadd.s32 %s51, 1
    %p55 = scmp.eq.s32.totalorder %s17, 1
    %p56 = scmp.ne.s32.totalorder %s51, %s53
    %p57 = scmp.eq.s32.totalorder %s17, 0
    %p58 = por %p56, %p57
    %p59 = scmp.ne.s32.totalorder %s51, %s53
    %p60 = scmp.eq.s32.totalorder %s22, 1
    %p61 = por %p59, %p60
    %p62 = scmp.ne.s32.totalorder %s53, %s54
    %p63 = scmp.eq.s32.totalorder %s22, 0
    %p64 = por %p62, %p63
    %p65 = scmp.ne.s32.totalorder %s53, %s54
    %p66 = scmp.eq.s32.totalorder %s23, 1
    %p67 = por %p65, %p66
    %p69 = scmp.ne.s32.totalorder %s54, %s68
    %p70 = scmp.eq.s32.totalorder %s23, 0
    %p71 = por %p69, %p70
    %s73 = sadd.s32 %s72, 1
    %p76 = scmp.eq.s32.totalorder %s17, 1
    %p77 = scmp.ne.s32.totalorder %s72, %s74
    %p78 = scmp.eq.s32.totalorder %s17, 0
    %p79 = por %p77, %p78
    %p80 = scmp.ne.s32.totalorder %s72, %s74
    %p81 = scmp.eq.s32.totalorder %s22, 1
    %p82 = por %p80, %p81
    %p83 = scmp.ne.s32.totalorder %s74, %s75
    %p84 = scmp.eq.s32.totalorder %s22, 0
    %p85 = por %p83, %p84
    %p86 = scmp.ne.s32.totalorder %s74, %s75
    %p87 = scmp.eq.s32.totalorder %s23, 1
    %p88 = por %p86, %p87
    %p90 = scmp.ne.s32.totalorder %s75, %s89
    %p91 = scmp.eq.s32.totalorder %s23, 0
    %p92 = por %p90, %p91
    %s94 = sadd.s32 %s93, 1
    %p97 = scmp.eq.s32.totalorder %s17, 1
    %p98 = scmp.ne.s32.totalorder %s93, %s95
    %p99 = scmp.eq.s32.totalorder %s17, 0
    %p100 = por %p98, %p99
    %p101 = scmp.ne.s32.totalorder %s93, %s95
    %p102 = scmp.eq.s32.totalorder %s22, 1
    %p103 = por %p101, %p102
    %p104 = scmp.ne.s32.totalorder %s95, %s96
    %p105 = scmp.eq.s32.totalorder %s22, 0
    %p106 = por %p104, %p105
    %p107 = scmp.ne.s32.totalorder %s95, %s96
    %p108 = scmp.eq.s32.totalorder %s23, 1
    %p109 = por %p107, %p108
    %p111 = scmp.ne.s32.totalorder %s96, %s110
    %p112 = scmp.eq.s32.totalorder %s23, 0
    %p113 = por %p111, %p112
    %s115 = sadd.s32 %s114, 1
    %p118 = scmp.eq.s32.totalorder %s17, 1
    %p119 = scmp.ne.s32.totalorder %s114, %s116
    %p120 = scmp.eq.s32.totalorder %s17, 0
    %p121 = por %p119, %p120
    %p122 = scmp.ne.s32.totalorder %s114, %s116
    %p123 = scmp.eq.s32.totalorder %s22, 1
    %p124 = por %p122, %p123
    %p125 = scmp.ne.s32.totalorder %s116, %s117
    %p126 = scmp.eq.s32.totalorder %s22, 0
    %p127 = por %p125, %p126
    %p128 = scmp.ne.s32.totalorder %s116, %s117
    %p129 = scmp.eq.s32.totalorder %s23, 1
    %p130 = por %p128, %p129
    %p132 = scmp.ne.s32.totalorder %s117, %s131
    %p133 = scmp.eq.s32.totalorder %s23, 0
    %p134 = por %p132, %p133
    %s136 = sadd.s32 %s135, 1
    %p139 = scmp.eq.s32.totalorder %s17, 1
    %p140 = scmp.ne.s32.totalorder %s135, %s137
    %p141 = scmp.eq.s32.totalorder %s17, 0
    %p142 = por %p140, %p141
    %p143 = scmp.ne.s32.totalorder %s135, %s137
    %p144 = scmp.eq.s32.totalorder %s22, 1
    %p145 = por %p143, %p144
    %p146 = scmp.ne.s32.totalorder %s137, %s138
    %p147 = scmp.eq.s32.totalorder %s22, 0
    %p148 = por %p146, %p147
    %p149 = scmp.ne.s32.totalorder %s137, %s138
    %p150 = scmp.eq.s32.totalorder %s23, 1
    %p151 = por %p149, %p150
    %p153 = scmp.ne.s32.totalorder %s138, %s152
    %p154 = scmp.eq.s32.totalorder %s23, 0
    %p155 = por %p153, %p154
    %s157 = sadd.s32 %s156, 1
    %p160 = scmp.eq.s32.totalorder %s17, 1
    %p161 = scmp.ne.s32.totalorder %s156, %s158
    %p162 = scmp.eq.s32.totalorder %s17, 0
    %p163 = por %p161, %p162
    %p164 = scmp.ne.s32.totalorder %s156, %s158
    %p165 = scmp.eq.s32.totalorder %s22, 1
    %p166 = por %p164, %p165
    %p167 = scmp.ne.s32.totalorder %s158, %s159
    %p168 = scmp.eq.s32.totalorder %s22, 0
    %p169 = por %p167, %p168
    %p170 = scmp.ne.s32.totalorder %s158, %s159
    %p171 = scmp.eq.s32.totalorder %s23, 1
    %p172 = por %p170, %p171
    %p174 = scmp.ne.s32.totalorder %s159, %s173
    %p175 = scmp.eq.s32.totalorder %s23, 0
    %p176 = por %p174, %p175
    %s178 = sadd.s32 %s177, 1
    %p181 = scmp.eq.s32.totalorder %s17, 1
    %p182 = scmp.ne.s32.totalorder %s177, %s179
    %p183 = scmp.eq.s32.totalorder %s17, 0
    %p184 = por %p182, %p183
    %p185 = scmp.ne.s32.totalorder %s177, %s179
    %p186 = scmp.eq.s32.totalorder %s22, 1
    %p187 = por %p185, %p186
    %p188 = scmp.ne.s32.totalorder %s179, %s180
    %p189 = scmp.eq.s32.totalorder %s22, 0
    %p190 = por %p188, %p189
    %p191 = scmp.ne.s32.totalorder %s179, %s180
    %p192 = scmp.eq.s32.totalorder %s23, 1
    %p193 = por %p191, %p192
    %p195 = scmp.ne.s32.totalorder %s180, %s194
    %p196 = scmp.eq.s32.totalorder %s23, 0
    %p197 = por %p195, %p196
    %s199 = sadd.s32 %s198, 1
    %p202 = scmp.eq.s32.totalorder %s17, 1
    %p203 = scmp.ne.s32.totalorder %s198, %s200
    %p204 = scmp.eq.s32.totalorder %s17, 0
    %p205 = por %p203, %p204
    %p206 = scmp.ne.s32.totalorder %s198, %s200
    %p207 = scmp.eq.s32.totalorder %s22, 1
    %p208 = por %p206, %p207
    %p209 = scmp.ne.s32.totalorder %s200, %s201
    %p210 = scmp.eq.s32.totalorder %s22, 0
    %p211 = por %p209, %p210
    %p212 = scmp.ne.s32.totalorder %s200, %s201
    %p213 = scmp.eq.s32.totalorder %s23, 1
    %p214 = por %p212, %p213
    %p216 = scmp.ne.s32.totalorder %s201, %s215
    %p217 = scmp.eq.s32.totalorder %s23, 0
    %p218 = por %p216, %p217
    %s220 = sadd.s32 %s219, 1
    %p223 = scmp.eq.s32.totalorder %s17, 1
    %p224 = scmp.ne.s32.totalorder %s219, %s221
    %p225 = scmp.eq.s32.totalorder %s17, 0
    %p226 = por %p224, %p225
    %p227 = scmp.ne.s32.totalorder %s219, %s221
    %p228 = scmp.eq.s32.totalorder %s22, 1
    %p229 = por %p227, %p228
    %p230 = scmp.ne.s32.totalorder %s221, %s222
    %p231 = scmp.eq.s32.totalorder %s22, 0
    %p232 = por %p230, %p231
    %p233 = scmp.ne.s32.totalorder %s221, %s222
    %p234 = scmp.eq.s32.totalorder %s23, 1
    %p235 = por %p233, %p234
    %p237 = scmp.ne.s32.totalorder %s222, %s236
    %p238 = scmp.eq.s32.totalorder %s23, 0
    %p239 = por %p237, %p238
    %s241 = sadd.s32 %s240, 1
    %p244 = scmp.eq.s32.totalorder %s17, 1
    %p245 = scmp.ne.s32.totalorder %s240, %s242
    %p246 = scmp.eq.s32.totalorder %s17, 0
    %p247 = por %p245, %p246
    %p248 = scmp.ne.s32.totalorder %s240, %s242
    %p249 = scmp.eq.s32.totalorder %s22, 1
    %p250 = por %p248, %p249
    %p251 = scmp.ne.s32.totalorder %s242, %s243
    %p252 = scmp.eq.s32.totalorder %s22, 0
    %p253 = por %p251, %p252
    %p254 = scmp.ne.s32.totalorder %s242, %s243
    %p255 = scmp.eq.s32.totalorder %s23, 1
    %p256 = por %p254, %p255
    %p258 = scmp.ne.s32.totalorder %s243, %s257
    %p259 = scmp.eq.s32.totalorder %s23, 0
    %p260 = por %p258, %p259
    %s261 = ssub.s32 %s17, %s24
    %p262 = scmp.eq.s32.totalorder %s261, 0
    %s264 = sadd.s32 %s263, 1
    %s265 = scalar_select %p262, %s263, %s264
    %p268 = pneg %p262
    %p269 = scmp.eq.s32.totalorder %s17, 1
    %p270 = por %p268, %p269
    %p271 = scmp.ne.s32.totalorder %s263, %s266
    %p272 = scmp.eq.s32.totalorder %s17, 0
    %p273 = por %p271, %p272
    %p274 = scmp.ne.s32.totalorder %s263, %s266
    %p275 = scmp.eq.s32.totalorder %s22, 1
    %p276 = por %p274, %p275
    %p277 = scmp.ne.s32.totalorder %s266, %s267
    %p278 = scmp.eq.s32.totalorder %s22, 0
    %p279 = por %p277, %p278
    %p280 = scmp.ne.s32.totalorder %s266, %s267
    %p281 = scmp.eq.s32.totalorder %s23, 1
    %p282 = por %p280, %p281
    %p284 = scmp.ne.s32.totalorder %s267, %s283
    %p285 = scmp.eq.s32.totalorder %s23, 0
    %p286 = por %p284, %p285
    %p287 = scmp.le.s32.totalorder 1, %s17
    %p288 = scmp.lt.s32.totalorder %s17, 3
    %p289 = pnand %p287, %p288
    %p290 = pneg %p289
    // Predicated region
    $region9: #{_forward_jit.1} parent=5 // pred_check
      _
    $region10: #{_forward_jit.1} parent=5 // pred_check_branch
      %292 = sbr.rel (%p289) target = $region12
    $region11: #{_forward_jit.1} parent=5 // pred_region
      %s293 = ssub.s32 %s17, 1
      // Predicated region
      $region13: #{_forward_jit.1} parent=11 // pred_check
        %p294 = pneg %p64
      $region14: #{_forward_jit.1} parent=11 // pred_check_branch
        %296 = sbr.rel (%p294) target = $region16
      $region15: #{_forward_jit.1} parent=11 // pred_region
        _
      $region16: #{_forward_jit.1} parent=11 // pred_fallthru
        _
      // Predicated region
      $region17: #{_forward_jit.1} parent=11 // pred_check
        %p297 = pneg %p85
      $region18: #{_forward_jit.1} parent=11 // pred_check_branch
        %299 = sbr.rel (%p297) target = $region20
      $region19: #{_forward_jit.1} parent=11 // pred_region
        _
      $region20: #{_forward_jit.1} parent=11 // pred_fallthru
        _
      // Predicated region
      $region21: #{_forward_jit.1} parent=11 // pred_check
        %p300 = pneg %p106
      $region22: #{_forward_jit.1} parent=11 // pred_check_branch
        %302 = sbr.rel (%p300) target = $region24
      $region23: #{_forward_jit.1} parent=11 // pred_region
        _
      $region24: #{_forward_jit.1} parent=11 // pred_fallthru
        _
      // Predicated region
      $region25: #{_forward_jit.1} parent=11 // pred_check
        %p303 = pneg %p127
      $region26: #{_forward_jit.1} parent=11 // pred_check_branch
        %305 = sbr.rel (%p303) target = $region28
      $region27: #{_forward_jit.1} parent=11 // pred_region
        _
      $region28: #{_forward_jit.1} parent=11 // pred_fallthru
        _
      // Predicated region
      $region29: #{_forward_jit.1} parent=11 // pred_check
        %p306 = pneg %p148
      $region30: #{_forward_jit.1} parent=11 // pred_check_branch
        %308 = sbr.rel (%p306) target = $region32
      $region31: #{_forward_jit.1} parent=11 // pred_region
        _
      $region32: #{_forward_jit.1} parent=11 // pred_fallthru
        _
      // Predicated region
      $region33: #{_forward_jit.1} parent=11 // pred_check
        %p309 = pneg %p169
      $region34: #{_forward_jit.1} parent=11 // pred_check_branch
        %311 = sbr.rel (%p309) target = $region36
      $region35: #{_forward_jit.1} parent=11 // pred_region
        _
      $region36: #{_forward_jit.1} parent=11 // pred_fallthru
        _
      // Predicated region
      $region37: #{_forward_jit.1} parent=11 // pred_check
        %p312 = pneg %p190
      $region38: #{_forward_jit.1} parent=11 // pred_check_branch
        %314 = sbr.rel (%p312) target = $region40
      $region39: #{_forward_jit.1} parent=11 // pred_region
        _
      $region40: #{_forward_jit.1} parent=11 // pred_fallthru
        _
      // Predicated region
      $region41: #{_forward_jit.1} parent=11 // pred_check
        %p315 = pneg %p211
      $region42: #{_forward_jit.1} parent=11 // pred_check_branch
        %317 = sbr.rel (%p315) target = $region44
      $region43: #{_forward_jit.1} parent=11 // pred_region
        _
      $region44: #{_forward_jit.1} parent=11 // pred_fallthru
        _
      // Predicated region
      $region45: #{_forward_jit.1} parent=11 // pred_check
        %p318 = pneg %p232
      $region46: #{_forward_jit.1} parent=11 // pred_check_branch
        %320 = sbr.rel (%p318) target = $region48
      $region47: #{_forward_jit.1} parent=11 // pred_region
        _
      $region48: #{_forward_jit.1} parent=11 // pred_fallthru
        _
      // Predicated region
      $region49: #{_forward_jit.1} parent=11 // pred_check
        %p321 = pneg %p253
      $region50: #{_forward_jit.1} parent=11 // pred_check_branch
        %323 = sbr.rel (%p321) target = $region52
      $region51: #{_forward_jit.1} parent=11 // pred_region
        _
      $region52: #{_forward_jit.1} parent=11 // pred_fallthru
        _
    $region12: #{_forward_jit.1} parent=5 // pred_fallthru
      _
    %p324 = scmp.lt.s32.totalorder %s17, 2
    // Predicated region
    $region53: #{_forward_jit.1} parent=5 // pred_check
      %p325 = pneg %p324
    $region54: #{_forward_jit.1} parent=5 // pred_check_branch
      %327 = sbr.rel (%p325) target = $region56
    $region55: #{_forward_jit.1} parent=5 // pred_region
      // Predicated region
      $region57: #{_forward_jit.1} parent=55 // pred_check
        %p328 = pneg %p37
      $region58: #{_forward_jit.1} parent=55 // pred_check_branch
        %330 = sbr.rel (%p328) target = $region60
      $region59: #{_forward_jit.1} parent=55 // pred_region
        %s331 = smul.u32 32, %s17
        %p332 = scmp.lt.s32.totalorder %s331, 63
        %s333 = scalar_select %p332, %s331, 63
        %s334 = smul.addr %s333, 4
        %s335 = scalar_lea.vmem %s0, %s334
        %s336 = smul.u32 32, %s17
      $region60: #{_forward_jit.1} parent=55 // pred_fallthru
        _
    $region56: #{_forward_jit.1} parent=5 // pred_fallthru
      _
    %p337 = scmp.le.s32.totalorder 1, %s17
    %p338 = scmp.lt.s32.totalorder %s17, 3
    %p339 = pnand %p337, %p338
    %p340 = pneg %p339
    // Predicated region
    $region61: #{_forward_jit.1} parent=5 // pred_check
      _
    $region62: #{_forward_jit.1} parent=5 // pred_check_branch
      %342 = sbr.rel (%p339) target = $region64
    $region63: #{_forward_jit.1} parent=5 // pred_region
      %s343 = ssub.s32 %s17, 1
      %s344 = smul.u32 32, %s22
      %p345 = scmp.lt.s32.totalorder %s344, 63
      %s346 = scalar_select %p345, %s344, 63
      %s347 = smul.addr %s346, 4
      %s348 = scalar_lea.vmem %s0, %s347
      %p349 = pneg %p43
      %p350 = pneg %p40
      %p351 = pneg %p64
      %p352 = pneg %p61
      %p353 = pneg %p85
      %p354 = pneg %p82
      %p355 = pneg %p106
      %p356 = pneg %p103
      %p357 = pneg %p127
      %p358 = pneg %p124
      %p359 = pneg %p148
      %p360 = pneg %p145
      %p361 = pneg %p169
      %p362 = pneg %p166
      %p363 = pneg %p190
      %p364 = pneg %p187
      %p365 = pneg %p211
      %p366 = pneg %p208
      %p367 = pneg %p232
      %p368 = pneg %p229
      %p369 = pneg %p253
      %p370 = pneg %p250
      %p371 = pneg %p279
      %p372 = pneg %p276
      %s373 = smul.u32 32, %s22
      %p374 = scmp.lt.s32.totalorder %s373, 63
      %s375 = scalar_select %p374, %s373, 63
      %s376 = smul.addr %s375, 8
      %s377 = scalar_lea.vmem %s11, %s376
      %s378 = smul.u32 32, %s22
      %p379 = scmp.lt.s32.totalorder %s378, 63
      %s380 = scalar_select %p379, %s378, 63
      %s381 = smul.addr %s380, 4
      %s382 = scalar_lea.vmem %s0, %s381
      %s383 = smul.u32 32, %s22
      %s384 = smul.u32 32, %s22
      %p385 = scmp.lt.s32.totalorder %s384, 63
      %s386 = scalar_select %p385, %s384, 63
      %s387 = smul.addr %s386, 8
      %s388 = scalar_lea.vmem %s11, %s387
      %s389 = smul.u32 32, %s22
      %v391 = vld [vmem:[%s382] sm:$0xf]
      %v392 = vld [vmem:[%s382 + $0x4] sm:$0xf]
      %v393 = vld [vmem:[%s382 + $0x8] sm:$0xf]
      %v394 = vld [vmem:[%s382 + $0xc] sm:$0xf]
      %v395 = vld [vmem:[%s382 + $0x10] sm:$0xf]
      %v396 = vld [vmem:[%s382 + $0x14] sm:$0xf]
      %v397 = vld [vmem:[%s382 + $0x18] sm:$0xf]
      %v398 = vld [vmem:[%s382 + $0x1c] sm:$0xf]
      %v399 = vld [vmem:[%s382 + $0x20] sm:$0xf]
      %v400 = vld [vmem:[%s382 + $0x24] sm:$0xf]
      %v401 = vld [vmem:[%s382 + $0x28] sm:$0xf]
      %v402 = vld [vmem:[%s382 + $0x2c] sm:$0xf]
      %v403 = vld [vmem:[%s382 + $0x30] sm:$0xf]
      %v404 = vld [vmem:[%s382 + $0x34] sm:$0xf]
      %v405 = vld [vmem:[%s382 + $0x38] sm:$0xf]
      %v406 = vld [vmem:[%s382 + $0x3c] sm:$0xf]
      %v407 = vld [vmem:[%s382 + $0x40] sm:$0xf]
      %v408 = vld [vmem:[%s382 + $0x44] sm:$0xf]
      %v409 = vld [vmem:[%s382 + $0x48] sm:$0xf]
      %v410 = vld [vmem:[%s382 + $0x4c] sm:$0xf]
      %v411 = vld [vmem:[%s382 + $0x50] sm:$0xf]
      %v412 = vld [vmem:[%s382 + $0x54] sm:$0xf]
      %v413 = vld [vmem:[%s382 + $0x58] sm:$0xf]
      %v414 = vld [vmem:[%s382 + $0x5c] sm:$0xf]
      %v415 = vld [vmem:[%s382 + $0x60] sm:$0xf]
      %v416 = vld [vmem:[%s382 + $0x64] sm:$0xf]
      %v417 = vld [vmem:[%s382 + $0x68] sm:$0xf]
      %v418 = vld [vmem:[%s382 + $0x6c] sm:$0xf]
      %v419 = vld [vmem:[%s382 + $0x70] sm:$0xf]
      %v420 = vld [vmem:[%s382 + $0x74] sm:$0xf]
      %v421 = vld [vmem:[%s382 + $0x78] sm:$0xf]
      %v422 = vld [vmem:[%s382 + $0x7c] sm:$0xf]
      %v423 = vld [vmem:[%s1] sm:$0xff]
      %v424 = vld [vmem:[%s1 + $0x8] sm:$0xf]
      %v425 = vld [vmem:[%s1 + $0xc] sm:$0xff]
      %v426 = vld [vmem:[%s1 + $0x14] sm:$0xf]
      %v427 = vld [vmem:[%s1 + $0x18] sm:$0xff]
      %v428 = vld [vmem:[%s1 + $0x20] sm:$0xf]
      %v429 = vld [vmem:[%s1 + $0x24] sm:$0xff]
      %v430 = vld [vmem:[%s1 + $0x2c] sm:$0xf]
      %v463 = vunpack.c.l.b16 %v391
      %v464 = vunpack.c.l.b16 %v392
      %v465 = vunpack.c.l.b16 %v393
      %v466 = vunpack.c.l.b16 %v394
      %v467 = vunpack.c.l.b16 %v395
      %v468 = vunpack.c.l.b16 %v396
      %v469 = vunpack.c.l.b16 %v397
      %v470 = vunpack.c.l.b16 %v398
      %v471 = vunpack.c.l.b16 %v399
      %v472 = vunpack.c.l.b16 %v400
      %v473 = vunpack.c.l.b16 %v401
      %v474 = vunpack.c.l.b16 %v402
      %v475 = vunpack.c.l.b16 %v403
      %v476 = vunpack.c.l.b16 %v404
      %v477 = vunpack.c.l.b16 %v405
      %v478 = vunpack.c.l.b16 %v406
      %v479 = vunpack.c.l.b16 %v407
      %v480 = vunpack.c.l.b16 %v408
      %v481 = vunpack.c.l.b16 %v409
      %v482 = vunpack.c.l.b16 %v410
      %v483 = vunpack.c.l.b16 %v411
      %v484 = vunpack.c.l.b16 %v412
      %v485 = vunpack.c.l.b16 %v413
      %v486 = vunpack.c.l.b16 %v414
      %v487 = vunpack.c.l.b16 %v415
      %v488 = vunpack.c.l.b16 %v416
      %v489 = vunpack.c.l.b16 %v417
      %v490 = vunpack.c.l.b16 %v418
      %v491 = vunpack.c.l.b16 %v419
      %v492 = vunpack.c.l.b16 %v420
      %v493 = vunpack.c.l.b16 %v421
      %v494 = vunpack.c.l.b16 %v422
      %v495 = vpack.c.b16 %v464, %v463
      %v496 = vpack.c.b16 %v466, %v465
      %v497 = vpack.c.b16 %v468, %v467
      %v498 = vpack.c.b16 %v470, %v469
      %v499 = vpack.c.b16 %v472, %v471
      %v500 = vpack.c.b16 %v474, %v473
      %v501 = vpack.c.b16 %v476, %v475
      %v502 = vpack.c.b16 %v478, %v477
      %v503 = vpack.c.b16 %v480, %v479
      %v504 = vpack.c.b16 %v482, %v481
      %v505 = vpack.c.b16 %v484, %v483
      %v506 = vpack.c.b16 %v486, %v485
      %v507 = vpack.c.b16 %v488, %v487
      %v508 = vpack.c.b16 %v490, %v489
      %v509 = vpack.c.b16 %v492, %v491
      %v510 = vpack.c.b16 %v494, %v493
      %v519 = vunpack.c.l.b16 %v423
      %v520 = vunpack.c.h.b16 %v423
      %v521 = vunpack.c.l.b16 %v424
      %v522 = vunpack.c.l.b16 %v425
      %v523 = vunpack.c.h.b16 %v425
      %v524 = vunpack.c.l.b16 %v426
      %v525 = vunpack.c.l.b16 %v427
      %v526 = vunpack.c.h.b16 %v427
      %v527 = vunpack.c.l.b16 %v428
      %v528 = vunpack.c.l.b16 %v429
      %v529 = vunpack.c.h.b16 %v429
      %v530 = vunpack.c.l.b16 %v430
      %v531 = vpack.c.b16 %v522, %v519
      %v532 = vpack.c.b16 %v523, %v520
      %v533 = vpack.c.b16 %v524, %v521
      %v534 = vpack.c.b16 %v528, %v525
      %v535 = vpack.c.b16 %v529, %v526
      %v536 = vpack.c.b16 %v530, %v527
      %vm543 = vcmask 261120
      %v545 = vsel %vm543, %v495, 0
      %v548 = vsel %vm543, %v496, 0
      %v551 = vsel %vm543, %v497, 0
      %v554 = vsel %vm543, %v498, 0
      %v557 = vsel %vm543, %v499, 0
      %v560 = vsel %vm543, %v500, 0
      %v563 = vsel %vm543, %v501, 0
      %v566 = vsel %vm543, %v502, 0
      %v569 = vsel %vm543, %v503, 0
      %v572 = vsel %vm543, %v504, 0
      %v575 = vsel %vm543, %v505, 0
      %v578 = vsel %vm543, %v506, 0
      %v581 = vsel %vm543, %v507, 0
      %v584 = vsel %vm543, %v508, 0
      %v587 = vsel %vm543, %v509, 0
      %v590 = vsel %vm543, %v510, 0
      %592 = vmatprep.subr.bf16.mxu0 0
      %593 = vmatpush1.bf16.msra.mxu0 0
      %594 = vmatprep.subr.bf16.mxu0 0
      %595 = vmatpush1.bf16.msra.mxu0 0
      %596 = vmatprep.subr.bf16.mxu0 0
      %597 = vmatpush1.bf16.msra.mxu0 0
      %598 = vmatprep.subr.bf16.mxu0 0
      %599 = vmatpush1.bf16.msra.mxu0 0
      %600 = vmatprep.subr.bf16.mxu0 0
      %601 = vmatpush1.bf16.msra.mxu0 0
      %602 = vmatprep.subr.bf16.mxu0 0
      %603 = vmatpush1.bf16.msra.mxu0 0
      %604 = vmatprep.subr.bf16.mxu0 %v535
      %605 = vmatpush1.bf16.msra.mxu0 %v534
      %606 = vmatprep.subr.bf16.mxu0 %v532
      %607 = vmatpush1.bf16.msra.mxu0 %v531
      %608 = vmatprep.subr.bf16.mxu0 0
      %609 = vmatpush2.bf16.msra.mxu0 0
      %610 = vmatprep.subr.bf16.mxu0 0
      %611 = vmatpush2.bf16.msra.mxu0 0
      %612 = vmatprep.subr.bf16.mxu0 0
      %613 = vmatpush2.bf16.msra.mxu0 0
      %614 = vmatprep.subr.bf16.mxu0 0
      %615 = vmatpush2.bf16.msra.mxu0 0
      %616 = vmatprep.subr.bf16.mxu0 0
      %617 = vmatpush2.bf16.msra.mxu0 0
      %618 = vmatprep.subr.bf16.mxu0 0
      %619 = vmatpush2.bf16.msra.mxu0 0
      %620 = vmatprep.subr.bf16.mxu0 0
      %621 = vmatpush2.bf16.msra.mxu0 0
      %622 = vmatprep.subr.bf16.mxu0 0
      %623 = vmatpush2.bf16.msra.mxu0 0
      %624 = vmatprep.mubr.bf16.mxu0 0
      %625 = vmatmul.mubr.bf16.gmra.mxu0 %v545
      %v626 = vpop.f32.mrf.mxu0
      %v627 = vadd.f32 0.0, %v626
      %v628 = vpop.f32.mrf.mxu0
      %v629 = vadd.f32 0.0, %v628
      %v630 = vpop.f32.mrf.mxu0
      %v631 = vadd.f32 0.0, %v630
      %v632 = vpop.f32.mrf.mxu0
      %v633 = vadd.f32 0.0, %v632
      %634 = vmatprep.mubr.bf16.mxu0 0
      %635 = vmatmul.mubr.bf16.gmra.mxu0 %v548
      %v636 = vpop.f32.mrf.mxu0
      %v637 = vadd.f32 0.0, %v636
      %v638 = vpop.f32.mrf.mxu0
      %v639 = vadd.f32 0.0, %v638
      %v640 = vpop.f32.mrf.mxu0
      %v641 = vadd.f32 0.0, %v640
      %v642 = vpop.f32.mrf.mxu0
      %v643 = vadd.f32 0.0, %v642
      %644 = vmatprep.mubr.bf16.mxu0 0
      %645 = vmatmul.mubr.bf16.gmra.mxu0 %v551
      %v646 = vpop.f32.mrf.mxu0
      %v647 = vadd.f32 0.0, %v646
      %v648 = vpop.f32.mrf.mxu0
      %v649 = vadd.f32 0.0, %v648
      %v650 = vpop.f32.mrf.mxu0
      %v651 = vadd.f32 0.0, %v650
      %v652 = vpop.f32.mrf.mxu0
      %v653 = vadd.f32 0.0, %v652
      %654 = vmatprep.mubr.bf16.mxu0 0
      %655 = vmatmul.mubr.bf16.gmra.mxu0 %v554
      %v656 = vpop.f32.mrf.mxu0
      %v657 = vadd.f32 0.0, %v656
      %v658 = vpop.f32.mrf.mxu0
      %v659 = vadd.f32 0.0, %v658
      %v660 = vpop.f32.mrf.mxu0
      %v661 = vadd.f32 0.0, %v660
      %v662 = vpop.f32.mrf.mxu0
      %v663 = vadd.f32 0.0, %v662
      %664 = vmatprep.mubr.bf16.mxu0 0
      %665 = vmatmul.mubr.bf16.gmra.mxu0 %v557
      %v666 = vpop.f32.mrf.mxu0
      %v667 = vadd.f32 0.0, %v666
      %v668 = vpop.f32.mrf.mxu0
      %v669 = vadd.f32 0.0, %v668
      %v670 = vpop.f32.mrf.mxu0
      %v671 = vadd.f32 0.0, %v670
      %v672 = vpop.f32.mrf.mxu0
      %v673 = vadd.f32 0.0, %v672
      %674 = vmatprep.mubr.bf16.mxu0 0
      %675 = vmatmul.mubr.bf16.gmra.mxu0 %v560
      %v676 = vpop.f32.mrf.mxu0
      %v677 = vadd.f32 0.0, %v676
      %v678 = vpop.f32.mrf.mxu0
      %v679 = vadd.f32 0.0, %v678
      %v680 = vpop.f32.mrf.mxu0
      %v681 = vadd.f32 0.0, %v680
      %v682 = vpop.f32.mrf.mxu0
      %v683 = vadd.f32 0.0, %v682
      %684 = vmatprep.mubr.bf16.mxu0 0
      %685 = vmatmul.mubr.bf16.gmra.mxu0 %v563
      %v686 = vpop.f32.mrf.mxu0
      %v687 = vadd.f32 0.0, %v686
      %v688 = vpop.f32.mrf.mxu0
      %v689 = vadd.f32 0.0, %v688
      %v690 = vpop.f32.mrf.mxu0
      %v691 = vadd.f32 0.0, %v690
      %v692 = vpop.f32.mrf.mxu0
      %v693 = vadd.f32 0.0, %v692
      %694 = vmatprep.mubr.bf16.mxu0 0
      %695 = vmatmul.mubr.bf16.gmra.mxu0 %v566
      %v696 = vpop.f32.mrf.mxu0
      %v697 = vadd.f32 0.0, %v696
      %v698 = vpop.f32.mrf.mxu0
      %v699 = vadd.f32 0.0, %v698
      %v700 = vpop.f32.mrf.mxu0
      %v701 = vadd.f32 0.0, %v700
      %v702 = vpop.f32.mrf.mxu0
      %v703 = vadd.f32 0.0, %v702
      %704 = vmatprep.mubr.bf16.mxu0 0
      %705 = vmatmul.mubr.bf16.gmra.mxu0 %v569
      %v706 = vpop.f32.mrf.mxu0
      %v707 = vadd.f32 0.0, %v706
      %v708 = vpop.f32.mrf.mxu0
      %v709 = vadd.f32 0.0, %v708
      %v710 = vpop.f32.mrf.mxu0
      %v711 = vadd.f32 0.0, %v710
      %v712 = vpop.f32.mrf.mxu0
      %v713 = vadd.f32 0.0, %v712
      %714 = vmatprep.mubr.bf16.mxu0 0
      %715 = vmatmul.mubr.bf16.gmra.mxu0 %v572
      %v716 = vpop.f32.mrf.mxu0
      %v717 = vadd.f32 0.0, %v716
      %v718 = vpop.f32.mrf.mxu0
      %v719 = vadd.f32 0.0, %v718
      %v720 = vpop.f32.mrf.mxu0
      %v721 = vadd.f32 0.0, %v720
      %v722 = vpop.f32.mrf.mxu0
      %v723 = vadd.f32 0.0, %v722
      %724 = vmatprep.mubr.bf16.mxu0 0
      %725 = vmatmul.mubr.bf16.gmra.mxu0 %v575
      %v726 = vpop.f32.mrf.mxu0
      %v727 = vadd.f32 0.0, %v726
      %v728 = vpop.f32.mrf.mxu0
      %v729 = vadd.f32 0.0, %v728
      %v730 = vpop.f32.mrf.mxu0
      %v731 = vadd.f32 0.0, %v730
      %v732 = vpop.f32.mrf.mxu0
      %v733 = vadd.f32 0.0, %v732
      %734 = vmatprep.mubr.bf16.mxu0 0
      %735 = vmatmul.mubr.bf16.gmra.mxu0 %v578
      %v736 = vpop.f32.mrf.mxu0
      %v737 = vadd.f32 0.0, %v736
      %v738 = vpop.f32.mrf.mxu0
      %v739 = vadd.f32 0.0, %v738
      %v740 = vpop.f32.mrf.mxu0
      %v741 = vadd.f32 0.0, %v740
      %v742 = vpop.f32.mrf.mxu0
      %v743 = vadd.f32 0.0, %v742
      %744 = vmatprep.mubr.bf16.mxu0 0
      %745 = vmatmul.mubr.bf16.gmra.mxu0 %v581
      %v746 = vpop.f32.mrf.mxu0
      %v747 = vadd.f32 0.0, %v746
      %v748 = vpop.f32.mrf.mxu0
      %v749 = vadd.f32 0.0, %v748
      %v750 = vpop.f32.mrf.mxu0
      %v751 = vadd.f32 0.0, %v750
      %v752 = vpop.f32.mrf.mxu0
      %v753 = vadd.f32 0.0, %v752
      %754 = vmatprep.mubr.bf16.mxu0 0
      %755 = vmatmul.mubr.bf16.gmra.mxu0 %v584
      %v756 = vpop.f32.mrf.mxu0
      %v757 = vadd.f32 0.0, %v756
      %v758 = vpop.f32.mrf.mxu0
      %v759 = vadd.f32 0.0, %v758
      %v760 = vpop.f32.mrf.mxu0
      %v761 = vadd.f32 0.0, %v760
      %v762 = vpop.f32.mrf.mxu0
      %v763 = vadd.f32 0.0, %v762
      %764 = vmatprep.mubr.bf16.mxu0 0
      %765 = vmatmul.mubr.bf16.gmra.mxu0 %v587
      %v766 = vpop.f32.mrf.mxu0
      %v767 = vadd.f32 0.0, %v766
      %v768 = vpop.f32.mrf.mxu0
      %v769 = vadd.f32 0.0, %v768
      %v770 = vpop.f32.mrf.mxu0
      %v771 = vadd.f32 0.0, %v770
      %v772 = vpop.f32.mrf.mxu0
      %v773 = vadd.f32 0.0, %v772
      %774 = vmatprep.mubr.bf16.mxu0 0
      %775 = vmatmul.mubr.bf16.gmra.mxu0 %v590
      %v776 = vpop.f32.mrf.mxu0
      %v777 = vadd.f32 0.0, %v776
      %v778 = vpop.f32.mrf.mxu0
      %v779 = vadd.f32 0.0, %v778
      %v780 = vpop.f32.mrf.mxu0
      %v781 = vadd.f32 0.0, %v780
      %v782 = vpop.f32.mrf.mxu0
      %v783 = vadd.f32 0.0, %v782
      %784 = vdwg.mxu0
      %785 = vmatprep.subr.bf16.mxu0 0
      %786 = vmatpush1.bf16.msra.mxu0 0
      %787 = vmatprep.subr.bf16.mxu0 0
      %788 = vmatpush1.bf16.msra.mxu0 0
      %789 = vmatprep.subr.bf16.mxu0 0
      %790 = vmatpush1.bf16.msra.mxu0 0
      %791 = vmatprep.subr.bf16.mxu0 0
      %792 = vmatpush1.bf16.msra.mxu0 0
      %793 = vmatprep.subr.bf16.mxu0 0
      %794 = vmatpush1.bf16.msra.mxu0 0
      %795 = vmatprep.subr.bf16.mxu0 0
      %796 = vmatpush1.bf16.msra.mxu0 0
      %797 = vmatprep.subr.bf16.mxu0 0
      %798 = vmatpush1.bf16.msra.mxu0 %v536
      %799 = vmatprep.subr.bf16.mxu0 0
      %800 = vmatpush1.bf16.msra.mxu0 %v533
      %801 = vmatprep.subr.bf16.mxu0 0
      %802 = vmatpush2.bf16.msra.mxu0 0
      %803 = vmatprep.subr.bf16.mxu0 0
      %804 = vmatpush2.bf16.msra.mxu0 0
      %805 = vmatprep.subr.bf16.mxu0 0
      %806 = vmatpush2.bf16.msra.mxu0 0
      %807 = vmatprep.subr.bf16.mxu0 0
      %808 = vmatpush2.bf16.msra.mxu0 0
      %809 = vmatprep.subr.bf16.mxu0 0
      %810 = vmatpush2.bf16.msra.mxu0 0
      %811 = vmatprep.subr.bf16.mxu0 0
      %812 = vmatpush2.bf16.msra.mxu0 0
      %813 = vmatprep.subr.bf16.mxu0 0
      %814 = vmatpush2.bf16.msra.mxu0 0
      %815 = vmatprep.subr.bf16.mxu0 0
      %816 = vmatpush2.bf16.msra.mxu0 0
      %817 = vmatprep.mubr.bf16.mxu0 0
      %818 = vmatmul.mubr.bf16.gmra.mxu0 %v545
      %v819 = vpop.f32.mrf.mxu0
      %v820 = vadd.f32 0.0, %v819
      %v821 = vpop.f32.mrf.mxu0
      %v822 = vpop.f32.mrf.mxu0
      %v823 = vadd.f32 0.0, %v822
      %v824 = vpop.f32.mrf.mxu0
      %825 = vmatprep.mubr.bf16.mxu0 0
      %826 = vmatmul.mubr.bf16.gmra.mxu0 %v548
      %v827 = vpop.f32.mrf.mxu0
      %v828 = vadd.f32 0.0, %v827
      %v829 = vpop.f32.mrf.mxu0
      %v830 = vpop.f32.mrf.mxu0
      %v831 = vadd.f32 0.0, %v830
      %v832 = vpop.f32.mrf.mxu0
      %833 = vmatprep.mubr.bf16.mxu0 0
      %834 = vmatmul.mubr.bf16.gmra.mxu0 %v551
      %v835 = vpop.f32.mrf.mxu0
      %v836 = vadd.f32 0.0, %v835
      %v837 = vpop.f32.mrf.mxu0
      %v838 = vpop.f32.mrf.mxu0
      %v839 = vadd.f32 0.0, %v838
      %v840 = vpop.f32.mrf.mxu0
      %841 = vmatprep.mubr.bf16.mxu0 0
      %842 = vmatmul.mubr.bf16.gmra.mxu0 %v554
      %v843 = vpop.f32.mrf.mxu0
      %v844 = vadd.f32 0.0, %v843
      %v845 = vpop.f32.mrf.mxu0
      %v846 = vpop.f32.mrf.mxu0
      %v847 = vadd.f32 0.0, %v846
      %v848 = vpop.f32.mrf.mxu0
      %849 = vmatprep.mubr.bf16.mxu0 0
      %850 = vmatmul.mubr.bf16.gmra.mxu0 %v557
      %v851 = vpop.f32.mrf.mxu0
      %v852 = vadd.f32 0.0, %v851
      %v853 = vpop.f32.mrf.mxu0
      %v854 = vpop.f32.mrf.mxu0
      %v855 = vadd.f32 0.0, %v854
      %v856 = vpop.f32.mrf.mxu0
      %857 = vmatprep.mubr.bf16.mxu0 0
      %858 = vmatmul.mubr.bf16.gmra.mxu0 %v560
      %v859 = vpop.f32.mrf.mxu0
      %v860 = vadd.f32 0.0, %v859
      %v861 = vpop.f32.mrf.mxu0
      %v862 = vpop.f32.mrf.mxu0
      %v863 = vadd.f32 0.0, %v862
      %v864 = vpop.f32.mrf.mxu0
      %865 = vmatprep.mubr.bf16.mxu0 0
      %866 = vmatmul.mubr.bf16.gmra.mxu0 %v563
      %v867 = vpop.f32.mrf.mxu0
      %v868 = vadd.f32 0.0, %v867
      %v869 = vpop.f32.mrf.mxu0
      %v870 = vpop.f32.mrf.mxu0
      %v871 = vadd.f32 0.0, %v870
      %v872 = vpop.f32.mrf.mxu0
      %873 = vmatprep.mubr.bf16.mxu0 0
      %874 = vmatmul.mubr.bf16.gmra.mxu0 %v566
      %v875 = vpop.f32.mrf.mxu0
      %v876 = vadd.f32 0.0, %v875
      %v877 = vpop.f32.mrf.mxu0
      %v878 = vpop.f32.mrf.mxu0
      %v879 = vadd.f32 0.0, %v878
      %v880 = vpop.f32.mrf.mxu0
      %881 = vmatprep.mubr.bf16.mxu0 0
      %882 = vmatmul.mubr.bf16.gmra.mxu0 %v569
      %v883 = vpop.f32.mrf.mxu0
      %v884 = vadd.f32 0.0, %v883
      %v885 = vpop.f32.mrf.mxu0
      %v886 = vpop.f32.mrf.mxu0
      %v887 = vadd.f32 0.0, %v886
      %v888 = vpop.f32.mrf.mxu0
      %889 = vmatprep.mubr.bf16.mxu0 0
      %890 = vmatmul.mubr.bf16.gmra.mxu0 %v572
      %v891 = vpop.f32.mrf.mxu0
      %v892 = vadd.f32 0.0, %v891
      %v893 = vpop.f32.mrf.mxu0
      %v894 = vpop.f32.mrf.mxu0
      %v895 = vadd.f32 0.0, %v894
      %v896 = vpop.f32.mrf.mxu0
      %897 = vmatprep.mubr.bf16.mxu0 0
      %898 = vmatmul.mubr.bf16.gmra.mxu0 %v575
      %v899 = vpop.f32.mrf.mxu0
      %v900 = vadd.f32 0.0, %v899
      %v901 = vpop.f32.mrf.mxu0
      %v902 = vpop.f32.mrf.mxu0
      %v903 = vadd.f32 0.0, %v902
      %v904 = vpop.f32.mrf.mxu0
      %905 = vmatprep.mubr.bf16.mxu0 0
      %906 = vmatmul.mubr.bf16.gmra.mxu0 %v578
      %v907 = vpop.f32.mrf.mxu0
      %v908 = vadd.f32 0.0, %v907
      %v909 = vpop.f32.mrf.mxu0
      %v910 = vpop.f32.mrf.mxu0
      %v911 = vadd.f32 0.0, %v910
      %v912 = vpop.f32.mrf.mxu0
      %913 = vmatprep.mubr.bf16.mxu0 0
      %914 = vmatmul.mubr.bf16.gmra.mxu0 %v581
      %v915 = vpop.f32.mrf.mxu0
      %v916 = vadd.f32 0.0, %v915
      %v917 = vpop.f32.mrf.mxu0
      %v918 = vpop.f32.mrf.mxu0
      %v919 = vadd.f32 0.0, %v918
      %v920 = vpop.f32.mrf.mxu0
      %921 = vmatprep.mubr.bf16.mxu0 0
      %922 = vmatmul.mubr.bf16.gmra.mxu0 %v584
      %v923 = vpop.f32.mrf.mxu0
      %v924 = vadd.f32 0.0, %v923
      %v925 = vpop.f32.mrf.mxu0
      %v926 = vpop.f32.mrf.mxu0
      %v927 = vadd.f32 0.0, %v926
      %v928 = vpop.f32.mrf.mxu0
      %929 = vmatprep.mubr.bf16.mxu0 0
      %930 = vmatmul.mubr.bf16.gmra.mxu0 %v587
      %v931 = vpop.f32.mrf.mxu0
      %v932 = vadd.f32 0.0, %v931
      %v933 = vpop.f32.mrf.mxu0
      %v934 = vpop.f32.mrf.mxu0
      %v935 = vadd.f32 0.0, %v934
      %v936 = vpop.f32.mrf.mxu0
      %937 = vmatprep.mubr.bf16.mxu0 0
      %938 = vmatmul.mubr.bf16.gmra.mxu0 %v590
      %v939 = vpop.f32.mrf.mxu0
      %v940 = vadd.f32 0.0, %v939
      %v941 = vpop.f32.mrf.mxu0
      %v942 = vpop.f32.mrf.mxu0
      %v943 = vadd.f32 0.0, %v942
      %v944 = vpop.f32.mrf.mxu0
      %945 = vdwg.mxu0
      %v946 = vld [vmem:[%s2] sm:$0x3]
      %v948 = vlaneseq
      %v949 = vshrl.u32 %v948, 7
      %v950 = vsub.s32 0, %v949
      %v951 = vrot.slane %v946, %v950
      %v952 = vlaneseq
      %v953 = vshrl.u32 %v952, 7
      %v954 = vsub.s32 1, %v953
      %v955 = vrot.slane %v946, %v954
      %v958 = vadd.f32 %v627, %v951
      %v959 = vadd.f32 %v629, %v955
      %v960 = vadd.f32 %v631, %v951
      %v961 = vadd.f32 %v633, %v955
      %v962 = vadd.f32 %v637, %v951
      %v963 = vadd.f32 %v639, %v955
      %v964 = vadd.f32 %v641, %v951
      %v965 = vadd.f32 %v643, %v955
      %v966 = vadd.f32 %v647, %v951
      %v967 = vadd.f32 %v649, %v955
      %v968 = vadd.f32 %v651, %v951
      %v969 = vadd.f32 %v653, %v955
      %v970 = vadd.f32 %v657, %v951
      %v971 = vadd.f32 %v659, %v955
      %v972 = vadd.f32 %v661, %v951
      %v973 = vadd.f32 %v663, %v955
      %v974 = vadd.f32 %v667, %v951
      %v975 = vadd.f32 %v669, %v955
      %v976 = vadd.f32 %v671, %v951
      %v977 = vadd.f32 %v673, %v955
      %v978 = vadd.f32 %v677, %v951
      %v979 = vadd.f32 %v679, %v955
      %v980 = vadd.f32 %v681, %v951
      %v981 = vadd.f32 %v683, %v955
      %v982 = vadd.f32 %v687, %v951
      %v983 = vadd.f32 %v689, %v955
      %v984 = vadd.f32 %v691, %v951
      %v985 = vadd.f32 %v693, %v955
      %v986 = vadd.f32 %v697, %v951
      %v987 = vadd.f32 %v699, %v955
      %v988 = vadd.f32 %v701, %v951
      %v989 = vadd.f32 %v703, %v955
      %v990 = vadd.f32 %v707, %v951
      %v991 = vadd.f32 %v709, %v955
      %v992 = vadd.f32 %v711, %v951
      %v993 = vadd.f32 %v713, %v955
      %v994 = vadd.f32 %v717, %v951
      %v995 = vadd.f32 %v719, %v955
      %v996 = vadd.f32 %v721, %v951
      %v997 = vadd.f32 %v723, %v955
      %v998 = vadd.f32 %v727, %v951
      %v999 = vadd.f32 %v729, %v955
      %v1000 = vadd.f32 %v731, %v951
      %v1001 = vadd.f32 %v733, %v955
      %v1002 = vadd.f32 %v737, %v951
      %v1003 = vadd.f32 %v739, %v955
      %v1004 = vadd.f32 %v741, %v951
      %v1005 = vadd.f32 %v743, %v955
      %v1006 = vadd.f32 %v747, %v951
      %v1007 = vadd.f32 %v749, %v955
      %v1008 = vadd.f32 %v751, %v951
      %v1009 = vadd.f32 %v753, %v955
      %v1010 = vadd.f32 %v757, %v951
      %v1011 = vadd.f32 %v759, %v955
      %v1012 = vadd.f32 %v761, %v951
      %v1013 = vadd.f32 %v763, %v955
      %v1014 = vadd.f32 %v767, %v951
      %v1015 = vadd.f32 %v769, %v955
      %v1016 = vadd.f32 %v771, %v951
      %v1017 = vadd.f32 %v773, %v955
      %v1018 = vadd.f32 %v777, %v951
      %v1019 = vadd.f32 %v779, %v955
      %v1020 = vadd.f32 %v781, %v951
      %v1021 = vadd.f32 %v783, %v955
      %vm1022 = vcmask 1040384
      %v1023 = vsel %vm1022, %v951, 0.0
      %v1024 = vsel %vm1022, %v955, 0.0
      %v1025 = vadd.f32 %v1023, %v1024
      %1026 = vadd.xlane.f32.xlu0 %v1025
      %v1027 = vpop.xlane.xlu0 %1026
      %v1028 = vlaneseq
      %v1029 = vshrl.u32 %v1028, 7
      %v1030 = vsub.s32 0, %v1029
      %v1031 = vrot.slane %v1027, %v1030
      %v1032 = vadd.f32 %v820, %v1031
      %v1033 = vadd.f32 %v823, %v1031
      %v1034 = vadd.f32 %v828, %v1031
      %v1035 = vadd.f32 %v831, %v1031
      %v1036 = vadd.f32 %v836, %v1031
      %v1037 = vadd.f32 %v839, %v1031
      %v1038 = vadd.f32 %v844, %v1031
      %v1039 = vadd.f32 %v847, %v1031
      %v1040 = vadd.f32 %v852, %v1031
      %v1041 = vadd.f32 %v855, %v1031
      %v1042 = vadd.f32 %v860, %v1031
      %v1043 = vadd.f32 %v863, %v1031
      %v1044 = vadd.f32 %v868, %v1031
      %v1045 = vadd.f32 %v871, %v1031
      %v1046 = vadd.f32 %v876, %v1031
      %v1047 = vadd.f32 %v879, %v1031
      %v1048 = vadd.f32 %v884, %v1031
      %v1049 = vadd.f32 %v887, %v1031
      %v1050 = vadd.f32 %v892, %v1031
      %v1051 = vadd.f32 %v895, %v1031
      %v1052 = vadd.f32 %v900, %v1031
      %v1053 = vadd.f32 %v903, %v1031
      %v1054 = vadd.f32 %v908, %v1031
      %v1055 = vadd.f32 %v911, %v1031
      %v1056 = vadd.f32 %v916, %v1031
      %v1057 = vadd.f32 %v919, %v1031
      %v1058 = vadd.f32 %v924, %v1031
      %v1059 = vadd.f32 %v927, %v1031
      %v1060 = vadd.f32 %v932, %v1031
      %v1061 = vadd.f32 %v935, %v1031
      %v1062 = vadd.f32 %v940, %v1031
      %v1063 = vadd.f32 %v943, %v1031
      %v1064 = vmul.f32 %v1032, 0.00390625
      %v1065 = vmul.f32 %v1033, 0.00390625
      %v1066 = vmul.f32 %v1034, 0.00390625
      %v1067 = vmul.f32 %v1035, 0.00390625
      %v1068 = vmul.f32 %v1036, 0.00390625
      %v1069 = vmul.f32 %v1037, 0.00390625
      %v1070 = vmul.f32 %v1038, 0.00390625
      %v1071 = vmul.f32 %v1039, 0.00390625
      %v1072 = vmul.f32 %v1040, 0.00390625
      %v1073 = vmul.f32 %v1041, 0.00390625
      %v1074 = vmul.f32 %v1042, 0.00390625
      %v1075 = vmul.f32 %v1043, 0.00390625
      %v1076 = vmul.f32 %v1044, 0.00390625
      %v1077 = vmul.f32 %v1045, 0.00390625
      %v1078 = vmul.f32 %v1046, 0.00390625
      %v1079 = vmul.f32 %v1047, 0.00390625
      %v1080 = vmul.f32 %v1048, 0.00390625
      %v1081 = vmul.f32 %v1049, 0.00390625
      %v1082 = vmul.f32 %v1050, 0.00390625
      %v1083 = vmul.f32 %v1051, 0.00390625
      %v1084 = vmul.f32 %v1052, 0.00390625
      %v1085 = vmul.f32 %v1053, 0.00390625
      %v1086 = vmul.f32 %v1054, 0.00390625
      %v1087 = vmul.f32 %v1055, 0.00390625
      %v1088 = vmul.f32 %v1056, 0.00390625
      %v1089 = vmul.f32 %v1057, 0.00390625
      %v1090 = vmul.f32 %v1058, 0.00390625
      %v1091 = vmul.f32 %v1059, 0.00390625
      %v1092 = vmul.f32 %v1060, 0.00390625
      %v1093 = vmul.f32 %v1061, 0.00390625
      %v1094 = vmul.f32 %v1062, 0.00390625
      %v1095 = vmul.f32 %v1063, 0.00390625
      %v1096 = vld [vmem:[%s3] sm:$0x3]
      %v1097 = vld [vmem:[%s4] sm:$0x3]
      %v1098 = vmul.f32 %v958, %v958
      %v1099 = vmul.f32 %v959, %v959
      %v1100 = vmul.f32 %v960, %v960
      %v1101 = vmul.f32 %v961, %v961
      %v1102 = vmul.f32 %v962, %v962
      %v1103 = vmul.f32 %v963, %v963
      %v1104 = vmul.f32 %v964, %v964
      %v1105 = vmul.f32 %v965, %v965
      %v1106 = vmul.f32 %v966, %v966
      %v1107 = vmul.f32 %v967, %v967
      %v1108 = vmul.f32 %v968, %v968
      %v1109 = vmul.f32 %v969, %v969
      %v1110 = vmul.f32 %v970, %v970
      %v1111 = vmul.f32 %v971, %v971
      %v1112 = vmul.f32 %v972, %v972
      %v1113 = vmul.f32 %v973, %v973
      %v1114 = vmul.f32 %v974, %v974
      %v1115 = vmul.f32 %v975, %v975
      %v1116 = vmul.f32 %v976, %v976
      %v1117 = vmul.f32 %v977, %v977
      %v1118 = vmul.f32 %v978, %v978
      %v1119 = vmul.f32 %v979, %v979
      %v1120 = vmul.f32 %v980, %v980
      %v1121 = vmul.f32 %v981, %v981
      %v1122 = vmul.f32 %v982, %v982
      %v1123 = vmul.f32 %v983, %v983
      %v1124 = vmul.f32 %v984, %v984
      %v1125 = vmul.f32 %v985, %v985
      %v1126 = vmul.f32 %v986, %v986
      %v1127 = vmul.f32 %v987, %v987
      %v1128 = vmul.f32 %v988, %v988
      %v1129 = vmul.f32 %v989, %v989
      %v1130 = vmul.f32 %v990, %v990
      %v1131 = vmul.f32 %v991, %v991
      %v1132 = vmul.f32 %v992, %v992
      %v1133 = vmul.f32 %v993, %v993
      %v1134 = vmul.f32 %v994, %v994
      %v1135 = vmul.f32 %v995, %v995
      %v1136 = vmul.f32 %v996, %v996
      %v1137 = vmul.f32 %v997, %v997
      %v1138 = vmul.f32 %v998, %v998
      %v1139 = vmul.f32 %v999, %v999
      %v1140 = vmul.f32 %v1000, %v1000
      %v1141 = vmul.f32 %v1001, %v1001
      %v1142 = vmul.f32 %v1002, %v1002
      %v1143 = vmul.f32 %v1003, %v1003
      %v1144 = vmul.f32 %v1004, %v1004
      %v1145 = vmul.f32 %v1005, %v1005
      %v1146 = vmul.f32 %v1006, %v1006
      %v1147 = vmul.f32 %v1007, %v1007
      %v1148 = vmul.f32 %v1008, %v1008
      %v1149 = vmul.f32 %v1009, %v1009
      %v1150 = vmul.f32 %v1010, %v1010
      %v1151 = vmul.f32 %v1011, %v1011
      %v1152 = vmul.f32 %v1012, %v1012
      %v1153 = vmul.f32 %v1013, %v1013
      %v1154 = vmul.f32 %v1014, %v1014
      %v1155 = vmul.f32 %v1015, %v1015
      %v1156 = vmul.f32 %v1016, %v1016
      %v1157 = vmul.f32 %v1017, %v1017
      %v1158 = vmul.f32 %v1018, %v1018
      %v1159 = vmul.f32 %v1019, %v1019
      %v1160 = vmul.f32 %v1020, %v1020
      %v1161 = vmul.f32 %v1021, %v1021
      %v1162 = vadd.f32 %v1098, %v1099
      %1163 = vadd.xlane.f32.xlu0 %v1162
      %v1164 = vpop.xlane.xlu0 %1163
      %v1165 = vadd.f32 %v1100, %v1101
      %1166 = vadd.xlane.f32.xlu0 %v1165
      %v1167 = vpop.xlane.xlu0 %1166
      %v1168 = vadd.f32 %v1102, %v1103
      %1169 = vadd.xlane.f32.xlu0 %v1168
      %v1170 = vpop.xlane.xlu0 %1169
      %v1171 = vadd.f32 %v1104, %v1105
      %1172 = vadd.xlane.f32.xlu0 %v1171
      %v1173 = vpop.xlane.xlu0 %1172
      %v1174 = vadd.f32 %v1106, %v1107
      %1175 = vadd.xlane.f32.xlu0 %v1174
      %v1176 = vpop.xlane.xlu0 %1175
      %v1177 = vadd.f32 %v1108, %v1109
      %1178 = vadd.xlane.f32.xlu0 %v1177
      %v1179 = vpop.xlane.xlu0 %1178
      %v1180 = vadd.f32 %v1110, %v1111
      %1181 = vadd.xlane.f32.xlu0 %v1180
      %v1182 = vpop.xlane.xlu0 %1181
      %v1183 = vadd.f32 %v1112, %v1113
      %1184 = vadd.xlane.f32.xlu0 %v1183
      %v1185 = vpop.xlane.xlu0 %1184
      %v1186 = vadd.f32 %v1114, %v1115
      %1187 = vadd.xlane.f32.xlu0 %v1186
      %v1188 = vpop.xlane.xlu0 %1187
      %v1189 = vadd.f32 %v1116, %v1117
      %1190 = vadd.xlane.f32.xlu0 %v1189
      %v1191 = vpop.xlane.xlu0 %1190
      %v1192 = vadd.f32 %v1118, %v1119
      %1193 = vadd.xlane.f32.xlu0 %v1192
      %v1194 = vpop.xlane.xlu0 %1193
      %v1195 = vadd.f32 %v1120, %v1121
      %1196 = vadd.xlane.f32.xlu0 %v1195
      %v1197 = vpop.xlane.xlu0 %1196
      %v1198 = vadd.f32 %v1122, %v1123
      %1199 = vadd.xlane.f32.xlu0 %v1198
      %v1200 = vpop.xlane.xlu0 %1199
      %v1201 = vadd.f32 %v1124, %v1125
      %1202 = vadd.xlane.f32.xlu0 %v1201
      %v1203 = vpop.xlane.xlu0 %1202
      %v1204 = vadd.f32 %v1126, %v1127
      %1205 = vadd.xlane.f32.xlu0 %v1204
      %v1206 = vpop.xlane.xlu0 %1205
      %v1207 = vadd.f32 %v1128, %v1129
      %1208 = vadd.xlane.f32.xlu0 %v1207
      %v1209 = vpop.xlane.xlu0 %1208
      %v1210 = vadd.f32 %v1130, %v1131
      %1211 = vadd.xlane.f32.xlu0 %v1210
      %v1212 = vpop.xlane.xlu0 %1211
      %v1213 = vadd.f32 %v1132, %v1133
      %1214 = vadd.xlane.f32.xlu0 %v1213
      %v1215 = vpop.xlane.xlu0 %1214
      %v1216 = vadd.f32 %v1134, %v1135
      %1217 = vadd.xlane.f32.xlu0 %v1216
      %v1218 = vpop.xlane.xlu0 %1217
      %v1219 = vadd.f32 %v1136, %v1137
      %1220 = vadd.xlane.f32.xlu0 %v1219
      %v1221 = vpop.xlane.xlu0 %1220
      %v1222 = vadd.f32 %v1138, %v1139
      %1223 = vadd.xlane.f32.xlu0 %v1222
      %v1224 = vpop.xlane.xlu0 %1223
      %v1225 = vadd.f32 %v1140, %v1141
      %1226 = vadd.xlane.f32.xlu0 %v1225
      %v1227 = vpop.xlane.xlu0 %1226
      %v1228 = vadd.f32 %v1142, %v1143
      %1229 = vadd.xlane.f32.xlu0 %v1228
      %v1230 = vpop.xlane.xlu0 %1229
      %v1231 = vadd.f32 %v1144, %v1145
      %1232 = vadd.xlane.f32.xlu0 %v1231
      %v1233 = vpop.xlane.xlu0 %1232
      %v1234 = vadd.f32 %v1146, %v1147
      %1235 = vadd.xlane.f32.xlu0 %v1234
      %v1236 = vpop.xlane.xlu0 %1235
      %v1237 = vadd.f32 %v1148, %v1149
      %1238 = vadd.xlane.f32.xlu0 %v1237
      %v1239 = vpop.xlane.xlu0 %1238
      %v1240 = vadd.f32 %v1150, %v1151
      %1241 = vadd.xlane.f32.xlu0 %v1240
      %v1242 = vpop.xlane.xlu0 %1241
      %v1243 = vadd.f32 %v1152, %v1153
      %1244 = vadd.xlane.f32.xlu0 %v1243
      %v1245 = vpop.xlane.xlu0 %1244
      %v1246 = vadd.f32 %v1154, %v1155
      %1247 = vadd.xlane.f32.xlu0 %v1246
      %v1248 = vpop.xlane.xlu0 %1247
      %v1249 = vadd.f32 %v1156, %v1157
      %1250 = vadd.xlane.f32.xlu0 %v1249
      %v1251 = vpop.xlane.xlu0 %1250
      %v1252 = vadd.f32 %v1158, %v1159
      %1253 = vadd.xlane.f32.xlu0 %v1252
      %v1254 = vpop.xlane.xlu0 %1253
      %v1255 = vadd.f32 %v1160, %v1161
      %1256 = vadd.xlane.f32.xlu0 %v1255
      %v1257 = vpop.xlane.xlu0 %1256
      %v1258 = vrcp.pop 256.0
      %v1259 = vmul.f32 %v1164, %v1258
      %v1260 = vmul.f32 %v1167, %v1258
      %v1261 = vmul.f32 %v1170, %v1258
      %v1262 = vmul.f32 %v1173, %v1258
      %v1263 = vmul.f32 %v1176, %v1258
      %v1264 = vmul.f32 %v1179, %v1258
      %v1265 = vmul.f32 %v1182, %v1258
      %v1266 = vmul.f32 %v1185, %v1258
      %v1267 = vmul.f32 %v1188, %v1258
      %v1268 = vmul.f32 %v1191, %v1258
      %v1269 = vmul.f32 %v1194, %v1258
      %v1270 = vmul.f32 %v1197, %v1258
      %v1271 = vmul.f32 %v1200, %v1258
      %v1272 = vmul.f32 %v1203, %v1258
      %v1273 = vmul.f32 %v1206, %v1258
      %v1274 = vmul.f32 %v1209, %v1258
      %v1275 = vmul.f32 %v1212, %v1258
      %v1276 = vmul.f32 %v1215, %v1258
      %v1277 = vmul.f32 %v1218, %v1258
      %v1278 = vmul.f32 %v1221, %v1258
      %v1279 = vmul.f32 %v1224, %v1258
      %v1280 = vmul.f32 %v1227, %v1258
      %v1281 = vmul.f32 %v1230, %v1258
      %v1282 = vmul.f32 %v1233, %v1258
      %v1283 = vmul.f32 %v1236, %v1258
      %v1284 = vmul.f32 %v1239, %v1258
      %v1285 = vmul.f32 %v1242, %v1258
      %v1286 = vmul.f32 %v1245, %v1258
      %v1287 = vmul.f32 %v1248, %v1258
      %v1288 = vmul.f32 %v1251, %v1258
      %v1289 = vmul.f32 %v1254, %v1258
      %v1290 = vmul.f32 %v1257, %v1258
      %v1291 = vmul.f32 %v1064, %v1064
      %v1292 = vmul.f32 %v1065, %v1065
      %v1293 = vmul.f32 %v1066, %v1066
      %v1294 = vmul.f32 %v1067, %v1067
      %v1295 = vmul.f32 %v1068, %v1068
      %v1296 = vmul.f32 %v1069, %v1069
      %v1297 = vmul.f32 %v1070, %v1070
      %v1298 = vmul.f32 %v1071, %v1071
      %v1299 = vmul.f32 %v1072, %v1072
      %v1300 = vmul.f32 %v1073, %v1073
      %v1301 = vmul.f32 %v1074, %v1074
      %v1302 = vmul.f32 %v1075, %v1075
      %v1303 = vmul.f32 %v1076, %v1076
      %v1304 = vmul.f32 %v1077, %v1077
      %v1305 = vmul.f32 %v1078, %v1078
      %v1306 = vmul.f32 %v1079, %v1079
      %v1307 = vmul.f32 %v1080, %v1080
      %v1308 = vmul.f32 %v1081, %v1081
      %v1309 = vmul.f32 %v1082, %v1082
      %v1310 = vmul.f32 %v1083, %v1083
      %v1311 = vmul.f32 %v1084, %v1084
      %v1312 = vmul.f32 %v1085, %v1085
      %v1313 = vmul.f32 %v1086, %v1086
      %v1314 = vmul.f32 %v1087, %v1087
      %v1315 = vmul.f32 %v1088, %v1088
      %v1316 = vmul.f32 %v1089, %v1089
      %v1317 = vmul.f32 %v1090, %v1090
      %v1318 = vmul.f32 %v1091, %v1091
      %v1319 = vmul.f32 %v1092, %v1092
      %v1320 = vmul.f32 %v1093, %v1093
      %v1321 = vmul.f32 %v1094, %v1094
      %v1322 = vmul.f32 %v1095, %v1095
      %v1323 = vsub.f32 %v1259, %v1291
      %v1324 = vsub.f32 %v1260, %v1292
      %v1325 = vsub.f32 %v1261, %v1293
      %v1326 = vsub.f32 %v1262, %v1294
      %v1327 = vsub.f32 %v1263, %v1295
      %v1328 = vsub.f32 %v1264, %v1296
      %v1329 = vsub.f32 %v1265, %v1297
      %v1330 = vsub.f32 %v1266, %v1298
      %v1331 = vsub.f32 %v1267, %v1299
      %v1332 = vsub.f32 %v1268, %v1300
      %v1333 = vsub.f32 %v1269, %v1301
      %v1334 = vsub.f32 %v1270, %v1302
      %v1335 = vsub.f32 %v1271, %v1303
      %v1336 = vsub.f32 %v1272, %v1304
      %v1337 = vsub.f32 %v1273, %v1305
      %v1338 = vsub.f32 %v1274, %v1306
      %v1339 = vsub.f32 %v1275, %v1307
      %v1340 = vsub.f32 %v1276, %v1308
      %v1341 = vsub.f32 %v1277, %v1309
      %v1342 = vsub.f32 %v1278, %v1310
      %v1343 = vsub.f32 %v1279, %v1311
      %v1344 = vsub.f32 %v1280, %v1312
      %v1345 = vsub.f32 %v1281, %v1313
      %v1346 = vsub.f32 %v1282, %v1314
      %v1347 = vsub.f32 %v1283, %v1315
      %v1348 = vsub.f32 %v1284, %v1316
      %v1349 = vsub.f32 %v1285, %v1317
      %v1350 = vsub.f32 %v1286, %v1318
      %v1351 = vsub.f32 %v1287, %v1319
      %v1352 = vsub.f32 %v1288, %v1320
      %v1353 = vsub.f32 %v1289, %v1321
      %v1354 = vsub.f32 %v1290, %v1322
      %1356 = vset.pattern.permute.xlu0 127
      %1357 = vperm.xlu0 %1356, %v1064
      %v1358 = vpop.permute.xlu0 %1357
      %1361 = vset.pattern.permute.xlu0 127
      %1362 = vperm.xlu0 %1361, %v1065
      %v1363 = vpop.permute.xlu0 %1362
      %1366 = vset.pattern.permute.xlu0 127
      %1367 = vperm.xlu0 %1366, %v1066
      %v1368 = vpop.permute.xlu0 %1367
      %1371 = vset.pattern.permute.xlu0 127
      %1372 = vperm.xlu0 %1371, %v1067
      %v1373 = vpop.permute.xlu0 %1372
      %1376 = vset.pattern.permute.xlu0 127
      %1377 = vperm.xlu0 %1376, %v1068
      %v1378 = vpop.permute.xlu0 %1377
      %1381 = vset.pattern.permute.xlu0 127
      %1382 = vperm.xlu0 %1381, %v1069
      %v1383 = vpop.permute.xlu0 %1382
      %1386 = vset.pattern.permute.xlu0 127
      %1387 = vperm.xlu0 %1386, %v1070
      %v1388 = vpop.permute.xlu0 %1387
      %1391 = vset.pattern.permute.xlu0 127
      %1392 = vperm.xlu0 %1391, %v1071
      %v1393 = vpop.permute.xlu0 %1392
      %1396 = vset.pattern.permute.xlu0 127
      %1397 = vperm.xlu0 %1396, %v1072
      %v1398 = vpop.permute.xlu0 %1397
      %1401 = vset.pattern.permute.xlu0 127
      %1402 = vperm.xlu0 %1401, %v1073
      %v1403 = vpop.permute.xlu0 %1402
      %1406 = vset.pattern.permute.xlu0 127
      %1407 = vperm.xlu0 %1406, %v1074
      %v1408 = vpop.permute.xlu0 %1407
      %1411 = vset.pattern.permute.xlu0 127
      %1412 = vperm.xlu0 %1411, %v1075
      %v1413 = vpop.permute.xlu0 %1412
      %1416 = vset.pattern.permute.xlu0 127
      %1417 = vperm.xlu0 %1416, %v1076
      %v1418 = vpop.permute.xlu0 %1417
      %1421 = vset.pattern.permute.xlu0 127
      %1422 = vperm.xlu0 %1421, %v1077
      %v1423 = vpop.permute.xlu0 %1422
      %1426 = vset.pattern.permute.xlu0 127
      %1427 = vperm.xlu0 %1426, %v1078
      %v1428 = vpop.permute.xlu0 %1427
      %1431 = vset.pattern.permute.xlu0 127
      %1432 = vperm.xlu0 %1431, %v1079
      %v1433 = vpop.permute.xlu0 %1432
      %1436 = vset.pattern.permute.xlu0 127
      %1437 = vperm.xlu0 %1436, %v1080
      %v1438 = vpop.permute.xlu0 %1437
      %1441 = vset.pattern.permute.xlu0 127
      %1442 = vperm.xlu0 %1441, %v1081
      %v1443 = vpop.permute.xlu0 %1442
      %1446 = vset.pattern.permute.xlu0 127
      %1447 = vperm.xlu0 %1446, %v1082
      %v1448 = vpop.permute.xlu0 %1447
      %1451 = vset.pattern.permute.xlu0 127
      %1452 = vperm.xlu0 %1451, %v1083
      %v1453 = vpop.permute.xlu0 %1452
      %1456 = vset.pattern.permute.xlu0 127
      %1457 = vperm.xlu0 %1456, %v1084
      %v1458 = vpop.permute.xlu0 %1457
      %1461 = vset.pattern.permute.xlu0 127
      %1462 = vperm.xlu0 %1461, %v1085
      %v1463 = vpop.permute.xlu0 %1462
      %1466 = vset.pattern.permute.xlu0 127
      %1467 = vperm.xlu0 %1466, %v1086
      %v1468 = vpop.permute.xlu0 %1467
      %1471 = vset.pattern.permute.xlu0 127
      %1472 = vperm.xlu0 %1471, %v1087
      %v1473 = vpop.permute.xlu0 %1472
      %1476 = vset.pattern.permute.xlu0 127
      %1477 = vperm.xlu0 %1476, %v1088
      %v1478 = vpop.permute.xlu0 %1477
      %1481 = vset.pattern.permute.xlu0 127
      %1482 = vperm.xlu0 %1481, %v1089
      %v1483 = vpop.permute.xlu0 %1482
      %1486 = vset.pattern.permute.xlu0 127
      %1487 = vperm.xlu0 %1486, %v1090
      %v1488 = vpop.permute.xlu0 %1487
      %1491 = vset.pattern.permute.xlu0 127
      %1492 = vperm.xlu0 %1491, %v1091
      %v1493 = vpop.permute.xlu0 %1492
      %1496 = vset.pattern.permute.xlu0 127
      %1497 = vperm.xlu0 %1496, %v1092
      %v1498 = vpop.permute.xlu0 %1497
      %1501 = vset.pattern.permute.xlu0 127
      %1502 = vperm.xlu0 %1501, %v1093
      %v1503 = vpop.permute.xlu0 %1502
      %1506 = vset.pattern.permute.xlu0 127
      %1507 = vperm.xlu0 %1506, %v1094
      %v1508 = vpop.permute.xlu0 %1507
      %1511 = vset.pattern.permute.xlu0 127
      %1512 = vperm.xlu0 %1511, %v1095
      %v1513 = vpop.permute.xlu0 %1512
      %v1515 = vsub.f32 %v958, %v1358
      %v1516 = vsub.f32 %v959, %v1358
      %v1517 = vsub.f32 %v960, %v1363
      %v1518 = vsub.f32 %v961, %v1363
      %v1519 = vsub.f32 %v962, %v1368
      %v1520 = vsub.f32 %v963, %v1368
      %v1521 = vsub.f32 %v964, %v1373
      %v1522 = vsub.f32 %v965, %v1373
      %v1523 = vsub.f32 %v966, %v1378
      %v1524 = vsub.f32 %v967, %v1378
      %v1525 = vsub.f32 %v968, %v1383
      %v1526 = vsub.f32 %v969, %v1383
      %v1527 = vsub.f32 %v970, %v1388
      %v1528 = vsub.f32 %v971, %v1388
      %v1529 = vsub.f32 %v972, %v1393
      %v1530 = vsub.f32 %v973, %v1393
      %v1531 = vsub.f32 %v974, %v1398
      %v1532 = vsub.f32 %v975, %v1398
      %v1533 = vsub.f32 %v976, %v1403
      %v1534 = vsub.f32 %v977, %v1403
      %v1535 = vsub.f32 %v978, %v1408
      %v1536 = vsub.f32 %v979, %v1408
      %v1537 = vsub.f32 %v980, %v1413
      %v1538 = vsub.f32 %v981, %v1413
      %v1539 = vsub.f32 %v982, %v1418
      %v1540 = vsub.f32 %v983, %v1418
      %v1541 = vsub.f32 %v984, %v1423
      %v1542 = vsub.f32 %v985, %v1423
      %v1543 = vsub.f32 %v986, %v1428
      %v1544 = vsub.f32 %v987, %v1428
      %v1545 = vsub.f32 %v988, %v1433
      %v1546 = vsub.f32 %v989, %v1433
      %v1547 = vsub.f32 %v990, %v1438
      %v1548 = vsub.f32 %v991, %v1438
      %v1549 = vsub.f32 %v992, %v1443
      %v1550 = vsub.f32 %v993, %v1443
      %v1551 = vsub.f32 %v994, %v1448
      %v1552 = vsub.f32 %v995, %v1448
      %v1553 = vsub.f32 %v996, %v1453
      %v1554 = vsub.f32 %v997, %v1453
      %v1555 = vsub.f32 %v998, %v1458
      %v1556 = vsub.f32 %v999, %v1458
      %v1557 = vsub.f32 %v1000, %v1463
      %v1558 = vsub.f32 %v1001, %v1463
      %v1559 = vsub.f32 %v1002, %v1468
      %v1560 = vsub.f32 %v1003, %v1468
      %v1561 = vsub.f32 %v1004, %v1473
      %v1562 = vsub.f32 %v1005, %v1473
      %v1563 = vsub.f32 %v1006, %v1478
      %v1564 = vsub.f32 %v1007, %v1478
      %v1565 = vsub.f32 %v1008, %v1483
      %v1566 = vsub.f32 %v1009, %v1483
      %v1567 = vsub.f32 %v1010, %v1488
      %v1568 = vsub.f32 %v1011, %v1488
      %v1569 = vsub.f32 %v1012, %v1493
      %v1570 = vsub.f32 %v1013, %v1493
      %v1571 = vsub.f32 %v1014, %v1498
      %v1572 = vsub.f32 %v1015, %v1498
      %v1573 = vsub.f32 %v1016, %v1503
      %v1574 = vsub.f32 %v1017, %v1503
      %v1575 = vsub.f32 %v1018, %v1508
      %v1576 = vsub.f32 %v1019, %v1508
      %v1577 = vsub.f32 %v1020, %v1513
      %v1578 = vsub.f32 %v1021, %v1513
      %v1579 = vadd.f32 %v1323, 1e-05
      %v1580 = vadd.f32 %v1324, 1e-05
      %v1581 = vadd.f32 %v1325, 1e-05
      %v1582 = vadd.f32 %v1326, 1e-05
      %v1583 = vadd.f32 %v1327, 1e-05
      %v1584 = vadd.f32 %v1328, 1e-05
      %v1585 = vadd.f32 %v1329, 1e-05
      %v1586 = vadd.f32 %v1330, 1e-05
      %v1587 = vadd.f32 %v1331, 1e-05
      %v1588 = vadd.f32 %v1332, 1e-05
      %v1589 = vadd.f32 %v1333, 1e-05
      %v1590 = vadd.f32 %v1334, 1e-05
      %v1591 = vadd.f32 %v1335, 1e-05
      %v1592 = vadd.f32 %v1336, 1e-05
      %v1593 = vadd.f32 %v1337, 1e-05
      %v1594 = vadd.f32 %v1338, 1e-05
      %v1595 = vadd.f32 %v1339, 1e-05
      %v1596 = vadd.f32 %v1340, 1e-05
      %v1597 = vadd.f32 %v1341, 1e-05
      %v1598 = vadd.f32 %v1342, 1e-05
      %v1599 = vadd.f32 %v1343, 1e-05
      %v1600 = vadd.f32 %v1344, 1e-05
      %v1601 = vadd.f32 %v1345, 1e-05
      %v1602 = vadd.f32 %v1346, 1e-05
      %v1603 = vadd.f32 %v1347, 1e-05
      %v1604 = vadd.f32 %v1348, 1e-05
      %v1605 = vadd.f32 %v1349, 1e-05
      %v1606 = vadd.f32 %v1350, 1e-05
      %v1607 = vadd.f32 %v1351, 1e-05
      %v1608 = vadd.f32 %v1352, 1e-05
      %v1609 = vadd.f32 %v1353, 1e-05
      %v1610 = vadd.f32 %v1354, 1e-05
      %v1611 = vrsqrt.pop %v1579
      %v1612 = vrsqrt.pop %v1580
      %v1613 = vrsqrt.pop %v1581
      %v1614 = vrsqrt.pop %v1582
      %v1615 = vrsqrt.pop %v1583
      %v1616 = vrsqrt.pop %v1584
      %v1617 = vrsqrt.pop %v1585
      %v1618 = vrsqrt.pop %v1586
      %v1619 = vrsqrt.pop %v1587
      %v1620 = vrsqrt.pop %v1588
      %v1621 = vrsqrt.pop %v1589
      %v1622 = vrsqrt.pop %v1590
      %v1623 = vrsqrt.pop %v1591
      %v1624 = vrsqrt.pop %v1592
      %v1625 = vrsqrt.pop %v1593
      %v1626 = vrsqrt.pop %v1594
      %v1627 = vrsqrt.pop %v1595
      %v1628 = vrsqrt.pop %v1596
      %v1629 = vrsqrt.pop %v1597
      %v1630 = vrsqrt.pop %v1598
      %v1631 = vrsqrt.pop %v1599
      %v1632 = vrsqrt.pop %v1600
      %v1633 = vrsqrt.pop %v1601
      %v1634 = vrsqrt.pop %v1602
      %v1635 = vrsqrt.pop %v1603
      %v1636 = vrsqrt.pop %v1604
      %v1637 = vrsqrt.pop %v1605
      %v1638 = vrsqrt.pop %v1606
      %v1639 = vrsqrt.pop %v1607
      %v1640 = vrsqrt.pop %v1608
      %v1641 = vrsqrt.pop %v1609
      %v1642 = vrsqrt.pop %v1610
      %1644 = vset.pattern.permute.xlu0 127
      %1645 = vperm.xlu0 %1644, %v1611
      %v1646 = vpop.permute.xlu0 %1645
      %1649 = vset.pattern.permute.xlu0 127
      %1650 = vperm.xlu0 %1649, %v1612
      %v1651 = vpop.permute.xlu0 %1650
      %1654 = vset.pattern.permute.xlu0 127
      %1655 = vperm.xlu0 %1654, %v1613
      %v1656 = vpop.permute.xlu0 %1655
      %1659 = vset.pattern.permute.xlu0 127
      %1660 = vperm.xlu0 %1659, %v1614
      %v1661 = vpop.permute.xlu0 %1660
      %1664 = vset.pattern.permute.xlu0 127
      %1665 = vperm.xlu0 %1664, %v1615
      %v1666 = vpop.permute.xlu0 %1665
      %1669 = vset.pattern.permute.xlu0 127
      %1670 = vperm.xlu0 %1669, %v1616
      %v1671 = vpop.permute.xlu0 %1670
      %1674 = vset.pattern.permute.xlu0 127
      %1675 = vperm.xlu0 %1674, %v1617
      %v1676 = vpop.permute.xlu0 %1675
      %1679 = vset.pattern.permute.xlu0 127
      %1680 = vperm.xlu0 %1679, %v1618
      %v1681 = vpop.permute.xlu0 %1680
      %1684 = vset.pattern.permute.xlu0 127
      %1685 = vperm.xlu0 %1684, %v1619
      %v1686 = vpop.permute.xlu0 %1685
      %1689 = vset.pattern.permute.xlu0 127
      %1690 = vperm.xlu0 %1689, %v1620
      %v1691 = vpop.permute.xlu0 %1690
      %1694 = vset.pattern.permute.xlu0 127
      %1695 = vperm.xlu0 %1694, %v1621
      %v1696 = vpop.permute.xlu0 %1695
      %1699 = vset.pattern.permute.xlu0 127
      %1700 = vperm.xlu0 %1699, %v1622
      %v1701 = vpop.permute.xlu0 %1700
      %1704 = vset.pattern.permute.xlu0 127
      %1705 = vperm.xlu0 %1704, %v1623
      %v1706 = vpop.permute.xlu0 %1705
      %1709 = vset.pattern.permute.xlu0 127
      %1710 = vperm.xlu0 %1709, %v1624
      %v1711 = vpop.permute.xlu0 %1710
      %1714 = vset.pattern.permute.xlu0 127
      %1715 = vperm.xlu0 %1714, %v1625
      %v1716 = vpop.permute.xlu0 %1715
      %1719 = vset.pattern.permute.xlu0 127
      %1720 = vperm.xlu0 %1719, %v1626
      %v1721 = vpop.permute.xlu0 %1720
      %1724 = vset.pattern.permute.xlu0 127
      %1725 = vperm.xlu0 %1724, %v1627
      %v1726 = vpop.permute.xlu0 %1725
      %1729 = vset.pattern.permute.xlu0 127
      %1730 = vperm.xlu0 %1729, %v1628
      %v1731 = vpop.permute.xlu0 %1730
      %1734 = vset.pattern.permute.xlu0 127
      %1735 = vperm.xlu0 %1734, %v1629
      %v1736 = vpop.permute.xlu0 %1735
      %1739 = vset.pattern.permute.xlu0 127
      %1740 = vperm.xlu0 %1739, %v1630
      %v1741 = vpop.permute.xlu0 %1740
      %1744 = vset.pattern.permute.xlu0 127
      %1745 = vperm.xlu0 %1744, %v1631
      %v1746 = vpop.permute.xlu0 %1745
      %1749 = vset.pattern.permute.xlu0 127
      %1750 = vperm.xlu0 %1749, %v1632
      %v1751 = vpop.permute.xlu0 %1750
      %1754 = vset.pattern.permute.xlu0 127
      %1755 = vperm.xlu0 %1754, %v1633
      %v1756 = vpop.permute.xlu0 %1755
      %1759 = vset.pattern.permute.xlu0 127
      %1760 = vperm.xlu0 %1759, %v1634
      %v1761 = vpop.permute.xlu0 %1760
      %1764 = vset.pattern.permute.xlu0 127
      %1765 = vperm.xlu0 %1764, %v1635
      %v1766 = vpop.permute.xlu0 %1765
      %1769 = vset.pattern.permute.xlu0 127
      %1770 = vperm.xlu0 %1769, %v1636
      %v1771 = vpop.permute.xlu0 %1770
      %1774 = vset.pattern.permute.xlu0 127
      %1775 = vperm.xlu0 %1774, %v1637
      %v1776 = vpop.permute.xlu0 %1775
      %1779 = vset.pattern.permute.xlu0 127
      %1780 = vperm.xlu0 %1779, %v1638
      %v1781 = vpop.permute.xlu0 %1780
      %1784 = vset.pattern.permute.xlu0 127
      %1785 = vperm.xlu0 %1784, %v1639
      %v1786 = vpop.permute.xlu0 %1785
      %1789 = vset.pattern.permute.xlu0 127
      %1790 = vperm.xlu0 %1789, %v1640
      %v1791 = vpop.permute.xlu0 %1790
      %1794 = vset.pattern.permute.xlu0 127
      %1795 = vperm.xlu0 %1794, %v1641
      %v1796 = vpop.permute.xlu0 %1795
      %1799 = vset.pattern.permute.xlu0 127
      %1800 = vperm.xlu0 %1799, %v1642
      %v1801 = vpop.permute.xlu0 %1800
      %v1803 = vmul.f32 %v1515, %v1646
      %v1804 = vmul.f32 %v1516, %v1646
      %v1805 = vmul.f32 %v1517, %v1651
      %v1806 = vmul.f32 %v1518, %v1651
      %v1807 = vmul.f32 %v1519, %v1656
      %v1808 = vmul.f32 %v1520, %v1656
      %v1809 = vmul.f32 %v1521, %v1661
      %v1810 = vmul.f32 %v1522, %v1661
      %v1811 = vmul.f32 %v1523, %v1666
      %v1812 = vmul.f32 %v1524, %v1666
      %v1813 = vmul.f32 %v1525, %v1671
      %v1814 = vmul.f32 %v1526, %v1671
      %v1815 = vmul.f32 %v1527, %v1676
      %v1816 = vmul.f32 %v1528, %v1676
      %v1817 = vmul.f32 %v1529, %v1681
      %v1818 = vmul.f32 %v1530, %v1681
      %v1819 = vmul.f32 %v1531, %v1686
      %v1820 = vmul.f32 %v1532, %v1686
      %v1821 = vmul.f32 %v1533, %v1691
      %v1822 = vmul.f32 %v1534, %v1691
      %v1823 = vmul.f32 %v1535, %v1696
      %v1824 = vmul.f32 %v1536, %v1696
      %v1825 = vmul.f32 %v1537, %v1701
      %v1826 = vmul.f32 %v1538, %v1701
      %v1827 = vmul.f32 %v1539, %v1706
      %v1828 = vmul.f32 %v1540, %v1706
      %v1829 = vmul.f32 %v1541, %v1711
      %v1830 = vmul.f32 %v1542, %v1711
      %v1831 = vmul.f32 %v1543, %v1716
      %v1832 = vmul.f32 %v1544, %v1716
      %v1833 = vmul.f32 %v1545, %v1721
      %v1834 = vmul.f32 %v1546, %v1721
      %v1835 = vmul.f32 %v1547, %v1726
      %v1836 = vmul.f32 %v1548, %v1726
      %v1837 = vmul.f32 %v1549, %v1731
      %v1838 = vmul.f32 %v1550, %v1731
      %v1839 = vmul.f32 %v1551, %v1736
      %v1840 = vmul.f32 %v1552, %v1736
      %v1841 = vmul.f32 %v1553, %v1741
      %v1842 = vmul.f32 %v1554, %v1741
      %v1843 = vmul.f32 %v1555, %v1746
      %v1844 = vmul.f32 %v1556, %v1746
      %v1845 = vmul.f32 %v1557, %v1751
      %v1846 = vmul.f32 %v1558, %v1751
      %v1847 = vmul.f32 %v1559, %v1756
      %v1848 = vmul.f32 %v1560, %v1756
      %v1849 = vmul.f32 %v1561, %v1761
      %v1850 = vmul.f32 %v1562, %v1761
      %v1851 = vmul.f32 %v1563, %v1766
      %v1852 = vmul.f32 %v1564, %v1766
      %v1853 = vmul.f32 %v1565, %v1771
      %v1854 = vmul.f32 %v1566, %v1771
      %v1855 = vmul.f32 %v1567, %v1776
      %v1856 = vmul.f32 %v1568, %v1776
      %v1857 = vmul.f32 %v1569, %v1781
      %v1858 = vmul.f32 %v1570, %v1781
      %v1859 = vmul.f32 %v1571, %v1786
      %v1860 = vmul.f32 %v1572, %v1786
      %v1861 = vmul.f32 %v1573, %v1791
      %v1862 = vmul.f32 %v1574, %v1791
      %v1863 = vmul.f32 %v1575, %v1796
      %v1864 = vmul.f32 %v1576, %v1796
      %v1865 = vmul.f32 %v1577, %v1801
      %v1866 = vmul.f32 %v1578, %v1801
      %v1868 = vlaneseq
      %v1869 = vshrl.u32 %v1868, 7
      %v1870 = vsub.s32 0, %v1869
      %v1871 = vrot.slane %v1096, %v1870
      %v1872 = vlaneseq
      %v1873 = vshrl.u32 %v1872, 7
      %v1874 = vsub.s32 1, %v1873
      %v1875 = vrot.slane %v1096, %v1874
      %v1878 = vmul.f32 %v1803, %v1871
      %v1879 = vmul.f32 %v1804, %v1875
      %v1880 = vmul.f32 %v1805, %v1871
      %v1881 = vmul.f32 %v1806, %v1875
      %v1882 = vmul.f32 %v1807, %v1871
      %v1883 = vmul.f32 %v1808, %v1875
      %v1884 = vmul.f32 %v1809, %v1871
      %v1885 = vmul.f32 %v1810, %v1875
      %v1886 = vmul.f32 %v1811, %v1871
      %v1887 = vmul.f32 %v1812, %v1875
      %v1888 = vmul.f32 %v1813, %v1871
      %v1889 = vmul.f32 %v1814, %v1875
      %v1890 = vmul.f32 %v1815, %v1871
      %v1891 = vmul.f32 %v1816, %v1875
      %v1892 = vmul.f32 %v1817, %v1871
      %v1893 = vmul.f32 %v1818, %v1875
      %v1894 = vmul.f32 %v1819, %v1871
      %v1895 = vmul.f32 %v1820, %v1875
      %v1896 = vmul.f32 %v1821, %v1871
      %v1897 = vmul.f32 %v1822, %v1875
      %v1898 = vmul.f32 %v1823, %v1871
      %v1899 = vmul.f32 %v1824, %v1875
      %v1900 = vmul.f32 %v1825, %v1871
      %v1901 = vmul.f32 %v1826, %v1875
      %v1902 = vmul.f32 %v1827, %v1871
      %v1903 = vmul.f32 %v1828, %v1875
      %v1904 = vmul.f32 %v1829, %v1871
      %v1905 = vmul.f32 %v1830, %v1875
      %v1906 = vmul.f32 %v1831, %v1871
      %v1907 = vmul.f32 %v1832, %v1875
      %v1908 = vmul.f32 %v1833, %v1871
      %v1909 = vmul.f32 %v1834, %v1875
      %v1910 = vmul.f32 %v1835, %v1871
      %v1911 = vmul.f32 %v1836, %v1875
      %v1912 = vmul.f32 %v1837, %v1871
      %v1913 = vmul.f32 %v1838, %v1875
      %v1914 = vmul.f32 %v1839, %v1871
      %v1915 = vmul.f32 %v1840, %v1875
      %v1916 = vmul.f32 %v1841, %v1871
      %v1917 = vmul.f32 %v1842, %v1875
      %v1918 = vmul.f32 %v1843, %v1871
      %v1919 = vmul.f32 %v1844, %v1875
      %v1920 = vmul.f32 %v1845, %v1871
      %v1921 = vmul.f32 %v1846, %v1875
      %v1922 = vmul.f32 %v1847, %v1871
      %v1923 = vmul.f32 %v1848, %v1875
      %v1924 = vmul.f32 %v1849, %v1871
      %v1925 = vmul.f32 %v1850, %v1875
      %v1926 = vmul.f32 %v1851, %v1871
      %v1927 = vmul.f32 %v1852, %v1875
      %v1928 = vmul.f32 %v1853, %v1871
      %v1929 = vmul.f32 %v1854, %v1875
      %v1930 = vmul.f32 %v1855, %v1871
      %v1931 = vmul.f32 %v1856, %v1875
      %v1932 = vmul.f32 %v1857, %v1871
      %v1933 = vmul.f32 %v1858, %v1875
      %v1934 = vmul.f32 %v1859, %v1871
      %v1935 = vmul.f32 %v1860, %v1875
      %v1936 = vmul.f32 %v1861, %v1871
      %v1937 = vmul.f32 %v1862, %v1875
      %v1938 = vmul.f32 %v1863, %v1871
      %v1939 = vmul.f32 %v1864, %v1875
      %v1940 = vmul.f32 %v1865, %v1871
      %v1941 = vmul.f32 %v1866, %v1875
      %v1943 = vlaneseq
      %v1944 = vshrl.u32 %v1943, 7
      %v1945 = vsub.s32 0, %v1944
      %v1946 = vrot.slane %v1097, %v1945
      %v1947 = vlaneseq
      %v1948 = vshrl.u32 %v1947, 7
      %v1949 = vsub.s32 1, %v1948
      %v1950 = vrot.slane %v1097, %v1949
      %v1953 = vadd.f32 %v1878, %v1946
      %v1954 = vadd.f32 %v1879, %v1950
      %v1955 = vadd.f32 %v1880, %v1946
      %v1956 = vadd.f32 %v1881, %v1950
      %v1957 = vadd.f32 %v1882, %v1946
      %v1958 = vadd.f32 %v1883, %v1950
      %v1959 = vadd.f32 %v1884, %v1946
      %v1960 = vadd.f32 %v1885, %v1950
      %v1961 = vadd.f32 %v1886, %v1946
      %v1962 = vadd.f32 %v1887, %v1950
      %v1963 = vadd.f32 %v1888, %v1946
      %v1964 = vadd.f32 %v1889, %v1950
      %v1965 = vadd.f32 %v1890, %v1946
      %v1966 = vadd.f32 %v1891, %v1950
      %v1967 = vadd.f32 %v1892, %v1946
      %v1968 = vadd.f32 %v1893, %v1950
      %v1969 = vadd.f32 %v1894, %v1946
      %v1970 = vadd.f32 %v1895, %v1950
      %v1971 = vadd.f32 %v1896, %v1946
      %v1972 = vadd.f32 %v1897, %v1950
      %v1973 = vadd.f32 %v1898, %v1946
      %v1974 = vadd.f32 %v1899, %v1950
      %v1975 = vadd.f32 %v1900, %v1946
      %v1976 = vadd.f32 %v1901, %v1950
      %v1977 = vadd.f32 %v1902, %v1946
      %v1978 = vadd.f32 %v1903, %v1950
      %v1979 = vadd.f32 %v1904, %v1946
      %v1980 = vadd.f32 %v1905, %v1950
      %v1981 = vadd.f32 %v1906, %v1946
      %v1982 = vadd.f32 %v1907, %v1950
      %v1983 = vadd.f32 %v1908, %v1946
      %v1984 = vadd.f32 %v1909, %v1950
      %v1985 = vadd.f32 %v1910, %v1946
      %v1986 = vadd.f32 %v1911, %v1950
      %v1987 = vadd.f32 %v1912, %v1946
      %v1988 = vadd.f32 %v1913, %v1950
      %v1989 = vadd.f32 %v1914, %v1946
      %v1990 = vadd.f32 %v1915, %v1950
      %v1991 = vadd.f32 %v1916, %v1946
      %v1992 = vadd.f32 %v1917, %v1950
      %v1993 = vadd.f32 %v1918, %v1946
      %v1994 = vadd.f32 %v1919, %v1950
      %v1995 = vadd.f32 %v1920, %v1946
      %v1996 = vadd.f32 %v1921, %v1950
      %v1997 = vadd.f32 %v1922, %v1946
      %v1998 = vadd.f32 %v1923, %v1950
      %v1999 = vadd.f32 %v1924, %v1946
      %v2000 = vadd.f32 %v1925, %v1950
      %v2001 = vadd.f32 %v1926, %v1946
      %v2002 = vadd.f32 %v1927, %v1950
      %v2003 = vadd.f32 %v1928, %v1946
      %v2004 = vadd.f32 %v1929, %v1950
      %v2005 = vadd.f32 %v1930, %v1946
      %v2006 = vadd.f32 %v1931, %v1950
      %v2007 = vadd.f32 %v1932, %v1946
      %v2008 = vadd.f32 %v1933, %v1950
      %v2009 = vadd.f32 %v1934, %v1946
      %v2010 = vadd.f32 %v1935, %v1950
      %v2011 = vadd.f32 %v1936, %v1946
      %v2012 = vadd.f32 %v1937, %v1950
      %v2013 = vadd.f32 %v1938, %v1946
      %v2014 = vadd.f32 %v1939, %v1950
      %v2015 = vadd.f32 %v1940, %v1946
      %v2016 = vadd.f32 %v1941, %v1950
      %v2017 = vmax.f32 %v1953, 0.0
      %v2018 = vmax.f32 %v1954, 0.0
      %v2019 = vmax.f32 %v1955, 0.0
      %v2020 = vmax.f32 %v1956, 0.0
      %v2021 = vmax.f32 %v1957, 0.0
      %v2022 = vmax.f32 %v1958, 0.0
      %v2023 = vmax.f32 %v1959, 0.0
      %v2024 = vmax.f32 %v1960, 0.0
      %v2025 = vmax.f32 %v1961, 0.0
      %v2026 = vmax.f32 %v1962, 0.0
      %v2027 = vmax.f32 %v1963, 0.0
      %v2028 = vmax.f32 %v1964, 0.0
      %v2029 = vmax.f32 %v1965, 0.0
      %v2030 = vmax.f32 %v1966, 0.0
      %v2031 = vmax.f32 %v1967, 0.0
      %v2032 = vmax.f32 %v1968, 0.0
      %v2033 = vmax.f32 %v1969, 0.0
      %v2034 = vmax.f32 %v1970, 0.0
      %v2035 = vmax.f32 %v1971, 0.0
      %v2036 = vmax.f32 %v1972, 0.0
      %v2037 = vmax.f32 %v1973, 0.0
      %v2038 = vmax.f32 %v1974, 0.0
      %v2039 = vmax.f32 %v1975, 0.0
      %v2040 = vmax.f32 %v1976, 0.0
      %v2041 = vmax.f32 %v1977, 0.0
      %v2042 = vmax.f32 %v1978, 0.0
      %v2043 = vmax.f32 %v1979, 0.0
      %v2044 = vmax.f32 %v1980, 0.0
      %v2045 = vmax.f32 %v1981, 0.0
      %v2046 = vmax.f32 %v1982, 0.0
      %v2047 = vmax.f32 %v1983, 0.0
      %v2048 = vmax.f32 %v1984, 0.0
      %v2049 = vmax.f32 %v1985, 0.0
      %v2050 = vmax.f32 %v1986, 0.0
      %v2051 = vmax.f32 %v1987, 0.0
      %v2052 = vmax.f32 %v1988, 0.0
      %v2053 = vmax.f32 %v1989, 0.0
      %v2054 = vmax.f32 %v1990, 0.0
      %v2055 = vmax.f32 %v1991, 0.0
      %v2056 = vmax.f32 %v1992, 0.0
      %v2057 = vmax.f32 %v1993, 0.0
      %v2058 = vmax.f32 %v1994, 0.0
      %v2059 = vmax.f32 %v1995, 0.0
      %v2060 = vmax.f32 %v1996, 0.0
      %v2061 = vmax.f32 %v1997, 0.0
      %v2062 = vmax.f32 %v1998, 0.0
      %v2063 = vmax.f32 %v1999, 0.0
      %v2064 = vmax.f32 %v2000, 0.0
      %v2065 = vmax.f32 %v2001, 0.0
      %v2066 = vmax.f32 %v2002, 0.0
      %v2067 = vmax.f32 %v2003, 0.0
      %v2068 = vmax.f32 %v2004, 0.0
      %v2069 = vmax.f32 %v2005, 0.0
      %v2070 = vmax.f32 %v2006, 0.0
      %v2071 = vmax.f32 %v2007, 0.0
      %v2072 = vmax.f32 %v2008, 0.0
      %v2073 = vmax.f32 %v2009, 0.0
      %v2074 = vmax.f32 %v2010, 0.0
      %v2075 = vmax.f32 %v2011, 0.0
      %v2076 = vmax.f32 %v2012, 0.0
      %v2077 = vmax.f32 %v2013, 0.0
      %v2078 = vmax.f32 %v2014, 0.0
      %v2079 = vmax.f32 %v2015, 0.0
      %v2080 = vmax.f32 %v2016, 0.0
      %v2081 = vpack.c.bf16 %v2019, %v2017
      %v2082 = vpack.c.bf16 %v2020, %v2018
      %v2083 = vpack.c.bf16 %v2023, %v2021
      %v2084 = vpack.c.bf16 %v2024, %v2022
      %v2085 = vpack.c.bf16 %v2027, %v2025
      %v2086 = vpack.c.bf16 %v2028, %v2026
      %v2087 = vpack.c.bf16 %v2031, %v2029
      %v2088 = vpack.c.bf16 %v2032, %v2030
      %v2089 = vpack.c.bf16 %v2035, %v2033
      %v2090 = vpack.c.bf16 %v2036, %v2034
      %v2091 = vpack.c.bf16 %v2039, %v2037
      %v2092 = vpack.c.bf16 %v2040, %v2038
      %v2093 = vpack.c.bf16 %v2043, %v2041
      %v2094 = vpack.c.bf16 %v2044, %v2042
      %v2095 = vpack.c.bf16 %v2047, %v2045
      %v2096 = vpack.c.bf16 %v2048, %v2046
      %v2097 = vpack.c.bf16 %v2051, %v2049
      %v2098 = vpack.c.bf16 %v2052, %v2050
      %v2099 = vpack.c.bf16 %v2055, %v2053
      %v2100 = vpack.c.bf16 %v2056, %v2054
      %v2101 = vpack.c.bf16 %v2059, %v2057
      %v2102 = vpack.c.bf16 %v2060, %v2058
      %v2103 = vpack.c.bf16 %v2063, %v2061
      %v2104 = vpack.c.bf16 %v2064, %v2062
      %v2105 = vpack.c.bf16 %v2067, %v2065
      %v2106 = vpack.c.bf16 %v2068, %v2066
      %v2107 = vpack.c.bf16 %v2071, %v2069
      %v2108 = vpack.c.bf16 %v2072, %v2070
      %v2109 = vpack.c.bf16 %v2075, %v2073
      %v2110 = vpack.c.bf16 %v2076, %v2074
      %v2111 = vpack.c.bf16 %v2079, %v2077
      %v2112 = vpack.c.bf16 %v2080, %v2078
      %v2113 = vld [vmem:[%s5] sm:$0xff]
      %v2114 = vld [vmem:[%s5 + $0x8] sm:$0xff]
      %v2115 = vld [vmem:[%s5 + $0x10] sm:$0xff]
      %v2116 = vld [vmem:[%s5 + $0x18] sm:$0xff]
      %v2117 = vld [vmem:[%s5 + $0x20] sm:$0xff]
      %v2118 = vld [vmem:[%s5 + $0x28] sm:$0xff]
      %v2119 = vld [vmem:[%s5 + $0x30] sm:$0xff]
      %v2120 = vld [vmem:[%s5 + $0x38] sm:$0xff]
      %v2121 = vld [vmem:[%s5 + $0x40] sm:$0xff]
      %v2122 = vld [vmem:[%s5 + $0x48] sm:$0xff]
      %v2123 = vld [vmem:[%s5 + $0x50] sm:$0xff]
      %v2124 = vld [vmem:[%s5 + $0x58] sm:$0xff]
      %v2125 = vld [vmem:[%s5 + $0x60] sm:$0xff]
      %v2126 = vld [vmem:[%s5 + $0x68] sm:$0xff]
      %v2127 = vld [vmem:[%s5 + $0x70] sm:$0xff]
      %v2128 = vld [vmem:[%s5 + $0x78] sm:$0xff]
      %v2129 = vld [vmem:[%s5 + $0x80] sm:$0xff]
      %v2130 = vld [vmem:[%s5 + $0x88] sm:$0xff]
      %v2131 = vld [vmem:[%s5 + $0x90] sm:$0xff]
      %v2132 = vld [vmem:[%s5 + $0x98] sm:$0xff]
      %v2133 = vld [vmem:[%s5 + $0xa0] sm:$0xff]
      %v2134 = vld [vmem:[%s5 + $0xa8] sm:$0xff]
      %v2135 = vld [vmem:[%s5 + $0xb0] sm:$0xff]
      %v2136 = vld [vmem:[%s5 + $0xb8] sm:$0xff]
      %v2137 = vld [vmem:[%s5 + $0xc0] sm:$0xff]
      %v2138 = vld [vmem:[%s5 + $0xc8] sm:$0xff]
      %v2139 = vld [vmem:[%s5 + $0xd0] sm:$0xff]
      %v2140 = vld [vmem:[%s5 + $0xd8] sm:$0xff]
      %v2141 = vld [vmem:[%s5 + $0xe0] sm:$0xff]
      %v2142 = vld [vmem:[%s5 + $0xe8] sm:$0xff]
      %v2143 = vld [vmem:[%s5 + $0xf0] sm:$0xff]
      %v2144 = vld [vmem:[%s5 + $0xf8] sm:$0xff]
      %v2145 = vld [vmem:[%s6] sm:$0x3]
      %v2147 = vlaneseq
      %v2148 = vshrl.u32 %v2147, 7
      %v2149 = vsub.s32 0, %v2148
      %v2150 = vrot.slane %v2145, %v2149
      %v2151 = vlaneseq
      %v2152 = vshrl.u32 %v2151, 7
      %v2153 = vsub.s32 1, %v2152
      %v2154 = vrot.slane %v2145, %v2153
      %v2189 = vunpack.c.l.b16 %v2113
      %v2190 = vunpack.c.h.b16 %v2113
      %v2191 = vunpack.c.l.b16 %v2114
      %v2192 = vunpack.c.h.b16 %v2114
      %v2193 = vunpack.c.l.b16 %v2115
      %v2194 = vunpack.c.h.b16 %v2115
      %v2195 = vunpack.c.l.b16 %v2116
      %v2196 = vunpack.c.h.b16 %v2116
      %v2197 = vunpack.c.l.b16 %v2117
      %v2198 = vunpack.c.h.b16 %v2117
      %v2199 = vunpack.c.l.b16 %v2118
      %v2200 = vunpack.c.h.b16 %v2118
      %v2201 = vunpack.c.l.b16 %v2119
      %v2202 = vunpack.c.h.b16 %v2119
      %v2203 = vunpack.c.l.b16 %v2120
      %v2204 = vunpack.c.h.b16 %v2120
      %v2205 = vunpack.c.l.b16 %v2121
      %v2206 = vunpack.c.h.b16 %v2121
      %v2207 = vunpack.c.l.b16 %v2122
      %v2208 = vunpack.c.h.b16 %v2122
      %v2209 = vunpack.c.l.b16 %v2123
      %v2210 = vunpack.c.h.b16 %v2123
      %v2211 = vunpack.c.l.b16 %v2124
      %v2212 = vunpack.c.h.b16 %v2124
      %v2213 = vunpack.c.l.b16 %v2125
      %v2214 = vunpack.c.h.b16 %v2125
      %v2215 = vunpack.c.l.b16 %v2126
      %v2216 = vunpack.c.h.b16 %v2126
      %v2217 = vunpack.c.l.b16 %v2127
      %v2218 = vunpack.c.h.b16 %v2127
      %v2219 = vunpack.c.l.b16 %v2128
      %v2220 = vunpack.c.h.b16 %v2128
      %v2221 = vunpack.c.l.b16 %v2129
      %v2222 = vunpack.c.h.b16 %v2129
      %v2223 = vunpack.c.l.b16 %v2130
      %v2224 = vunpack.c.h.b16 %v2130
      %v2225 = vunpack.c.l.b16 %v2131
      %v2226 = vunpack.c.h.b16 %v2131
      %v2227 = vunpack.c.l.b16 %v2132
      %v2228 = vunpack.c.h.b16 %v2132
      %v2229 = vunpack.c.l.b16 %v2133
      %v2230 = vunpack.c.h.b16 %v2133
      %v2231 = vunpack.c.l.b16 %v2134
      %v2232 = vunpack.c.h.b16 %v2134
      %v2233 = vunpack.c.l.b16 %v2135
      %v2234 = vunpack.c.h.b16 %v2135
      %v2235 = vunpack.c.l.b16 %v2136
      %v2236 = vunpack.c.h.b16 %v2136
      %v2237 = vunpack.c.l.b16 %v2137
      %v2238 = vunpack.c.h.b16 %v2137
      %v2239 = vunpack.c.l.b16 %v2138
      %v2240 = vunpack.c.h.b16 %v2138
      %v2241 = vunpack.c.l.b16 %v2139
      %v2242 = vunpack.c.h.b16 %v2139
      %v2243 = vunpack.c.l.b16 %v2140
      %v2244 = vunpack.c.h.b16 %v2140
      %v2245 = vunpack.c.l.b16 %v2141
      %v2246 = vunpack.c.h.b16 %v2141
      %v2247 = vunpack.c.l.b16 %v2142
      %v2248 = vunpack.c.h.b16 %v2142
      %v2249 = vunpack.c.l.b16 %v2143
      %v2250 = vunpack.c.h.b16 %v2143
      %v2251 = vunpack.c.l.b16 %v2144
      %v2252 = vunpack.c.h.b16 %v2144
      %v2253 = vpack.c.b16 %v2191, %v2189
      %v2254 = vpack.c.b16 %v2192, %v2190
      %v2255 = vpack.c.b16 %v2195, %v2193
      %v2256 = vpack.c.b16 %v2196, %v2194
      %v2257 = vpack.c.b16 %v2199, %v2197
      %v2258 = vpack.c.b16 %v2200, %v2198
      %v2259 = vpack.c.b16 %v2203, %v2201
      %v2260 = vpack.c.b16 %v2204, %v2202
      %v2261 = vpack.c.b16 %v2207, %v2205
      %v2262 = vpack.c.b16 %v2208, %v2206
      %v2263 = vpack.c.b16 %v2211, %v2209
      %v2264 = vpack.c.b16 %v2212, %v2210
      %v2265 = vpack.c.b16 %v2215, %v2213
      %v2266 = vpack.c.b16 %v2216, %v2214
      %v2267 = vpack.c.b16 %v2219, %v2217
      %v2268 = vpack.c.b16 %v2220, %v2218
      %v2269 = vpack.c.b16 %v2223, %v2221
      %v2270 = vpack.c.b16 %v2224, %v2222
      %v2271 = vpack.c.b16 %v2227, %v2225
      %v2272 = vpack.c.b16 %v2228, %v2226
      %v2273 = vpack.c.b16 %v2231, %v2229
      %v2274 = vpack.c.b16 %v2232, %v2230
      %v2275 = vpack.c.b16 %v2235, %v2233
      %v2276 = vpack.c.b16 %v2236, %v2234
      %v2277 = vpack.c.b16 %v2239, %v2237
      %v2278 = vpack.c.b16 %v2240, %v2238
      %v2279 = vpack.c.b16 %v2243, %v2241
      %v2280 = vpack.c.b16 %v2244, %v2242
      %v2281 = vpack.c.b16 %v2247, %v2245
      %v2282 = vpack.c.b16 %v2248, %v2246
      %v2283 = vpack.c.b16 %v2251, %v2249
      %v2284 = vpack.c.b16 %v2252, %v2250
      %2317 = vmatprep.subr.bf16.mxu0 %v2268
      %2318 = vmatpush1.bf16.msra.mxu0 %v2267
      %2319 = vmatprep.subr.bf16.mxu0 %v2266
      %2320 = vmatpush1.bf16.msra.mxu0 %v2265
      %2321 = vmatprep.subr.bf16.mxu0 %v2264
      %2322 = vmatpush1.bf16.msra.mxu0 %v2263
      %2323 = vmatprep.subr.bf16.mxu0 %v2262
      %2324 = vmatpush1.bf16.msra.mxu0 %v2261
      %2325 = vmatprep.subr.bf16.mxu0 %v2260
      %2326 = vmatpush1.bf16.msra.mxu0 %v2259
      %2327 = vmatprep.subr.bf16.mxu0 %v2258
      %2328 = vmatpush1.bf16.msra.mxu0 %v2257
      %2329 = vmatprep.subr.bf16.mxu0 %v2256
      %2330 = vmatpush1.bf16.msra.mxu0 %v2255
      %2331 = vmatprep.subr.bf16.mxu0 %v2254
      %2332 = vmatpush1.bf16.msra.mxu0 %v2253
      %2333 = vmatprep.subr.bf16.mxu0 %v2284
      %2334 = vmatpush2.bf16.msra.mxu0 %v2283
      %2335 = vmatprep.subr.bf16.mxu0 %v2282
      %2336 = vmatpush2.bf16.msra.mxu0 %v2281
      %2337 = vmatprep.subr.bf16.mxu0 %v2280
      %2338 = vmatpush2.bf16.msra.mxu0 %v2279
      %2339 = vmatprep.subr.bf16.mxu0 %v2278
      %2340 = vmatpush2.bf16.msra.mxu0 %v2277
      %2341 = vmatprep.subr.bf16.mxu0 %v2276
      %2342 = vmatpush2.bf16.msra.mxu0 %v2275
      %2343 = vmatprep.subr.bf16.mxu0 %v2274
      %2344 = vmatpush2.bf16.msra.mxu0 %v2273
      %2345 = vmatprep.subr.bf16.mxu0 %v2272
      %2346 = vmatpush2.bf16.msra.mxu0 %v2271
      %2347 = vmatprep.subr.bf16.mxu0 %v2270
      %2348 = vmatpush2.bf16.msra.mxu0 %v2269
      %2349 = vmatprep.mubr.bf16.mxu0 %v2082
      %2350 = vmatmul.mubr.bf16.gmra.mxu0 %v2081
      %v2351 = vpop.f32.mrf.mxu0
      %v2352 = vadd.f32 %v2150, %v2351
      %v2353 = vpop.f32.mrf.mxu0
      %v2354 = vadd.f32 %v2154, %v2353
      %v2355 = vpop.f32.mrf.mxu0
      %v2356 = vadd.f32 %v2150, %v2355
      %v2357 = vpop.f32.mrf.mxu0
      %v2358 = vadd.f32 %v2154, %v2357
      %2359 = vmatprep.mubr.bf16.mxu0 %v2084
      %2360 = vmatmul.mubr.bf16.gmra.mxu0 %v2083
      %v2361 = vpop.f32.mrf.mxu0
      %v2362 = vadd.f32 %v2150, %v2361
      %v2363 = vpop.f32.mrf.mxu0
      %v2364 = vadd.f32 %v2154, %v2363
      %v2365 = vpop.f32.mrf.mxu0
      %v2366 = vadd.f32 %v2150, %v2365
      %v2367 = vpop.f32.mrf.mxu0
      %v2368 = vadd.f32 %v2154, %v2367
      %2369 = vmatprep.mubr.bf16.mxu0 %v2086
      %2370 = vmatmul.mubr.bf16.gmra.mxu0 %v2085
      %v2371 = vpop.f32.mrf.mxu0
      %v2372 = vadd.f32 %v2150, %v2371
      %v2373 = vpop.f32.mrf.mxu0
      %v2374 = vadd.f32 %v2154, %v2373
      %v2375 = vpop.f32.mrf.mxu0
      %v2376 = vadd.f32 %v2150, %v2375
      %v2377 = vpop.f32.mrf.mxu0
      %v2378 = vadd.f32 %v2154, %v2377
      %2379 = vmatprep.mubr.bf16.mxu0 %v2088
      %2380 = vmatmul.mubr.bf16.gmra.mxu0 %v2087
      %v2381 = vpop.f32.mrf.mxu0
      %v2382 = vadd.f32 %v2150, %v2381
      %v2383 = vpop.f32.mrf.mxu0
      %v2384 = vadd.f32 %v2154, %v2383
      %v2385 = vpop.f32.mrf.mxu0
      %v2386 = vadd.f32 %v2150, %v2385
      %v2387 = vpop.f32.mrf.mxu0
      %v2388 = vadd.f32 %v2154, %v2387
      %2389 = vmatprep.mubr.bf16.mxu0 %v2090
      %2390 = vmatmul.mubr.bf16.gmra.mxu0 %v2089
      %v2391 = vpop.f32.mrf.mxu0
      %v2392 = vadd.f32 %v2150, %v2391
      %v2393 = vpop.f32.mrf.mxu0
      %v2394 = vadd.f32 %v2154, %v2393
      %v2395 = vpop.f32.mrf.mxu0
      %v2396 = vadd.f32 %v2150, %v2395
      %v2397 = vpop.f32.mrf.mxu0
      %v2398 = vadd.f32 %v2154, %v2397
      %2399 = vmatprep.mubr.bf16.mxu0 %v2092
      %2400 = vmatmul.mubr.bf16.gmra.mxu0 %v2091
      %v2401 = vpop.f32.mrf.mxu0
      %v2402 = vadd.f32 %v2150, %v2401
      %v2403 = vpop.f32.mrf.mxu0
      %v2404 = vadd.f32 %v2154, %v2403
      %v2405 = vpop.f32.mrf.mxu0
      %v2406 = vadd.f32 %v2150, %v2405
      %v2407 = vpop.f32.mrf.mxu0
      %v2408 = vadd.f32 %v2154, %v2407
      %2409 = vmatprep.mubr.bf16.mxu0 %v2094
      %2410 = vmatmul.mubr.bf16.gmra.mxu0 %v2093
      %v2411 = vpop.f32.mrf.mxu0
      %v2412 = vadd.f32 %v2150, %v2411
      %v2413 = vpop.f32.mrf.mxu0
      %v2414 = vadd.f32 %v2154, %v2413
      %v2415 = vpop.f32.mrf.mxu0
      %v2416 = vadd.f32 %v2150, %v2415
      %v2417 = vpop.f32.mrf.mxu0
      %v2418 = vadd.f32 %v2154, %v2417
      %2419 = vmatprep.mubr.bf16.mxu0 %v2096
      %2420 = vmatmul.mubr.bf16.gmra.mxu0 %v2095
      %v2421 = vpop.f32.mrf.mxu0
      %v2422 = vadd.f32 %v2150, %v2421
      %v2423 = vpop.f32.mrf.mxu0
      %v2424 = vadd.f32 %v2154, %v2423
      %v2425 = vpop.f32.mrf.mxu0
      %v2426 = vadd.f32 %v2150, %v2425
      %v2427 = vpop.f32.mrf.mxu0
      %v2428 = vadd.f32 %v2154, %v2427
      %2429 = vmatprep.mubr.bf16.mxu0 %v2098
      %2430 = vmatmul.mubr.bf16.gmra.mxu0 %v2097
      %v2431 = vpop.f32.mrf.mxu0
      %v2432 = vadd.f32 %v2150, %v2431
      %v2433 = vpop.f32.mrf.mxu0
      %v2434 = vadd.f32 %v2154, %v2433
      %v2435 = vpop.f32.mrf.mxu0
      %v2436 = vadd.f32 %v2150, %v2435
      %v2437 = vpop.f32.mrf.mxu0
      %v2438 = vadd.f32 %v2154, %v2437
      %2439 = vmatprep.mubr.bf16.mxu0 %v2100
      %2440 = vmatmul.mubr.bf16.gmra.mxu0 %v2099
      %v2441 = vpop.f32.mrf.mxu0
      %v2442 = vadd.f32 %v2150, %v2441
      %v2443 = vpop.f32.mrf.mxu0
      %v2444 = vadd.f32 %v2154, %v2443
      %v2445 = vpop.f32.mrf.mxu0
      %v2446 = vadd.f32 %v2150, %v2445
      %v2447 = vpop.f32.mrf.mxu0
      %v2448 = vadd.f32 %v2154, %v2447
      %2449 = vmatprep.mubr.bf16.mxu0 %v2102
      %2450 = vmatmul.mubr.bf16.gmra.mxu0 %v2101
      %v2451 = vpop.f32.mrf.mxu0
      %v2452 = vadd.f32 %v2150, %v2451
      %v2453 = vpop.f32.mrf.mxu0
      %v2454 = vadd.f32 %v2154, %v2453
      %v2455 = vpop.f32.mrf.mxu0
      %v2456 = vadd.f32 %v2150, %v2455
      %v2457 = vpop.f32.mrf.mxu0
      %v2458 = vadd.f32 %v2154, %v2457
      %2459 = vmatprep.mubr.bf16.mxu0 %v2104
      %2460 = vmatmul.mubr.bf16.gmra.mxu0 %v2103
      %v2461 = vpop.f32.mrf.mxu0
      %v2462 = vadd.f32 %v2150, %v2461
      %v2463 = vpop.f32.mrf.mxu0
      %v2464 = vadd.f32 %v2154, %v2463
      %v2465 = vpop.f32.mrf.mxu0
      %v2466 = vadd.f32 %v2150, %v2465
      %v2467 = vpop.f32.mrf.mxu0
      %v2468 = vadd.f32 %v2154, %v2467
      %2469 = vmatprep.mubr.bf16.mxu0 %v2106
      %2470 = vmatmul.mubr.bf16.gmra.mxu0 %v2105
      %v2471 = vpop.f32.mrf.mxu0
      %v2472 = vadd.f32 %v2150, %v2471
      %v2473 = vpop.f32.mrf.mxu0
      %v2474 = vadd.f32 %v2154, %v2473
      %v2475 = vpop.f32.mrf.mxu0
      %v2476 = vadd.f32 %v2150, %v2475
      %v2477 = vpop.f32.mrf.mxu0
      %v2478 = vadd.f32 %v2154, %v2477
      %2479 = vmatprep.mubr.bf16.mxu0 %v2108
      %2480 = vmatmul.mubr.bf16.gmra.mxu0 %v2107
      %v2481 = vpop.f32.mrf.mxu0
      %v2482 = vadd.f32 %v2150, %v2481
      %v2483 = vpop.f32.mrf.mxu0
      %v2484 = vadd.f32 %v2154, %v2483
      %v2485 = vpop.f32.mrf.mxu0
      %v2486 = vadd.f32 %v2150, %v2485
      %v2487 = vpop.f32.mrf.mxu0
      %v2488 = vadd.f32 %v2154, %v2487
      %2489 = vmatprep.mubr.bf16.mxu0 %v2110
      %2490 = vmatmul.mubr.bf16.gmra.mxu0 %v2109
      %v2491 = vpop.f32.mrf.mxu0
      %v2492 = vadd.f32 %v2150, %v2491
      %v2493 = vpop.f32.mrf.mxu0
      %v2494 = vadd.f32 %v2154, %v2493
      %v2495 = vpop.f32.mrf.mxu0
      %v2496 = vadd.f32 %v2150, %v2495
      %v2497 = vpop.f32.mrf.mxu0
      %v2498 = vadd.f32 %v2154, %v2497
      %2499 = vmatprep.mubr.bf16.mxu0 %v2112
      %2500 = vmatmul.mubr.bf16.gmra.mxu0 %v2111
      %v2501 = vpop.f32.mrf.mxu0
      %v2502 = vadd.f32 %v2150, %v2501
      %v2503 = vpop.f32.mrf.mxu0
      %v2504 = vadd.f32 %v2154, %v2503
      %v2505 = vpop.f32.mrf.mxu0
      %v2506 = vadd.f32 %v2150, %v2505
      %v2507 = vpop.f32.mrf.mxu0
      %v2508 = vadd.f32 %v2154, %v2507
      %2509 = vdwg.mxu0
      %v2510 = vadd.f32 %v2352, %v2354
      %2511 = vadd.xlane.f32.xlu0 %v2510
      %v2512 = vpop.xlane.xlu0 %2511
      %v2513 = vadd.f32 %v2356, %v2358
      %2514 = vadd.xlane.f32.xlu0 %v2513
      %v2515 = vpop.xlane.xlu0 %2514
      %v2516 = vadd.f32 %v2362, %v2364
      %2517 = vadd.xlane.f32.xlu0 %v2516
      %v2518 = vpop.xlane.xlu0 %2517
      %v2519 = vadd.f32 %v2366, %v2368
      %2520 = vadd.xlane.f32.xlu0 %v2519
      %v2521 = vpop.xlane.xlu0 %2520
      %v2522 = vadd.f32 %v2372, %v2374
      %2523 = vadd.xlane.f32.xlu0 %v2522
      %v2524 = vpop.xlane.xlu0 %2523
      %v2525 = vadd.f32 %v2376, %v2378
      %2526 = vadd.xlane.f32.xlu0 %v2525
      %v2527 = vpop.xlane.xlu0 %2526
      %v2528 = vadd.f32 %v2382, %v2384
      %2529 = vadd.xlane.f32.xlu0 %v2528
      %v2530 = vpop.xlane.xlu0 %2529
      %v2531 = vadd.f32 %v2386, %v2388
      %2532 = vadd.xlane.f32.xlu0 %v2531
      %v2533 = vpop.xlane.xlu0 %2532
      %v2534 = vadd.f32 %v2392, %v2394
      %2535 = vadd.xlane.f32.xlu0 %v2534
      %v2536 = vpop.xlane.xlu0 %2535
      %v2537 = vadd.f32 %v2396, %v2398
      %2538 = vadd.xlane.f32.xlu0 %v2537
      %v2539 = vpop.xlane.xlu0 %2538
      %v2540 = vadd.f32 %v2402, %v2404
      %2541 = vadd.xlane.f32.xlu0 %v2540
      %v2542 = vpop.xlane.xlu0 %2541
      %v2543 = vadd.f32 %v2406, %v2408
      %2544 = vadd.xlane.f32.xlu0 %v2543
      %v2545 = vpop.xlane.xlu0 %2544
      %v2546 = vadd.f32 %v2412, %v2414
      %2547 = vadd.xlane.f32.xlu0 %v2546
      %v2548 = vpop.xlane.xlu0 %2547
      %v2549 = vadd.f32 %v2416, %v2418
      %2550 = vadd.xlane.f32.xlu0 %v2549
      %v2551 = vpop.xlane.xlu0 %2550
      %v2552 = vadd.f32 %v2422, %v2424
      %2553 = vadd.xlane.f32.xlu0 %v2552
      %v2554 = vpop.xlane.xlu0 %2553
      %v2555 = vadd.f32 %v2426, %v2428
      %2556 = vadd.xlane.f32.xlu0 %v2555
      %v2557 = vpop.xlane.xlu0 %2556
      %v2558 = vadd.f32 %v2432, %v2434
      %2559 = vadd.xlane.f32.xlu0 %v2558
      %v2560 = vpop.xlane.xlu0 %2559
      %v2561 = vadd.f32 %v2436, %v2438
      %2562 = vadd.xlane.f32.xlu0 %v2561
      %v2563 = vpop.xlane.xlu0 %2562
      %v2564 = vadd.f32 %v2442, %v2444
      %2565 = vadd.xlane.f32.xlu0 %v2564
      %v2566 = vpop.xlane.xlu0 %2565
      %v2567 = vadd.f32 %v2446, %v2448
      %2568 = vadd.xlane.f32.xlu0 %v2567
      %v2569 = vpop.xlane.xlu0 %2568
      %v2570 = vadd.f32 %v2452, %v2454
      %2571 = vadd.xlane.f32.xlu0 %v2570
      %v2572 = vpop.xlane.xlu0 %2571
      %v2573 = vadd.f32 %v2456, %v2458
      %2574 = vadd.xlane.f32.xlu0 %v2573
      %v2575 = vpop.xlane.xlu0 %2574
      %v2576 = vadd.f32 %v2462, %v2464
      %2577 = vadd.xlane.f32.xlu0 %v2576
      %v2578 = vpop.xlane.xlu0 %2577
      %v2579 = vadd.f32 %v2466, %v2468
      %2580 = vadd.xlane.f32.xlu0 %v2579
      %v2581 = vpop.xlane.xlu0 %2580
      %v2582 = vadd.f32 %v2472, %v2474
      %2583 = vadd.xlane.f32.xlu0 %v2582
      %v2584 = vpop.xlane.xlu0 %2583
      %v2585 = vadd.f32 %v2476, %v2478
      %2586 = vadd.xlane.f32.xlu0 %v2585
      %v2587 = vpop.xlane.xlu0 %2586
      %v2588 = vadd.f32 %v2482, %v2484
      %2589 = vadd.xlane.f32.xlu0 %v2588
      %v2590 = vpop.xlane.xlu0 %2589
      %v2591 = vadd.f32 %v2486, %v2488
      %2592 = vadd.xlane.f32.xlu0 %v2591
      %v2593 = vpop.xlane.xlu0 %2592
      %v2594 = vadd.f32 %v2492, %v2494
      %2595 = vadd.xlane.f32.xlu0 %v2594
      %v2596 = vpop.xlane.xlu0 %2595
      %v2597 = vadd.f32 %v2496, %v2498
      %2598 = vadd.xlane.f32.xlu0 %v2597
      %v2599 = vpop.xlane.xlu0 %2598
      %v2600 = vadd.f32 %v2502, %v2504
      %2601 = vadd.xlane.f32.xlu0 %v2600
      %v2602 = vpop.xlane.xlu0 %2601
      %v2603 = vadd.f32 %v2506, %v2508
      %2604 = vadd.xlane.f32.xlu0 %v2603
      %v2605 = vpop.xlane.xlu0 %2604
      %v2606 = vmul.f32 %v2512, %v1258
      %v2607 = vmul.f32 %v2515, %v1258
      %v2608 = vmul.f32 %v2518, %v1258
      %v2609 = vmul.f32 %v2521, %v1258
      %v2610 = vmul.f32 %v2524, %v1258
      %v2611 = vmul.f32 %v2527, %v1258
      %v2612 = vmul.f32 %v2530, %v1258
      %v2613 = vmul.f32 %v2533, %v1258
      %v2614 = vmul.f32 %v2536, %v1258
      %v2615 = vmul.f32 %v2539, %v1258
      %v2616 = vmul.f32 %v2542, %v1258
      %v2617 = vmul.f32 %v2545, %v1258
      %v2618 = vmul.f32 %v2548, %v1258
      %v2619 = vmul.f32 %v2551, %v1258
      %v2620 = vmul.f32 %v2554, %v1258
      %v2621 = vmul.f32 %v2557, %v1258
      %v2622 = vmul.f32 %v2560, %v1258
      %v2623 = vmul.f32 %v2563, %v1258
      %v2624 = vmul.f32 %v2566, %v1258
      %v2625 = vmul.f32 %v2569, %v1258
      %v2626 = vmul.f32 %v2572, %v1258
      %v2627 = vmul.f32 %v2575, %v1258
      %v2628 = vmul.f32 %v2578, %v1258
      %v2629 = vmul.f32 %v2581, %v1258
      %v2630 = vmul.f32 %v2584, %v1258
      %v2631 = vmul.f32 %v2587, %v1258
      %v2632 = vmul.f32 %v2590, %v1258
      %v2633 = vmul.f32 %v2593, %v1258
      %v2634 = vmul.f32 %v2596, %v1258
      %v2635 = vmul.f32 %v2599, %v1258
      %v2636 = vmul.f32 %v2602, %v1258
      %v2637 = vmul.f32 %v2605, %v1258
      %v2638 = vld [vmem:[%s7] sm:$0x3]
      %v2639 = vld [vmem:[%s8] sm:$0x3]
      %v2640 = vmul.f32 %v2352, %v2352
      %v2641 = vmul.f32 %v2354, %v2354
      %v2642 = vmul.f32 %v2356, %v2356
      %v2643 = vmul.f32 %v2358, %v2358
      %v2644 = vmul.f32 %v2362, %v2362
      %v2645 = vmul.f32 %v2364, %v2364
      %v2646 = vmul.f32 %v2366, %v2366
      %v2647 = vmul.f32 %v2368, %v2368
      %v2648 = vmul.f32 %v2372, %v2372
      %v2649 = vmul.f32 %v2374, %v2374
      %v2650 = vmul.f32 %v2376, %v2376
      %v2651 = vmul.f32 %v2378, %v2378
      %v2652 = vmul.f32 %v2382, %v2382
      %v2653 = vmul.f32 %v2384, %v2384
      %v2654 = vmul.f32 %v2386, %v2386
      %v2655 = vmul.f32 %v2388, %v2388
      %v2656 = vmul.f32 %v2392, %v2392
      %v2657 = vmul.f32 %v2394, %v2394
      %v2658 = vmul.f32 %v2396, %v2396
      %v2659 = vmul.f32 %v2398, %v2398
      %v2660 = vmul.f32 %v2402, %v2402
      %v2661 = vmul.f32 %v2404, %v2404
      %v2662 = vmul.f32 %v2406, %v2406
      %v2663 = vmul.f32 %v2408, %v2408
      %v2664 = vmul.f32 %v2412, %v2412
      %v2665 = vmul.f32 %v2414, %v2414
      %v2666 = vmul.f32 %v2416, %v2416
      %v2667 = vmul.f32 %v2418, %v2418
      %v2668 = vmul.f32 %v2422, %v2422
      %v2669 = vmul.f32 %v2424, %v2424
      %v2670 = vmul.f32 %v2426, %v2426
      %v2671 = vmul.f32 %v2428, %v2428
      %v2672 = vmul.f32 %v2432, %v2432
      %v2673 = vmul.f32 %v2434, %v2434
      %v2674 = vmul.f32 %v2436, %v2436
      %v2675 = vmul.f32 %v2438, %v2438
      %v2676 = vmul.f32 %v2442, %v2442
      %v2677 = vmul.f32 %v2444, %v2444
      %v2678 = vmul.f32 %v2446, %v2446
      %v2679 = vmul.f32 %v2448, %v2448
      %v2680 = vmul.f32 %v2452, %v2452
      %v2681 = vmul.f32 %v2454, %v2454
      %v2682 = vmul.f32 %v2456, %v2456
      %v2683 = vmul.f32 %v2458, %v2458
      %v2684 = vmul.f32 %v2462, %v2462
      %v2685 = vmul.f32 %v2464, %v2464
      %v2686 = vmul.f32 %v2466, %v2466
      %v2687 = vmul.f32 %v2468, %v2468
      %v2688 = vmul.f32 %v2472, %v2472
      %v2689 = vmul.f32 %v2474, %v2474
      %v2690 = vmul.f32 %v2476, %v2476
      %v2691 = vmul.f32 %v2478, %v2478
      %v2692 = vmul.f32 %v2482, %v2482
      %v2693 = vmul.f32 %v2484, %v2484
      %v2694 = vmul.f32 %v2486, %v2486
      %v2695 = vmul.f32 %v2488, %v2488
      %v2696 = vmul.f32 %v2492, %v2492
      %v2697 = vmul.f32 %v2494, %v2494
      %v2698 = vmul.f32 %v2496, %v2496
      %v2699 = vmul.f32 %v2498, %v2498
      %v2700 = vmul.f32 %v2502, %v2502
      %v2701 = vmul.f32 %v2504, %v2504
      %v2702 = vmul.f32 %v2506, %v2506
      %v2703 = vmul.f32 %v2508, %v2508
      %v2704 = vadd.f32 %v2640, %v2641
      %2705 = vadd.xlane.f32.xlu0 %v2704
      %v2706 = vpop.xlane.xlu0 %2705
      %v2707 = vadd.f32 %v2642, %v2643
      %2708 = vadd.xlane.f32.xlu0 %v2707
      %v2709 = vpop.xlane.xlu0 %2708
      %v2710 = vadd.f32 %v2644, %v2645
      %2711 = vadd.xlane.f32.xlu0 %v2710
      %v2712 = vpop.xlane.xlu0 %2711
      %v2713 = vadd.f32 %v2646, %v2647
      %2714 = vadd.xlane.f32.xlu0 %v2713
      %v2715 = vpop.xlane.xlu0 %2714
      %v2716 = vadd.f32 %v2648, %v2649
      %2717 = vadd.xlane.f32.xlu0 %v2716
      %v2718 = vpop.xlane.xlu0 %2717
      %v2719 = vadd.f32 %v2650, %v2651
      %2720 = vadd.xlane.f32.xlu0 %v2719
      %v2721 = vpop.xlane.xlu0 %2720
      %v2722 = vadd.f32 %v2652, %v2653
      %2723 = vadd.xlane.f32.xlu0 %v2722
      %v2724 = vpop.xlane.xlu0 %2723
      %v2725 = vadd.f32 %v2654, %v2655
      %2726 = vadd.xlane.f32.xlu0 %v2725
      %v2727 = vpop.xlane.xlu0 %2726
      %v2728 = vadd.f32 %v2656, %v2657
      %2729 = vadd.xlane.f32.xlu0 %v2728
      %v2730 = vpop.xlane.xlu0 %2729
      %v2731 = vadd.f32 %v2658, %v2659
      %2732 = vadd.xlane.f32.xlu0 %v2731
      %v2733 = vpop.xlane.xlu0 %2732
      %v2734 = vadd.f32 %v2660, %v2661
      %2735 = vadd.xlane.f32.xlu0 %v2734
      %v2736 = vpop.xlane.xlu0 %2735
      %v2737 = vadd.f32 %v2662, %v2663
      %2738 = vadd.xlane.f32.xlu0 %v2737
      %v2739 = vpop.xlane.xlu0 %2738
      %v2740 = vadd.f32 %v2664, %v2665
      %2741 = vadd.xlane.f32.xlu0 %v2740
      %v2742 = vpop.xlane.xlu0 %2741
      %v2743 = vadd.f32 %v2666, %v2667
      %2744 = vadd.xlane.f32.xlu0 %v2743
      %v2745 = vpop.xlane.xlu0 %2744
      %v2746 = vadd.f32 %v2668, %v2669
      %2747 = vadd.xlane.f32.xlu0 %v2746
      %v2748 = vpop.xlane.xlu0 %2747
      %v2749 = vadd.f32 %v2670, %v2671
      %2750 = vadd.xlane.f32.xlu0 %v2749
      %v2751 = vpop.xlane.xlu0 %2750
      %v2752 = vadd.f32 %v2672, %v2673
      %2753 = vadd.xlane.f32.xlu0 %v2752
      %v2754 = vpop.xlane.xlu0 %2753
      %v2755 = vadd.f32 %v2674, %v2675
      %2756 = vadd.xlane.f32.xlu0 %v2755
      %v2757 = vpop.xlane.xlu0 %2756
      %v2758 = vadd.f32 %v2676, %v2677
      %2759 = vadd.xlane.f32.xlu0 %v2758
      %v2760 = vpop.xlane.xlu0 %2759
      %v2761 = vadd.f32 %v2678, %v2679
      %2762 = vadd.xlane.f32.xlu0 %v2761
      %v2763 = vpop.xlane.xlu0 %2762
      %v2764 = vadd.f32 %v2680, %v2681
      %2765 = vadd.xlane.f32.xlu0 %v2764
      %v2766 = vpop.xlane.xlu0 %2765
      %v2767 = vadd.f32 %v2682, %v2683
      %2768 = vadd.xlane.f32.xlu0 %v2767
      %v2769 = vpop.xlane.xlu0 %2768
      %v2770 = vadd.f32 %v2684, %v2685
      %2771 = vadd.xlane.f32.xlu0 %v2770
      %v2772 = vpop.xlane.xlu0 %2771
      %v2773 = vadd.f32 %v2686, %v2687
      %2774 = vadd.xlane.f32.xlu0 %v2773
      %v2775 = vpop.xlane.xlu0 %2774
      %v2776 = vadd.f32 %v2688, %v2689
      %2777 = vadd.xlane.f32.xlu0 %v2776
      %v2778 = vpop.xlane.xlu0 %2777
      %v2779 = vadd.f32 %v2690, %v2691
      %2780 = vadd.xlane.f32.xlu0 %v2779
      %v2781 = vpop.xlane.xlu0 %2780
      %v2782 = vadd.f32 %v2692, %v2693
      %2783 = vadd.xlane.f32.xlu0 %v2782
      %v2784 = vpop.xlane.xlu0 %2783
      %v2785 = vadd.f32 %v2694, %v2695
      %2786 = vadd.xlane.f32.xlu0 %v2785
      %v2787 = vpop.xlane.xlu0 %2786
      %v2788 = vadd.f32 %v2696, %v2697
      %2789 = vadd.xlane.f32.xlu0 %v2788
      %v2790 = vpop.xlane.xlu0 %2789
      %v2791 = vadd.f32 %v2698, %v2699
      %2792 = vadd.xlane.f32.xlu0 %v2791
      %v2793 = vpop.xlane.xlu0 %2792
      %v2794 = vadd.f32 %v2700, %v2701
      %2795 = vadd.xlane.f32.xlu0 %v2794
      %v2796 = vpop.xlane.xlu0 %2795
      %v2797 = vadd.f32 %v2702, %v2703
      %2798 = vadd.xlane.f32.xlu0 %v2797
      %v2799 = vpop.xlane.xlu0 %2798
      %v2800 = vmul.f32 %v2706, %v1258
      %v2801 = vmul.f32 %v2709, %v1258
      %v2802 = vmul.f32 %v2712, %v1258
      %v2803 = vmul.f32 %v2715, %v1258
      %v2804 = vmul.f32 %v2718, %v1258
      %v2805 = vmul.f32 %v2721, %v1258
      %v2806 = vmul.f32 %v2724, %v1258
      %v2807 = vmul.f32 %v2727, %v1258
      %v2808 = vmul.f32 %v2730, %v1258
      %v2809 = vmul.f32 %v2733, %v1258
      %v2810 = vmul.f32 %v2736, %v1258
      %v2811 = vmul.f32 %v2739, %v1258
      %v2812 = vmul.f32 %v2742, %v1258
      %v2813 = vmul.f32 %v2745, %v1258
      %v2814 = vmul.f32 %v2748, %v1258
      %v2815 = vmul.f32 %v2751, %v1258
      %v2816 = vmul.f32 %v2754, %v1258
      %v2817 = vmul.f32 %v2757, %v1258
      %v2818 = vmul.f32 %v2760, %v1258
      %v2819 = vmul.f32 %v2763, %v1258
      %v2820 = vmul.f32 %v2766, %v1258
      %v2821 = vmul.f32 %v2769, %v1258
      %v2822 = vmul.f32 %v2772, %v1258
      %v2823 = vmul.f32 %v2775, %v1258
      %v2824 = vmul.f32 %v2778, %v1258
      %v2825 = vmul.f32 %v2781, %v1258
      %v2826 = vmul.f32 %v2784, %v1258
      %v2827 = vmul.f32 %v2787, %v1258
      %v2828 = vmul.f32 %v2790, %v1258
      %v2829 = vmul.f32 %v2793, %v1258
      %v2830 = vmul.f32 %v2796, %v1258
      %v2831 = vmul.f32 %v2799, %v1258
      %v2832 = vmul.f32 %v2606, %v2606
      %v2833 = vmul.f32 %v2607, %v2607
      %v2834 = vmul.f32 %v2608, %v2608
      %v2835 = vmul.f32 %v2609, %v2609
      %v2836 = vmul.f32 %v2610, %v2610
      %v2837 = vmul.f32 %v2611, %v2611
      %v2838 = vmul.f32 %v2612, %v2612
      %v2839 = vmul.f32 %v2613, %v2613
      %v2840 = vmul.f32 %v2614, %v2614
      %v2841 = vmul.f32 %v2615, %v2615
      %v2842 = vmul.f32 %v2616, %v2616
      %v2843 = vmul.f32 %v2617, %v2617
      %v2844 = vmul.f32 %v2618, %v2618
      %v2845 = vmul.f32 %v2619, %v2619
      %v2846 = vmul.f32 %v2620, %v2620
      %v2847 = vmul.f32 %v2621, %v2621
      %v2848 = vmul.f32 %v2622, %v2622
      %v2849 = vmul.f32 %v2623, %v2623
      %v2850 = vmul.f32 %v2624, %v2624
      %v2851 = vmul.f32 %v2625, %v2625
      %v2852 = vmul.f32 %v2626, %v2626
      %v2853 = vmul.f32 %v2627, %v2627
      %v2854 = vmul.f32 %v2628, %v2628
      %v2855 = vmul.f32 %v2629, %v2629
      %v2856 = vmul.f32 %v2630, %v2630
      %v2857 = vmul.f32 %v2631, %v2631
      %v2858 = vmul.f32 %v2632, %v2632
      %v2859 = vmul.f32 %v2633, %v2633
      %v2860 = vmul.f32 %v2634, %v2634
      %v2861 = vmul.f32 %v2635, %v2635
      %v2862 = vmul.f32 %v2636, %v2636
      %v2863 = vmul.f32 %v2637, %v2637
      %v2864 = vsub.f32 %v2800, %v2832
      %v2865 = vsub.f32 %v2801, %v2833
      %v2866 = vsub.f32 %v2802, %v2834
      %v2867 = vsub.f32 %v2803, %v2835
      %v2868 = vsub.f32 %v2804, %v2836
      %v2869 = vsub.f32 %v2805, %v2837
      %v2870 = vsub.f32 %v2806, %v2838
      %v2871 = vsub.f32 %v2807, %v2839
      %v2872 = vsub.f32 %v2808, %v2840
      %v2873 = vsub.f32 %v2809, %v2841
      %v2874 = vsub.f32 %v2810, %v2842
      %v2875 = vsub.f32 %v2811, %v2843
      %v2876 = vsub.f32 %v2812, %v2844
      %v2877 = vsub.f32 %v2813, %v2845
      %v2878 = vsub.f32 %v2814, %v2846
      %v2879 = vsub.f32 %v2815, %v2847
      %v2880 = vsub.f32 %v2816, %v2848
      %v2881 = vsub.f32 %v2817, %v2849
      %v2882 = vsub.f32 %v2818, %v2850
      %v2883 = vsub.f32 %v2819, %v2851
      %v2884 = vsub.f32 %v2820, %v2852
      %v2885 = vsub.f32 %v2821, %v2853
      %v2886 = vsub.f32 %v2822, %v2854
      %v2887 = vsub.f32 %v2823, %v2855
      %v2888 = vsub.f32 %v2824, %v2856
      %v2889 = vsub.f32 %v2825, %v2857
      %v2890 = vsub.f32 %v2826, %v2858
      %v2891 = vsub.f32 %v2827, %v2859
      %v2892 = vsub.f32 %v2828, %v2860
      %v2893 = vsub.f32 %v2829, %v2861
      %v2894 = vsub.f32 %v2830, %v2862
      %v2895 = vsub.f32 %v2831, %v2863
      %v2896 = vsub.f32 %v2352, %v2606
      %v2897 = vsub.f32 %v2354, %v2606
      %v2898 = vsub.f32 %v2356, %v2607
      %v2899 = vsub.f32 %v2358, %v2607
      %v2900 = vsub.f32 %v2362, %v2608
      %v2901 = vsub.f32 %v2364, %v2608
      %v2902 = vsub.f32 %v2366, %v2609
      %v2903 = vsub.f32 %v2368, %v2609
      %v2904 = vsub.f32 %v2372, %v2610
      %v2905 = vsub.f32 %v2374, %v2610
      %v2906 = vsub.f32 %v2376, %v2611
      %v2907 = vsub.f32 %v2378, %v2611
      %v2908 = vsub.f32 %v2382, %v2612
      %v2909 = vsub.f32 %v2384, %v2612
      %v2910 = vsub.f32 %v2386, %v2613
      %v2911 = vsub.f32 %v2388, %v2613
      %v2912 = vsub.f32 %v2392, %v2614
      %v2913 = vsub.f32 %v2394, %v2614
      %v2914 = vsub.f32 %v2396, %v2615
      %v2915 = vsub.f32 %v2398, %v2615
      %v2916 = vsub.f32 %v2402, %v2616
      %v2917 = vsub.f32 %v2404, %v2616
      %v2918 = vsub.f32 %v2406, %v2617
      %v2919 = vsub.f32 %v2408, %v2617
      %v2920 = vsub.f32 %v2412, %v2618
      %v2921 = vsub.f32 %v2414, %v2618
      %v2922 = vsub.f32 %v2416, %v2619
      %v2923 = vsub.f32 %v2418, %v2619
      %v2924 = vsub.f32 %v2422, %v2620
      %v2925 = vsub.f32 %v2424, %v2620
      %v2926 = vsub.f32 %v2426, %v2621
      %v2927 = vsub.f32 %v2428, %v2621
      %v2928 = vsub.f32 %v2432, %v2622
      %v2929 = vsub.f32 %v2434, %v2622
      %v2930 = vsub.f32 %v2436, %v2623
      %v2931 = vsub.f32 %v2438, %v2623
      %v2932 = vsub.f32 %v2442, %v2624
      %v2933 = vsub.f32 %v2444, %v2624
      %v2934 = vsub.f32 %v2446, %v2625
      %v2935 = vsub.f32 %v2448, %v2625
      %v2936 = vsub.f32 %v2452, %v2626
      %v2937 = vsub.f32 %v2454, %v2626
      %v2938 = vsub.f32 %v2456, %v2627
      %v2939 = vsub.f32 %v2458, %v2627
      %v2940 = vsub.f32 %v2462, %v2628
      %v2941 = vsub.f32 %v2464, %v2628
      %v2942 = vsub.f32 %v2466, %v2629
      %v2943 = vsub.f32 %v2468, %v2629
      %v2944 = vsub.f32 %v2472, %v2630
      %v2945 = vsub.f32 %v2474, %v2630
      %v2946 = vsub.f32 %v2476, %v2631
      %v2947 = vsub.f32 %v2478, %v2631
      %v2948 = vsub.f32 %v2482, %v2632
      %v2949 = vsub.f32 %v2484, %v2632
      %v2950 = vsub.f32 %v2486, %v2633
      %v2951 = vsub.f32 %v2488, %v2633
      %v2952 = vsub.f32 %v2492, %v2634
      %v2953 = vsub.f32 %v2494, %v2634
      %v2954 = vsub.f32 %v2496, %v2635
      %v2955 = vsub.f32 %v2498, %v2635
      %v2956 = vsub.f32 %v2502, %v2636
      %v2957 = vsub.f32 %v2504, %v2636
      %v2958 = vsub.f32 %v2506, %v2637
      %v2959 = vsub.f32 %v2508, %v2637
      %v2960 = vadd.f32 %v2864, 1e-05
      %v2961 = vadd.f32 %v2865, 1e-05
      %v2962 = vadd.f32 %v2866, 1e-05
      %v2963 = vadd.f32 %v2867, 1e-05
      %v2964 = vadd.f32 %v2868, 1e-05
      %v2965 = vadd.f32 %v2869, 1e-05
      %v2966 = vadd.f32 %v2870, 1e-05
      %v2967 = vadd.f32 %v2871, 1e-05
      %v2968 = vadd.f32 %v2872, 1e-05
      %v2969 = vadd.f32 %v2873, 1e-05
      %v2970 = vadd.f32 %v2874, 1e-05
      %v2971 = vadd.f32 %v2875, 1e-05
      %v2972 = vadd.f32 %v2876, 1e-05
      %v2973 = vadd.f32 %v2877, 1e-05
      %v2974 = vadd.f32 %v2878, 1e-05
      %v2975 = vadd.f32 %v2879, 1e-05
      %v2976 = vadd.f32 %v2880, 1e-05
      %v2977 = vadd.f32 %v2881, 1e-05
      %v2978 = vadd.f32 %v2882, 1e-05
      %v2979 = vadd.f32 %v2883, 1e-05
      %v2980 = vadd.f32 %v2884, 1e-05
      %v2981 = vadd.f32 %v2885, 1e-05
      %v2982 = vadd.f32 %v2886, 1e-05
      %v2983 = vadd.f32 %v2887, 1e-05
      %v2984 = vadd.f32 %v2888, 1e-05
      %v2985 = vadd.f32 %v2889, 1e-05
      %v2986 = vadd.f32 %v2890, 1e-05
      %v2987 = vadd.f32 %v2891, 1e-05
      %v2988 = vadd.f32 %v2892, 1e-05
      %v2989 = vadd.f32 %v2893, 1e-05
      %v2990 = vadd.f32 %v2894, 1e-05
      %v2991 = vadd.f32 %v2895, 1e-05
      %v2992 = vrsqrt.pop %v2960
      %v2993 = vrsqrt.pop %v2961
      %v2994 = vrsqrt.pop %v2962
      %v2995 = vrsqrt.pop %v2963
      %v2996 = vrsqrt.pop %v2964
      %v2997 = vrsqrt.pop %v2965
      %v2998 = vrsqrt.pop %v2966
      %v2999 = vrsqrt.pop %v2967
      %v3000 = vrsqrt.pop %v2968
      %v3001 = vrsqrt.pop %v2969
      %v3002 = vrsqrt.pop %v2970
      %v3003 = vrsqrt.pop %v2971
      %v3004 = vrsqrt.pop %v2972
      %v3005 = vrsqrt.pop %v2973
      %v3006 = vrsqrt.pop %v2974
      %v3007 = vrsqrt.pop %v2975
      %v3008 = vrsqrt.pop %v2976
      %v3009 = vrsqrt.pop %v2977
      %v3010 = vrsqrt.pop %v2978
      %v3011 = vrsqrt.pop %v2979
      %v3012 = vrsqrt.pop %v2980
      %v3013 = vrsqrt.pop %v2981
      %v3014 = vrsqrt.pop %v2982
      %v3015 = vrsqrt.pop %v2983
      %v3016 = vrsqrt.pop %v2984
      %v3017 = vrsqrt.pop %v2985
      %v3018 = vrsqrt.pop %v2986
      %v3019 = vrsqrt.pop %v2987
      %v3020 = vrsqrt.pop %v2988
      %v3021 = vrsqrt.pop %v2989
      %v3022 = vrsqrt.pop %v2990
      %v3023 = vrsqrt.pop %v2991
      %v3024 = vmul.f32 %v2896, %v2992
      %v3025 = vmul.f32 %v2897, %v2992
      %v3026 = vmul.f32 %v2898, %v2993
      %v3027 = vmul.f32 %v2899, %v2993
      %v3028 = vmul.f32 %v2900, %v2994
      %v3029 = vmul.f32 %v2901, %v2994
      %v3030 = vmul.f32 %v2902, %v2995
      %v3031 = vmul.f32 %v2903, %v2995
      %v3032 = vmul.f32 %v2904, %v2996
      %v3033 = vmul.f32 %v2905, %v2996
      %v3034 = vmul.f32 %v2906, %v2997
      %v3035 = vmul.f32 %v2907, %v2997
      %v3036 = vmul.f32 %v2908, %v2998
      %v3037 = vmul.f32 %v2909, %v2998
      %v3038 = vmul.f32 %v2910, %v2999
      %v3039 = vmul.f32 %v2911, %v2999
      %v3040 = vmul.f32 %v2912, %v3000
      %v3041 = vmul.f32 %v2913, %v3000
      %v3042 = vmul.f32 %v2914, %v3001
      %v3043 = vmul.f32 %v2915, %v3001
      %v3044 = vmul.f32 %v2916, %v3002
      %v3045 = vmul.f32 %v2917, %v3002
      %v3046 = vmul.f32 %v2918, %v3003
      %v3047 = vmul.f32 %v2919, %v3003
      %v3048 = vmul.f32 %v2920, %v3004
      %v3049 = vmul.f32 %v2921, %v3004
      %v3050 = vmul.f32 %v2922, %v3005
      %v3051 = vmul.f32 %v2923, %v3005
      %v3052 = vmul.f32 %v2924, %v3006
      %v3053 = vmul.f32 %v2925, %v3006
      %v3054 = vmul.f32 %v2926, %v3007
      %v3055 = vmul.f32 %v2927, %v3007
      %v3056 = vmul.f32 %v2928, %v3008
      %v3057 = vmul.f32 %v2929, %v3008
      %v3058 = vmul.f32 %v2930, %v3009
      %v3059 = vmul.f32 %v2931, %v3009
      %v3060 = vmul.f32 %v2932, %v3010
      %v3061 = vmul.f32 %v2933, %v3010
      %v3062 = vmul.f32 %v2934, %v3011
      %v3063 = vmul.f32 %v2935, %v3011
      %v3064 = vmul.f32 %v2936, %v3012
      %v3065 = vmul.f32 %v2937, %v3012
      %v3066 = vmul.f32 %v2938, %v3013
      %v3067 = vmul.f32 %v2939, %v3013
      %v3068 = vmul.f32 %v2940, %v3014
      %v3069 = vmul.f32 %v2941, %v3014
      %v3070 = vmul.f32 %v2942, %v3015
      %v3071 = vmul.f32 %v2943, %v3015
      %v3072 = vmul.f32 %v2944, %v3016
      %v3073 = vmul.f32 %v2945, %v3016
      %v3074 = vmul.f32 %v2946, %v3017
      %v3075 = vmul.f32 %v2947, %v3017
      %v3076 = vmul.f32 %v2948, %v3018
      %v3077 = vmul.f32 %v2949, %v3018
      %v3078 = vmul.f32 %v2950, %v3019
      %v3079 = vmul.f32 %v2951, %v3019
      %v3080 = vmul.f32 %v2952, %v3020
      %v3081 = vmul.f32 %v2953, %v3020
      %v3082 = vmul.f32 %v2954, %v3021
      %v3083 = vmul.f32 %v2955, %v3021
      %v3084 = vmul.f32 %v2956, %v3022
      %v3085 = vmul.f32 %v2957, %v3022
      %v3086 = vmul.f32 %v2958, %v3023
      %v3087 = vmul.f32 %v2959, %v3023
      %v3089 = vlaneseq
      %v3090 = vshrl.u32 %v3089, 7
      %v3091 = vsub.s32 0, %v3090
      %v3092 = vrot.slane %v2638, %v3091
      %v3093 = vlaneseq
      %v3094 = vshrl.u32 %v3093, 7
      %v3095 = vsub.s32 1, %v3094
      %v3096 = vrot.slane %v2638, %v3095
      %v3099 = vmul.f32 %v3024, %v3092
      %v3100 = vmul.f32 %v3025, %v3096
      %v3101 = vmul.f32 %v3026, %v3092
      %v3102 = vmul.f32 %v3027, %v3096
      %v3103 = vmul.f32 %v3028, %v3092
      %v3104 = vmul.f32 %v3029, %v3096
      %v3105 = vmul.f32 %v3030, %v3092
      %v3106 = vmul.f32 %v3031, %v3096
      %v3107 = vmul.f32 %v3032, %v3092
      %v3108 = vmul.f32 %v3033, %v3096
      %v3109 = vmul.f32 %v3034, %v3092
      %v3110 = vmul.f32 %v3035, %v3096
      %v3111 = vmul.f32 %v3036, %v3092
      %v3112 = vmul.f32 %v3037, %v3096
      %v3113 = vmul.f32 %v3038, %v3092
      %v3114 = vmul.f32 %v3039, %v3096
      %v3115 = vmul.f32 %v3040, %v3092
      %v3116 = vmul.f32 %v3041, %v3096
      %v3117 = vmul.f32 %v3042, %v3092
      %v3118 = vmul.f32 %v3043, %v3096
      %v3119 = vmul.f32 %v3044, %v3092
      %v3120 = vmul.f32 %v3045, %v3096
      %v3121 = vmul.f32 %v3046, %v3092
      %v3122 = vmul.f32 %v3047, %v3096
      %v3123 = vmul.f32 %v3048, %v3092
      %v3124 = vmul.f32 %v3049, %v3096
      %v3125 = vmul.f32 %v3050, %v3092
      %v3126 = vmul.f32 %v3051, %v3096
      %v3127 = vmul.f32 %v3052, %v3092
      %v3128 = vmul.f32 %v3053, %v3096
      %v3129 = vmul.f32 %v3054, %v3092
      %v3130 = vmul.f32 %v3055, %v3096
      %v3131 = vmul.f32 %v3056, %v3092
      %v3132 = vmul.f32 %v3057, %v3096
      %v3133 = vmul.f32 %v3058, %v3092
      %v3134 = vmul.f32 %v3059, %v3096
      %v3135 = vmul.f32 %v3060, %v3092
      %v3136 = vmul.f32 %v3061, %v3096
      %v3137 = vmul.f32 %v3062, %v3092
      %v3138 = vmul.f32 %v3063, %v3096
      %v3139 = vmul.f32 %v3064, %v3092
      %v3140 = vmul.f32 %v3065, %v3096
      %v3141 = vmul.f32 %v3066, %v3092
      %v3142 = vmul.f32 %v3067, %v3096
      %v3143 = vmul.f32 %v3068, %v3092
      %v3144 = vmul.f32 %v3069, %v3096
      %v3145 = vmul.f32 %v3070, %v3092
      %v3146 = vmul.f32 %v3071, %v3096
      %v3147 = vmul.f32 %v3072, %v3092
      %v3148 = vmul.f32 %v3073, %v3096
      %v3149 = vmul.f32 %v3074, %v3092
      %v3150 = vmul.f32 %v3075, %v3096
      %v3151 = vmul.f32 %v3076, %v3092
      %v3152 = vmul.f32 %v3077, %v3096
      %v3153 = vmul.f32 %v3078, %v3092
      %v3154 = vmul.f32 %v3079, %v3096
      %v3155 = vmul.f32 %v3080, %v3092
      %v3156 = vmul.f32 %v3081, %v3096
      %v3157 = vmul.f32 %v3082, %v3092
      %v3158 = vmul.f32 %v3083, %v3096
      %v3159 = vmul.f32 %v3084, %v3092
      %v3160 = vmul.f32 %v3085, %v3096
      %v3161 = vmul.f32 %v3086, %v3092
      %v3162 = vmul.f32 %v3087, %v3096
      %v3164 = vlaneseq
      %v3165 = vshrl.u32 %v3164, 7
      %v3166 = vsub.s32 0, %v3165
      %v3167 = vrot.slane %v2639, %v3166
      %v3168 = vlaneseq
      %v3169 = vshrl.u32 %v3168, 7
      %v3170 = vsub.s32 1, %v3169
      %v3171 = vrot.slane %v2639, %v3170
      %v3174 = vadd.f32 %v3099, %v3167
      %v3175 = vadd.f32 %v3100, %v3171
      %v3176 = vadd.f32 %v3101, %v3167
      %v3177 = vadd.f32 %v3102, %v3171
      %v3178 = vadd.f32 %v3103, %v3167
      %v3179 = vadd.f32 %v3104, %v3171
      %v3180 = vadd.f32 %v3105, %v3167
      %v3181 = vadd.f32 %v3106, %v3171
      %v3182 = vadd.f32 %v3107, %v3167
      %v3183 = vadd.f32 %v3108, %v3171
      %v3184 = vadd.f32 %v3109, %v3167
      %v3185 = vadd.f32 %v3110, %v3171
      %v3186 = vadd.f32 %v3111, %v3167
      %v3187 = vadd.f32 %v3112, %v3171
      %v3188 = vadd.f32 %v3113, %v3167
      %v3189 = vadd.f32 %v3114, %v3171
      %v3190 = vadd.f32 %v3115, %v3167
      %v3191 = vadd.f32 %v3116, %v3171
      %v3192 = vadd.f32 %v3117, %v3167
      %v3193 = vadd.f32 %v3118, %v3171
      %v3194 = vadd.f32 %v3119, %v3167
      %v3195 = vadd.f32 %v3120, %v3171
      %v3196 = vadd.f32 %v3121, %v3167
      %v3197 = vadd.f32 %v3122, %v3171
      %v3198 = vadd.f32 %v3123, %v3167
      %v3199 = vadd.f32 %v3124, %v3171
      %v3200 = vadd.f32 %v3125, %v3167
      %v3201 = vadd.f32 %v3126, %v3171
      %v3202 = vadd.f32 %v3127, %v3167
      %v3203 = vadd.f32 %v3128, %v3171
      %v3204 = vadd.f32 %v3129, %v3167
      %v3205 = vadd.f32 %v3130, %v3171
      %v3206 = vadd.f32 %v3131, %v3167
      %v3207 = vadd.f32 %v3132, %v3171
      %v3208 = vadd.f32 %v3133, %v3167
      %v3209 = vadd.f32 %v3134, %v3171
      %v3210 = vadd.f32 %v3135, %v3167
      %v3211 = vadd.f32 %v3136, %v3171
      %v3212 = vadd.f32 %v3137, %v3167
      %v3213 = vadd.f32 %v3138, %v3171
      %v3214 = vadd.f32 %v3139, %v3167
      %v3215 = vadd.f32 %v3140, %v3171
      %v3216 = vadd.f32 %v3141, %v3167
      %v3217 = vadd.f32 %v3142, %v3171
      %v3218 = vadd.f32 %v3143, %v3167
      %v3219 = vadd.f32 %v3144, %v3171
      %v3220 = vadd.f32 %v3145, %v3167
      %v3221 = vadd.f32 %v3146, %v3171
      %v3222 = vadd.f32 %v3147, %v3167
      %v3223 = vadd.f32 %v3148, %v3171
      %v3224 = vadd.f32 %v3149, %v3167
      %v3225 = vadd.f32 %v3150, %v3171
      %v3226 = vadd.f32 %v3151, %v3167
      %v3227 = vadd.f32 %v3152, %v3171
      %v3228 = vadd.f32 %v3153, %v3167
      %v3229 = vadd.f32 %v3154, %v3171
      %v3230 = vadd.f32 %v3155, %v3167
      %v3231 = vadd.f32 %v3156, %v3171
      %v3232 = vadd.f32 %v3157, %v3167
      %v3233 = vadd.f32 %v3158, %v3171
      %v3234 = vadd.f32 %v3159, %v3167
      %v3235 = vadd.f32 %v3160, %v3171
      %v3236 = vadd.f32 %v3161, %v3167
      %v3237 = vadd.f32 %v3162, %v3171
      %v3238 = vmax.f32 %v3174, 0.0
      %v3239 = vmax.f32 %v3175, 0.0
      %v3240 = vmax.f32 %v3176, 0.0
      %v3241 = vmax.f32 %v3177, 0.0
      %v3242 = vmax.f32 %v3178, 0.0
      %v3243 = vmax.f32 %v3179, 0.0
      %v3244 = vmax.f32 %v3180, 0.0
      %v3245 = vmax.f32 %v3181, 0.0
      %v3246 = vmax.f32 %v3182, 0.0
      %v3247 = vmax.f32 %v3183, 0.0
      %v3248 = vmax.f32 %v3184, 0.0
      %v3249 = vmax.f32 %v3185, 0.0
      %v3250 = vmax.f32 %v3186, 0.0
      %v3251 = vmax.f32 %v3187, 0.0
      %v3252 = vmax.f32 %v3188, 0.0
      %v3253 = vmax.f32 %v3189, 0.0
      %v3254 = vmax.f32 %v3190, 0.0
      %v3255 = vmax.f32 %v3191, 0.0
      %v3256 = vmax.f32 %v3192, 0.0
      %v3257 = vmax.f32 %v3193, 0.0
      %v3258 = vmax.f32 %v3194, 0.0
      %v3259 = vmax.f32 %v3195, 0.0
      %v3260 = vmax.f32 %v3196, 0.0
      %v3261 = vmax.f32 %v3197, 0.0
      %v3262 = vmax.f32 %v3198, 0.0
      %v3263 = vmax.f32 %v3199, 0.0
      %v3264 = vmax.f32 %v3200, 0.0
      %v3265 = vmax.f32 %v3201, 0.0
      %v3266 = vmax.f32 %v3202, 0.0
      %v3267 = vmax.f32 %v3203, 0.0
      %v3268 = vmax.f32 %v3204, 0.0
      %v3269 = vmax.f32 %v3205, 0.0
      %v3270 = vmax.f32 %v3206, 0.0
      %v3271 = vmax.f32 %v3207, 0.0
      %v3272 = vmax.f32 %v3208, 0.0
      %v3273 = vmax.f32 %v3209, 0.0
      %v3274 = vmax.f32 %v3210, 0.0
      %v3275 = vmax.f32 %v3211, 0.0
      %v3276 = vmax.f32 %v3212, 0.0
      %v3277 = vmax.f32 %v3213, 0.0
      %v3278 = vmax.f32 %v3214, 0.0
      %v3279 = vmax.f32 %v3215, 0.0
      %v3280 = vmax.f32 %v3216, 0.0
      %v3281 = vmax.f32 %v3217, 0.0
      %v3282 = vmax.f32 %v3218, 0.0
      %v3283 = vmax.f32 %v3219, 0.0
      %v3284 = vmax.f32 %v3220, 0.0
      %v3285 = vmax.f32 %v3221, 0.0
      %v3286 = vmax.f32 %v3222, 0.0
      %v3287 = vmax.f32 %v3223, 0.0
      %v3288 = vmax.f32 %v3224, 0.0
      %v3289 = vmax.f32 %v3225, 0.0
      %v3290 = vmax.f32 %v3226, 0.0
      %v3291 = vmax.f32 %v3227, 0.0
      %v3292 = vmax.f32 %v3228, 0.0
      %v3293 = vmax.f32 %v3229, 0.0
      %v3294 = vmax.f32 %v3230, 0.0
      %v3295 = vmax.f32 %v3231, 0.0
      %v3296 = vmax.f32 %v3232, 0.0
      %v3297 = vmax.f32 %v3233, 0.0
      %v3298 = vmax.f32 %v3234, 0.0
      %v3299 = vmax.f32 %v3235, 0.0
      %v3300 = vmax.f32 %v3236, 0.0
      %v3301 = vmax.f32 %v3237, 0.0
      %v3302 = vpack.c.bf16 %v3240, %v3238
      %v3303 = vpack.c.bf16 %v3241, %v3239
      %v3304 = vpack.c.bf16 %v3244, %v3242
      %v3305 = vpack.c.bf16 %v3245, %v3243
      %v3306 = vpack.c.bf16 %v3248, %v3246
      %v3307 = vpack.c.bf16 %v3249, %v3247
      %v3308 = vpack.c.bf16 %v3252, %v3250
      %v3309 = vpack.c.bf16 %v3253, %v3251
      %v3310 = vpack.c.bf16 %v3256, %v3254
      %v3311 = vpack.c.bf16 %v3257, %v3255
      %v3312 = vpack.c.bf16 %v3260, %v3258
      %v3313 = vpack.c.bf16 %v3261, %v3259
      %v3314 = vpack.c.bf16 %v3264, %v3262
      %v3315 = vpack.c.bf16 %v3265, %v3263
      %v3316 = vpack.c.bf16 %v3268, %v3266
      %v3317 = vpack.c.bf16 %v3269, %v3267
      %v3318 = vpack.c.bf16 %v3272, %v3270
      %v3319 = vpack.c.bf16 %v3273, %v3271
      %v3320 = vpack.c.bf16 %v3276, %v3274
      %v3321 = vpack.c.bf16 %v3277, %v3275
      %v3322 = vpack.c.bf16 %v3280, %v3278
      %v3323 = vpack.c.bf16 %v3281, %v3279
      %v3324 = vpack.c.bf16 %v3284, %v3282
      %v3325 = vpack.c.bf16 %v3285, %v3283
      %v3326 = vpack.c.bf16 %v3288, %v3286
      %v3327 = vpack.c.bf16 %v3289, %v3287
      %v3328 = vpack.c.bf16 %v3292, %v3290
      %v3329 = vpack.c.bf16 %v3293, %v3291
      %v3330 = vpack.c.bf16 %v3296, %v3294
      %v3331 = vpack.c.bf16 %v3297, %v3295
      %v3332 = vpack.c.bf16 %v3300, %v3298
      %v3333 = vpack.c.bf16 %v3301, %v3299
      %v3334 = vld [vmem:[%s9] sm:$0xf]
      %v3335 = vld [vmem:[%s9 + $0x4] sm:$0xf]
      %v3336 = vld [vmem:[%s9 + $0x8] sm:$0xf]
      %v3337 = vld [vmem:[%s9 + $0xc] sm:$0xf]
      %v3338 = vld [vmem:[%s9 + $0x10] sm:$0xf]
      %v3339 = vld [vmem:[%s9 + $0x14] sm:$0xf]
      %v3340 = vld [vmem:[%s9 + $0x18] sm:$0xf]
      %v3341 = vld [vmem:[%s9 + $0x1c] sm:$0xf]
      %v3342 = vld [vmem:[%s9 + $0x20] sm:$0xf]
      %v3343 = vld [vmem:[%s9 + $0x24] sm:$0xf]
      %v3344 = vld [vmem:[%s9 + $0x28] sm:$0xf]
      %v3345 = vld [vmem:[%s9 + $0x2c] sm:$0xf]
      %v3346 = vld [vmem:[%s9 + $0x30] sm:$0xf]
      %v3347 = vld [vmem:[%s9 + $0x34] sm:$0xf]
      %v3348 = vld [vmem:[%s9 + $0x38] sm:$0xf]
      %v3349 = vld [vmem:[%s9 + $0x3c] sm:$0xf]
      %v3350 = vld [vmem:[%s9 + $0x40] sm:$0xf]
      %v3351 = vld [vmem:[%s9 + $0x44] sm:$0xf]
      %v3352 = vld [vmem:[%s9 + $0x48] sm:$0xf]
      %v3353 = vld [vmem:[%s9 + $0x4c] sm:$0xf]
      %v3354 = vld [vmem:[%s9 + $0x50] sm:$0xf]
      %v3355 = vld [vmem:[%s9 + $0x54] sm:$0xf]
      %v3356 = vld [vmem:[%s9 + $0x58] sm:$0xf]
      %v3357 = vld [vmem:[%s9 + $0x5c] sm:$0xf]
      %v3358 = vld [vmem:[%s9 + $0x60] sm:$0xf]
      %v3359 = vld [vmem:[%s9 + $0x64] sm:$0xf]
      %v3360 = vld [vmem:[%s9 + $0x68] sm:$0xf]
      %v3361 = vld [vmem:[%s9 + $0x6c] sm:$0xf]
      %v3362 = vld [vmem:[%s9 + $0x70] sm:$0xf]
      %v3363 = vld [vmem:[%s9 + $0x74] sm:$0xf]
      %v3364 = vld [vmem:[%s9 + $0x78] sm:$0xf]
      %v3365 = vld [vmem:[%s9 + $0x7c] sm:$0xf]
      %v3398 = vunpack.c.l.b16 %v3334
      %v3399 = vunpack.c.l.b16 %v3335
      %v3400 = vunpack.c.l.b16 %v3336
      %v3401 = vunpack.c.l.b16 %v3337
      %v3402 = vunpack.c.l.b16 %v3338
      %v3403 = vunpack.c.l.b16 %v3339
      %v3404 = vunpack.c.l.b16 %v3340
      %v3405 = vunpack.c.l.b16 %v3341
      %v3406 = vunpack.c.l.b16 %v3342
      %v3407 = vunpack.c.l.b16 %v3343
      %v3408 = vunpack.c.l.b16 %v3344
      %v3409 = vunpack.c.l.b16 %v3345
      %v3410 = vunpack.c.l.b16 %v3346
      %v3411 = vunpack.c.l.b16 %v3347
      %v3412 = vunpack.c.l.b16 %v3348
      %v3413 = vunpack.c.l.b16 %v3349
      %v3414 = vunpack.c.l.b16 %v3350
      %v3415 = vunpack.c.l.b16 %v3351
      %v3416 = vunpack.c.l.b16 %v3352
      %v3417 = vunpack.c.l.b16 %v3353
      %v3418 = vunpack.c.l.b16 %v3354
      %v3419 = vunpack.c.l.b16 %v3355
      %v3420 = vunpack.c.l.b16 %v3356
      %v3421 = vunpack.c.l.b16 %v3357
      %v3422 = vunpack.c.l.b16 %v3358
      %v3423 = vunpack.c.l.b16 %v3359
      %v3424 = vunpack.c.l.b16 %v3360
      %v3425 = vunpack.c.l.b16 %v3361
      %v3426 = vunpack.c.l.b16 %v3362
      %v3427 = vunpack.c.l.b16 %v3363
      %v3428 = vunpack.c.l.b16 %v3364
      %v3429 = vunpack.c.l.b16 %v3365
      %v3430 = vpack.c.b16 %v3399, %v3398
      %v3431 = vpack.c.b16 %v3401, %v3400
      %v3432 = vpack.c.b16 %v3403, %v3402
      %v3433 = vpack.c.b16 %v3405, %v3404
      %v3434 = vpack.c.b16 %v3407, %v3406
      %v3435 = vpack.c.b16 %v3409, %v3408
      %v3436 = vpack.c.b16 %v3411, %v3410
      %v3437 = vpack.c.b16 %v3413, %v3412
      %v3438 = vpack.c.b16 %v3415, %v3414
      %v3439 = vpack.c.b16 %v3417, %v3416
      %v3440 = vpack.c.b16 %v3419, %v3418
      %v3441 = vpack.c.b16 %v3421, %v3420
      %v3442 = vpack.c.b16 %v3423, %v3422
      %v3443 = vpack.c.b16 %v3425, %v3424
      %v3444 = vpack.c.b16 %v3427, %v3426
      %v3445 = vpack.c.b16 %v3429, %v3428
      %3462 = vmatprep.subr.bf16.mxu0 0
      %3463 = vmatpush1.bf16.msra.mxu0 %v3437
      %3464 = vmatprep.subr.bf16.mxu0 0
      %3465 = vmatpush1.bf16.msra.mxu0 %v3436
      %3466 = vmatprep.subr.bf16.mxu0 0
      %3467 = vmatpush1.bf16.msra.mxu0 %v3435
      %3468 = vmatprep.subr.bf16.mxu0 0
      %3469 = vmatpush1.bf16.msra.mxu0 %v3434
      %3470 = vmatprep.subr.bf16.mxu0 0
      %3471 = vmatpush1.bf16.msra.mxu0 %v3433
      %3472 = vmatprep.subr.bf16.mxu0 0
      %3473 = vmatpush1.bf16.msra.mxu0 %v3432
      %3474 = vmatprep.subr.bf16.mxu0 0
      %3475 = vmatpush1.bf16.msra.mxu0 %v3431
      %3476 = vmatprep.subr.bf16.mxu0 0
      %3477 = vmatpush1.bf16.msra.mxu0 %v3430
      %3478 = vmatprep.subr.bf16.mxu0 0
      %3479 = vmatpush2.bf16.msra.mxu0 %v3445
      %3480 = vmatprep.subr.bf16.mxu0 0
      %3481 = vmatpush2.bf16.msra.mxu0 %v3444
      %3482 = vmatprep.subr.bf16.mxu0 0
      %3483 = vmatpush2.bf16.msra.mxu0 %v3443
      %3484 = vmatprep.subr.bf16.mxu0 0
      %3485 = vmatpush2.bf16.msra.mxu0 %v3442
      %3486 = vmatprep.subr.bf16.mxu0 0
      %3487 = vmatpush2.bf16.msra.mxu0 %v3441
      %3488 = vmatprep.subr.bf16.mxu0 0
      %3489 = vmatpush2.bf16.msra.mxu0 %v3440
      %3490 = vmatprep.subr.bf16.mxu0 0
      %3491 = vmatpush2.bf16.msra.mxu0 %v3439
      %3492 = vmatprep.subr.bf16.mxu0 0
      %3493 = vmatpush2.bf16.msra.mxu0 %v3438
      %3494 = vmatprep.mubr.bf16.mxu0 %v3303
      %3495 = vmatmul.mubr.bf16.gmra.mxu0 %v3302
      %v3496 = vpop.f32.mrf.mxu0
      %v3497 = vadd.f32 %v820, %v3496
      %v3498 = vpop.f32.mrf.mxu0
      %v3499 = vpop.f32.mrf.mxu0
      %v3500 = vadd.f32 %v823, %v3499
      %v3501 = vpop.f32.mrf.mxu0
      %3502 = vmatprep.mubr.bf16.mxu0 %v3305
      %3503 = vmatmul.mubr.bf16.gmra.mxu0 %v3304
      %v3504 = vpop.f32.mrf.mxu0
      %v3505 = vadd.f32 %v828, %v3504
      %v3506 = vpop.f32.mrf.mxu0
      %v3507 = vpop.f32.mrf.mxu0
      %v3508 = vadd.f32 %v831, %v3507
      %v3509 = vpop.f32.mrf.mxu0
      %3510 = vmatprep.mubr.bf16.mxu0 %v3307
      %3511 = vmatmul.mubr.bf16.gmra.mxu0 %v3306
      %v3512 = vpop.f32.mrf.mxu0
      %v3513 = vadd.f32 %v836, %v3512
      %v3514 = vpop.f32.mrf.mxu0
      %v3515 = vpop.f32.mrf.mxu0
      %v3516 = vadd.f32 %v839, %v3515
      %v3517 = vpop.f32.mrf.mxu0
      %3518 = vmatprep.mubr.bf16.mxu0 %v3309
      %3519 = vmatmul.mubr.bf16.gmra.mxu0 %v3308
      %v3520 = vpop.f32.mrf.mxu0
      %v3521 = vadd.f32 %v844, %v3520
      %v3522 = vpop.f32.mrf.mxu0
      %v3523 = vpop.f32.mrf.mxu0
      %v3524 = vadd.f32 %v847, %v3523
      %v3525 = vpop.f32.mrf.mxu0
      %3526 = vmatprep.mubr.bf16.mxu0 %v3311
      %3527 = vmatmul.mubr.bf16.gmra.mxu0 %v3310
      %v3528 = vpop.f32.mrf.mxu0
      %v3529 = vadd.f32 %v852, %v3528
      %v3530 = vpop.f32.mrf.mxu0
      %v3531 = vpop.f32.mrf.mxu0
      %v3532 = vadd.f32 %v855, %v3531
      %v3533 = vpop.f32.mrf.mxu0
      %3534 = vmatprep.mubr.bf16.mxu0 %v3313
      %3535 = vmatmul.mubr.bf16.gmra.mxu0 %v3312
      %v3536 = vpop.f32.mrf.mxu0
      %v3537 = vadd.f32 %v860, %v3536
      %v3538 = vpop.f32.mrf.mxu0
      %v3539 = vpop.f32.mrf.mxu0
      %v3540 = vadd.f32 %v863, %v3539
      %v3541 = vpop.f32.mrf.mxu0
      %3542 = vmatprep.mubr.bf16.mxu0 %v3315
      %3543 = vmatmul.mubr.bf16.gmra.mxu0 %v3314
      %v3544 = vpop.f32.mrf.mxu0
      %v3545 = vadd.f32 %v868, %v3544
      %v3546 = vpop.f32.mrf.mxu0
      %v3547 = vpop.f32.mrf.mxu0
      %v3548 = vadd.f32 %v871, %v3547
      %v3549 = vpop.f32.mrf.mxu0
      %3550 = vmatprep.mubr.bf16.mxu0 %v3317
      %3551 = vmatmul.mubr.bf16.gmra.mxu0 %v3316
      %v3552 = vpop.f32.mrf.mxu0
      %v3553 = vadd.f32 %v876, %v3552
      %v3554 = vpop.f32.mrf.mxu0
      %v3555 = vpop.f32.mrf.mxu0
      %v3556 = vadd.f32 %v879, %v3555
      %v3557 = vpop.f32.mrf.mxu0
      %3558 = vmatprep.mubr.bf16.mxu0 %v3319
      %3559 = vmatmul.mubr.bf16.gmra.mxu0 %v3318
      %v3560 = vpop.f32.mrf.mxu0
      %v3561 = vadd.f32 %v884, %v3560
      %v3562 = vpop.f32.mrf.mxu0
      %v3563 = vpop.f32.mrf.mxu0
      %v3564 = vadd.f32 %v887, %v3563
      %v3565 = vpop.f32.mrf.mxu0
      %3566 = vmatprep.mubr.bf16.mxu0 %v3321
      %3567 = vmatmul.mubr.bf16.gmra.mxu0 %v3320
      %v3568 = vpop.f32.mrf.mxu0
      %v3569 = vadd.f32 %v892, %v3568
      %v3570 = vpop.f32.mrf.mxu0
      %v3571 = vpop.f32.mrf.mxu0
      %v3572 = vadd.f32 %v895, %v3571
      %v3573 = vpop.f32.mrf.mxu0
      %3574 = vmatprep.mubr.bf16.mxu0 %v3323
      %3575 = vmatmul.mubr.bf16.gmra.mxu0 %v3322
      %v3576 = vpop.f32.mrf.mxu0
      %v3577 = vadd.f32 %v900, %v3576
      %v3578 = vpop.f32.mrf.mxu0
      %v3579 = vpop.f32.mrf.mxu0
      %v3580 = vadd.f32 %v903, %v3579
      %v3581 = vpop.f32.mrf.mxu0
      %3582 = vmatprep.mubr.bf16.mxu0 %v3325
      %3583 = vmatmul.mubr.bf16.gmra.mxu0 %v3324
      %v3584 = vpop.f32.mrf.mxu0
      %v3585 = vadd.f32 %v908, %v3584
      %v3586 = vpop.f32.mrf.mxu0
      %v3587 = vpop.f32.mrf.mxu0
      %v3588 = vadd.f32 %v911, %v3587
      %v3589 = vpop.f32.mrf.mxu0
      %3590 = vmatprep.mubr.bf16.mxu0 %v3327
      %3591 = vmatmul.mubr.bf16.gmra.mxu0 %v3326
      %v3592 = vpop.f32.mrf.mxu0
      %v3593 = vadd.f32 %v916, %v3592
      %v3594 = vpop.f32.mrf.mxu0
      %v3595 = vpop.f32.mrf.mxu0
      %v3596 = vadd.f32 %v919, %v3595
      %v3597 = vpop.f32.mrf.mxu0
      %3598 = vmatprep.mubr.bf16.mxu0 %v3329
      %3599 = vmatmul.mubr.bf16.gmra.mxu0 %v3328
      %v3600 = vpop.f32.mrf.mxu0
      %v3601 = vadd.f32 %v924, %v3600
      %v3602 = vpop.f32.mrf.mxu0
      %v3603 = vpop.f32.mrf.mxu0
      %v3604 = vadd.f32 %v927, %v3603
      %v3605 = vpop.f32.mrf.mxu0
      %3606 = vmatprep.mubr.bf16.mxu0 %v3331
      %3607 = vmatmul.mubr.bf16.gmra.mxu0 %v3330
      %v3608 = vpop.f32.mrf.mxu0
      %v3609 = vadd.f32 %v932, %v3608
      %v3610 = vpop.f32.mrf.mxu0
      %v3611 = vpop.f32.mrf.mxu0
      %v3612 = vadd.f32 %v935, %v3611
      %v3613 = vpop.f32.mrf.mxu0
      %3614 = vmatprep.mubr.bf16.mxu0 %v3333
      %3615 = vmatmul.mubr.bf16.gmra.mxu0 %v3332
      %v3616 = vpop.f32.mrf.mxu0
      %v3617 = vadd.f32 %v940, %v3616
      %v3618 = vpop.f32.mrf.mxu0
      %v3619 = vpop.f32.mrf.mxu0
      %v3620 = vadd.f32 %v943, %v3619
      %v3621 = vpop.f32.mrf.mxu0
      %3622 = vdwg.mxu0
      %v3623 = vld [vmem:[%s10] sm:$0x1]
      %v3625 = vlaneseq
      %v3626 = vshrl.u32 %v3625, 7
      %v3627 = vsub.s32 0, %v3626
      %v3628 = vrot.slane %v3623, %v3627
      %v3630 = vadd.f32 %v3497, %v3628
      %v3631 = vadd.f32 %v3500, %v3628
      %v3632 = vadd.f32 %v3505, %v3628
      %v3633 = vadd.f32 %v3508, %v3628
      %v3634 = vadd.f32 %v3513, %v3628
      %v3635 = vadd.f32 %v3516, %v3628
      %v3636 = vadd.f32 %v3521, %v3628
      %v3637 = vadd.f32 %v3524, %v3628
      %v3638 = vadd.f32 %v3529, %v3628
      %v3639 = vadd.f32 %v3532, %v3628
      %v3640 = vadd.f32 %v3537, %v3628
      %v3641 = vadd.f32 %v3540, %v3628
      %v3642 = vadd.f32 %v3545, %v3628
      %v3643 = vadd.f32 %v3548, %v3628
      %v3644 = vadd.f32 %v3553, %v3628
      %v3645 = vadd.f32 %v3556, %v3628
      %v3646 = vadd.f32 %v3561, %v3628
      %v3647 = vadd.f32 %v3564, %v3628
      %v3648 = vadd.f32 %v3569, %v3628
      %v3649 = vadd.f32 %v3572, %v3628
      %v3650 = vadd.f32 %v3577, %v3628
      %v3651 = vadd.f32 %v3580, %v3628
      %v3652 = vadd.f32 %v3585, %v3628
      %v3653 = vadd.f32 %v3588, %v3628
      %v3654 = vadd.f32 %v3593, %v3628
      %v3655 = vadd.f32 %v3596, %v3628
      %v3656 = vadd.f32 %v3601, %v3628
      %v3657 = vadd.f32 %v3604, %v3628
      %v3658 = vadd.f32 %v3609, %v3628
      %v3659 = vadd.f32 %v3612, %v3628
      %v3660 = vadd.f32 %v3617, %v3628
      %v3661 = vadd.f32 %v3620, %v3628
      %3662 = vst [vmem:[%s388] sm:$0xff] %v3630
      %3663 = vst [vmem:[%s388 + $0x8] sm:$0xff] %v3631
      %3664 = vst [vmem:[%s388 + $0x10] sm:$0xff] %v3632
      %3665 = vst [vmem:[%s388 + $0x18] sm:$0xff] %v3633
      %3666 = vst [vmem:[%s388 + $0x20] sm:$0xff] %v3634
      %3667 = vst [vmem:[%s388 + $0x28] sm:$0xff] %v3635
      %3668 = vst [vmem:[%s388 + $0x30] sm:$0xff] %v3636
      %3669 = vst [vmem:[%s388 + $0x38] sm:$0xff] %v3637
      %3670 = vst [vmem:[%s388 + $0x40] sm:$0xff] %v3638
      %3671 = vst [vmem:[%s388 + $0x48] sm:$0xff] %v3639
      %3672 = vst [vmem:[%s388 + $0x50] sm:$0xff] %v3640
      %3673 = vst [vmem:[%s388 + $0x58] sm:$0xff] %v3641
      %3674 = vst [vmem:[%s388 + $0x60] sm:$0xff] %v3642
      %3675 = vst [vmem:[%s388 + $0x68] sm:$0xff] %v3643
      %3676 = vst [vmem:[%s388 + $0x70] sm:$0xff] %v3644
      %3677 = vst [vmem:[%s388 + $0x78] sm:$0xff] %v3645
      %3678 = vst [vmem:[%s388 + $0x80] sm:$0xff] %v3646
      %3679 = vst [vmem:[%s388 + $0x88] sm:$0xff] %v3647
      %3680 = vst [vmem:[%s388 + $0x90] sm:$0xff] %v3648
      %3681 = vst [vmem:[%s388 + $0x98] sm:$0xff] %v3649
      %3682 = vst [vmem:[%s388 + $0xa0] sm:$0xff] %v3650
      %3683 = vst [vmem:[%s388 + $0xa8] sm:$0xff] %v3651
      %3684 = vst [vmem:[%s388 + $0xb0] sm:$0xff] %v3652
      %3685 = vst [vmem:[%s388 + $0xb8] sm:$0xff] %v3653
      %3686 = vst [vmem:[%s388 + $0xc0] sm:$0xff] %v3654
      %3687 = vst [vmem:[%s388 + $0xc8] sm:$0xff] %v3655
      %3688 = vst [vmem:[%s388 + $0xd0] sm:$0xff] %v3656
      %3689 = vst [vmem:[%s388 + $0xd8] sm:$0xff] %v3657
      %3690 = vst [vmem:[%s388 + $0xe0] sm:$0xff] %v3658
      %3691 = vst [vmem:[%s388 + $0xe8] sm:$0xff] %v3659
      %3692 = vst [vmem:[%s388 + $0xf0] sm:$0xff] %v3660
      %3693 = vst [vmem:[%s388 + $0xf8] sm:$0xff] %v3661
      %s3694 = smul.u32 32, %s22
      %p3695 = scmp.lt.s32.totalorder %s3694, 63
      %s3696 = scalar_select %p3695, %s3694, 63
      %s3697 = smul.addr %s3696, 8
      %s3698 = scalar_lea.vmem %s11, %s3697
      // Predicated region
      $region65: #{_forward_jit.1} parent=63 // pred_check
        %p3699 = pneg %p276
      $region66: #{_forward_jit.1} parent=63 // pred_check_branch
        %3701 = sbr.rel (%p3699) target = $region68
      $region67: #{_forward_jit.1} parent=63 // pred_region
        %s3702 = smul.u32 32, %s22
      $region68: #{_forward_jit.1} parent=63 // pred_fallthru
        _
    $region64: #{_forward_jit.1} parent=5 // pred_fallthru
      _
    %p3703 = scmp.le.s32.totalorder 2, %s17
    // Predicated region
    $region69: #{_forward_jit.1} parent=5 // pred_check
      %p3704 = pneg %p3703
    $region70: #{_forward_jit.1} parent=5 // pred_check_branch
      %3706 = sbr.rel (%p3704) target = $region72
    $region71: #{_forward_jit.1} parent=5 // pred_region
      %s3707 = ssub.s32 %s17, 2
      // Predicated region
      $region73: #{_forward_jit.1} parent=71 // pred_check
        %p3708 = pneg %p282
      $region74: #{_forward_jit.1} parent=71 // pred_check_branch
        %3710 = sbr.rel (%p3708) target = $region76
      $region75: #{_forward_jit.1} parent=71 // pred_region
        %s3711 = smul.u32 32, %s23
        %p3712 = scmp.lt.s32.totalorder %s3711, 63
        %s3713 = scalar_select %p3712, %s3711, 63
        %s3714 = smul.addr %s3713, 8
        %s3715 = scalar_lea.vmem %s11, %s3714
      $region76: #{_forward_jit.1} parent=71 // pred_fallthru
        _
    $region72: #{_forward_jit.1} parent=5 // pred_fallthru
      _
  $region6: #{_forward_jit.1} parent=0 // loop_footer
    %s21 = sadd.s32 1, %s17
  $region7: #{_forward_jit.1} parent=0 // loop_footer_branch
    %16 = sbr.rel target = $region3
  $region8: #{_forward_jit.1} parent=0 // loop_exit
    _

</llo_original>
